<compile_context>
chip_gen: v6e
topology: v6e:2x2x1
jax: 0.10.0
libtpu: 0.0.40
codegen_flags: <defaults>
</compile_context>

<pallas_src>
import functools

import jax
import jax.numpy as jnp
from jax.experimental import pallas as pl
from jax.experimental.pallas import tpu as pltpu

DROPOUT_P = 0.2
_INV_KEEP = 1.0 / (1.0 - DROPOUT_P)   # hoisted compile-time scale


def _cdiv(a, b):
    return -(-a // b)


def _round_up(a, b):
    return _cdiv(a, b) * b


def _vmem_capacity_bytes():
    """Generation-aware VMEM capacity (64 MiB fallback covers v7x / interpret)."""
    try:
        if jax.devices()[0].platform == "tpu":
            return int(pltpu.get_tpu_info().vmem_capacity_bytes)
    except Exception:
        pass
    return 64 * 1024 * 1024


def _choose_th(c_pad, h_pad, tm, budget_bytes):
    """Largest 256-aligned divisor of h_pad whose per-step working set fits.

    Per hidden step we hold double-buffered bf16 (C,th)/(th,C) weight tiles
    plus the f32 hidden intermediate and its bf16 copy (tm*th*6 bytes)."""
    cands = [h_pad // k for k in range(1, h_pad // 256 + 1)
             if h_pad % k == 0 and (h_pad // k) % 256 == 0]
    for th in cands:
        if 2 * 2 * c_pad * th * 2 + tm * th * 6 <= budget_bytes:
            return th
    return cands[-1]


def prepare_params(w1, b1, w2, b2):
    """Pad + cast the weights ONCE (hoists per-call pad/cast HBM traffic out of
    feed_forward; reuse the returned dict across calls).

    Weights go to bf16 (MXU operands, halves streamed/resident weight bytes);
    biases stay f32 (added on the f32 accumulation path).  H is padded to a
    multiple of 256 so hidden tiles keep the v6e/v7x 256-wide MXU full."""
    C, H = w1.shape
    c_pad = _round_up(C, 128)
    h_pad = _round_up(H, 256)
    w1p = jnp.pad(w1.astype(jnp.bfloat16), ((0, c_pad - C), (0, h_pad - H)))
    w2p = jnp.pad(w2.astype(jnp.bfloat16), ((0, h_pad - H), (0, c_pad - C)))
    b1p = jnp.pad(b1.astype(jnp.float32), (0, h_pad - H)).reshape(1, h_pad)
    b2p = jnp.pad(b2.astype(jnp.float32), (0, c_pad - C)).reshape(1, c_pad)
    # TODO(synk): on v7x an fp8 weight path (per-tile scales folded into the
    # f32 epilogue) would halve weight HBM traffic again; kept bf16 here.
    return {"w1": w1p, "b1": b1p, "w2": w2p, "b2": b2p}


def _ffn_kernel(*refs, multi_h, training):
    """One (token-tile, hidden-tile) grid step of the fused FFN.

    x:(tm,C) @ W1:(C,th) -> +b1, ReLU -> @ W2:(th,C); bf16 MXU operands, f32
    accumulation.  nh==1 fast path writes o_ref directly (no f32 scratch);
    nh>1 assigns on the first hidden step and accumulates on later ones, with
    bias2 + dropout applied only on the last step under pl.when."""
    if training:
        x_ref, w1_ref, b1_ref, w2_ref, b2_ref, drop_ref, o_ref, *scratch = refs
    else:
        x_ref, w1_ref, b1_ref, w2_ref, b2_ref, o_ref, *scratch = refs
        drop_ref = None

    h = jnp.dot(x_ref[...], w1_ref[...], preferred_element_type=jnp.float32)
    h = jnp.maximum(h + b1_ref[...], 0.0)
    part = jnp.dot(h.astype(jnp.bfloat16), w2_ref[...],
                   preferred_element_type=jnp.float32)

    def epilogue(acc):
        o = acc + b2_ref[...]
        if training:
            # Precomputed keep/scale plane: 0 or 1/(1-p), bf16.
            o = o * drop_ref[...].astype(jnp.float32)
        o_ref[...] = o.astype(o_ref.dtype)

    if not multi_h:
        epilogue(part)          # fast path: no accumulator round trip
    else:
        acc_ref = scratch[0]
        hk = pl.program_id(1)

        @pl.when(hk == 0)
        def _():
            acc_ref[...] = part

        @pl.when(hk > 0)
        def _():
            acc_ref[...] += part

        @pl.when(hk == pl.num_programs(1) - 1)
        def _():
            epilogue(acc_ref[...])


@functools.partial(jax.jit, static_argnames=("training",))
def feed_forward(x, params, seed=0, *, training=False):
    """x: (B, T, C); params: output of prepare_params (padded bf16 weights)."""
    B, T, C = x.shape
    M = B * T
    w1p, b1p, w2p, b2p = params["w1"], params["b1"], params["w2"], params["b2"]
    C_pad, H_pad = w1p.shape
    out_dtype = x.dtype
    out_itemsize = jnp.dtype(out_dtype).itemsize

    # ---- token tiling: big tiles for large M, but >= 2 "parallel" grid steps
    # so both v7x TensorCores get work (negligible extra step cost on 1-TC parts).
    tm_max = 1024 if M >= 2048 else 512
    tm = min(tm_max, _round_up(M, 8))
    if M > 8:
        tm = min(tm, _round_up(_cdiv(M, 2), 8))
    M_pad = _round_up(M, tm)
    num_m = M_pad // tm

    # ---- hidden tiling against a generation-aware VMEM budget.
    cap = _vmem_capacity_bytes()
    fixed = (2 * tm * C_pad * 2                 # double-buffered bf16 x tiles
             + 2 * tm * C_pad * out_itemsize    # double-buffered out tiles
             + tm * C_pad * 4                   # f32 accumulator (nh>1 only)
             + 2 * (H_pad + C_pad) * 4)         # biases
    budget = max(min(int(cap * 0.7), 96 * 1024 * 1024) - fixed, 8 * 1024 * 1024)
    th = _choose_th(C_pad, H_pad, tm, budget)
    nh = H_pad // th
    multi_h = nh > 1

    step_bytes = 2 * 2 * C_pad * th * 2 + tm * th * 6
    need = fixed + step_bytes
    vmem_limit = int(min(max(2 * need, 32 * 1024 * 1024),
                         min(int(0.85 * cap), 100 * 1024 * 1024)))

    # ---- per-call operand prep (weights were padded/cast once in prepare_params).
    x2 = x.reshape(M, C).astype(jnp.bfloat16)
    if M_pad != M or C_pad != C:
        # NOTE: padded token rows are NOT zero after bias+ReLU; they are sliced
        # off below and must never be reduced over.
        x2 = jnp.pad(x2, ((0, M_pad - M), (0, C_pad - C)))

    inputs = [x2, w1p, b1p, w2p, b2p]
    in_specs = [
        pl.BlockSpec((tm, C_pad), lambda i, hh: (i, 0)),   # x tile
        pl.BlockSpec((C_pad, th), lambda i, hh: (0, hh)),  # W1 hidden tile
        pl.BlockSpec((1, th),     lambda i, hh: (0, hh)),  # b1 hidden tile
        pl.BlockSpec((th, C_pad), lambda i, hh: (hh, 0)),  # W2 hidden tile
        pl.BlockSpec((1, C_pad),  lambda i, hh: (0, 0)),   # b2
    ]
    if training:
        # TODO(synk): the keep mask comes from jax.random (not torch's RNG
        # stream); distribution and 1/(1-p) inverted scaling match nn.Dropout.
        key = jax.random.PRNGKey(seed)
        keep = jax.random.bernoulli(key, 1.0 - DROPOUT_P, (M_pad, C_pad))
        drop_scale = jnp.where(keep, _INV_KEEP, 0.0).astype(jnp.bfloat16)
        inputs.append(drop_scale)
        in_specs.append(pl.BlockSpec((tm, C_pad), lambda i, hh: (i, 0)))

    out_spec = pl.BlockSpec((tm, C_pad), lambda i, hh: (i, 0))
    scratch = [pltpu.VMEM((tm, C_pad), jnp.float32)] if multi_h else []
    out_shape = jax.ShapeDtypeStruct((M_pad, C_pad), out_dtype)

    # Weight tiles are re-streamed once per token tile when nh > 1.
    weight_bytes = 2 * C_pad * H_pad * 2 * (num_m if multi_h else 1)
    cost = pl.CostEstimate(
        flops=4 * M_pad * C_pad * H_pad,
        transcendentals=0,
        bytes_accessed=(M_pad * C_pad * 2 + weight_bytes + (H_pad + C_pad) * 4
                        + M_pad * C_pad * out_itemsize
                        + (M_pad * C_pad * 2 if training else 0)))

    # TODO(synk): if profiling shows exposed W1/W2 DMA when nh > 1 with small
    # tm, add pipeline_mode=pl.Buffered(3) on just the two weight BlockSpecs.
    out2 = pl.pallas_call(
        functools.partial(_ffn_kernel, multi_h=multi_h, training=training),
        out_shape=out_shape,
        grid_spec=pltpu.PrefetchScalarGridSpec(
            num_scalar_prefetch=0, grid=(num_m, nh),
            in_specs=in_specs, out_specs=out_spec, scratch_shapes=scratch),
        compiler_params=pltpu.CompilerParams(
            dimension_semantics=("parallel", "arbitrary"),
            vmem_limit_bytes=vmem_limit),
        cost_estimate=cost,
    )(*inputs)

    return out2[:M, :C].reshape(B, T, C)


def init_params(key, n_embd):
    """Deterministic init mimicking nn.Linear's U(-1/sqrt(fan_in), 1/sqrt(fan_in))."""
    h = 4 * n_embd
    k1, k2, k3, k4 = jax.random.split(key, 4)
    lim1 = 1.0 / jnp.sqrt(n_embd)
    lim2 = 1.0 / jnp.sqrt(h)
    w1 = jax.random.uniform(k1, (n_embd, h), jnp.float32, -lim1, lim1)
    b1 = jax.random.uniform(k2, (h,), jnp.float32, -lim1, lim1)
    w2 = jax.random.uniform(k3, (h, n_embd), jnp.float32, -lim2, lim2)
    b2 = jax.random.uniform(k4, (n_embd,), jnp.float32, -lim2, lim2)
    return w1, b1, w2, b2


if __name__ == "__main__":
    # Small shapes consistent with the module: batch=2, seq=8, n_embd=384.
    B, T, C = 2, 8, 384
    key = jax.random.PRNGKey(0)
    kx, kp = jax.random.split(key)
    x = jax.random.normal(kx, (B, T, C), jnp.float32)
    w1, b1, w2, b2 = init_params(kp, C)

    # One-time weight preparation (hoisted out of the per-call path).
    params = prepare_params(w1, b1, w2, b2)

    # Eval mode (dropout = identity).
    out = jax.block_until_ready(feed_forward(x, params, training=False))
    assert out.shape == (B, T, C)

    # Pure-JAX reference mirroring the kernel's bf16-operand / f32-accum numerics.
    xb = x.reshape(-1, C).astype(jnp.bfloat16)
    href = jnp.dot(xb, w1.astype(jnp.bfloat16),
                   preferred_element_type=jnp.float32) + b1
    ref = jnp.dot(jnp.maximum(href, 0.0).astype(jnp.bfloat16),
                  w2.astype(jnp.bfloat16),
                  preferred_element_type=jnp.float32) + b2
    err = float(jnp.max(jnp.abs(out.reshape(-1, C) - ref)))
    assert jnp.allclose(out.reshape(-1, C), ref, atol=1e-2, rtol=1e-2), err

    # Training mode: exercise the dropout path; drop rate should be ~= 0.2.
    out_tr = jax.block_until_ready(
        feed_forward(x, params, seed=1234, training=True))
    assert out_tr.shape == (B, T, C)
    drop_frac = float(jnp.mean(out_tr == 0.0))
    assert 0.1 < drop_frac < 0.3, drop_frac

    print("KERNEL_OK")
</pallas_src>

<mosaic_0001>
module attributes {stable_mosaic.version = 11 : i64} {
  func.func @_ffn_kernel(%arg0: i32, %arg1: i32, %arg2: memref<8x384xbf16, #tpu.memory_space<vmem>>, %arg3: memref<384x1536xbf16, #tpu.memory_space<vmem>>, %arg4: memref<1x1536xf32, #tpu.memory_space<vmem>>, %arg5: memref<1536x384xbf16, #tpu.memory_space<vmem>>, %arg6: memref<1x384xf32, #tpu.memory_space<vmem>>, %arg7: memref<8x384xf32, #tpu.memory_space<vmem>>) attributes {dimension_semantics = [#tpu.dimension_semantics<parallel>, #tpu.dimension_semantics<arbitrary>], iteration_bounds = array<i64: 2, 1>, scalar_prefetch = 0 : i64, scratch_operands = 0 : i64, tpu.core_type = #tpu.core_type<tc>, window_params = [{transform_indices = @transform_0, window_bounds = array<i64: 8, 384>}, {transform_indices = @transform_1, window_bounds = array<i64: 384, 1536>}, {transform_indices = @transform_2, window_bounds = array<i64: 1, 1536>}, {transform_indices = @transform_3, window_bounds = array<i64: 1536, 384>}, {pipeline_mode = #tpu.pipeline_mode<synchronous>, transform_indices = @transform_4, window_bounds = array<i64: 1, 384>}, {transform_indices = @transform_5, window_bounds = array<i64: 8, 384>}]} {
    %c0 = arith.constant 0 : index
    %c0_0 = arith.constant 0 : index
    %0 = vector.load %arg2[%c0, %c0_0] : memref<8x384xbf16, #tpu.memory_space<vmem>>, vector<8x384xbf16>
    %c0_1 = arith.constant 0 : index
    %c0_2 = arith.constant 0 : index
    %1 = vector.load %arg3[%c0_1, %c0_2] : memref<384x1536xbf16, #tpu.memory_space<vmem>>, vector<384x1536xbf16>
    %cst = arith.constant dense<0.000000e+00> : vector<8x1536xf32>
    %2 = tpu.matmul %0, %1, %cst {dimension_numbers = #tpu.dot_dimension_numbers<[1], [0], [0], [1], [0, 0, 1, 1], [], []>} : vector<8x384xbf16>, vector<384x1536xbf16>, vector<8x1536xf32> -> vector<8x1536xf32>
    %c0_3 = arith.constant 0 : index
    %c0_4 = arith.constant 0 : index
    %3 = vector.load %arg4[%c0_3, %c0_4] : memref<1x1536xf32, #tpu.memory_space<vmem>>, vector<1x1536xf32>
    %4 = vector.broadcast %3 : vector<1x1536xf32> to vector<8x1536xf32>
    %5 = arith.addf %2, %4 : vector<8x1536xf32>
    %cst_5 = arith.constant 0.000000e+00 : f32
    %6 = vector.broadcast %cst_5 : f32 to vector<8x1536xf32>
    %7 = arith.maximumf %5, %6 : vector<8x1536xf32>
    %8 = arith.truncf %7 : vector<8x1536xf32> to vector<8x1536xbf16>
    %c0_6 = arith.constant 0 : index
    %c0_7 = arith.constant 0 : index
    %9 = vector.load %arg5[%c0_6, %c0_7] : memref<1536x384xbf16, #tpu.memory_space<vmem>>, vector<1536x384xbf16>
    %cst_8 = arith.constant dense<0.000000e+00> : vector<8x384xf32>
    %10 = tpu.matmul %8, %9, %cst_8 {dimension_numbers = #tpu.dot_dimension_numbers<[1], [0], [0], [1], [0, 0, 1, 1], [], []>} : vector<8x1536xbf16>, vector<1536x384xbf16>, vector<8x384xf32> -> vector<8x384xf32>
    %c0_9 = arith.constant 0 : index
    %c0_10 = arith.constant 0 : index
    %11 = vector.load %arg6[%c0_9, %c0_10] : memref<1x384xf32, #tpu.memory_space<vmem>>, vector<1x384xf32>
    %12 = vector.broadcast %11 : vector<1x384xf32> to vector<8x384xf32>
    %13 = arith.addf %10, %12 : vector<8x384xf32>
    %c0_11 = arith.constant 0 : index
    %c0_12 = arith.constant 0 : index
    %14 = vector.load %arg7[%c0_11, %c0_12] : memref<8x384xf32, #tpu.memory_space<vmem>>, vector<8x384xf32>
    tpu.vector_store %arg7[%c0_11, %c0_12], %13 {strides = array<i32>} : memref<8x384xf32, #tpu.memory_space<vmem>>, vector<8x384xf32>,
    return
  }
  func.func @transform_0(%arg0: i32, %arg1: i32) -> (i32, i32) {
    %c0_i32 = arith.constant 0 : i32
    %c0_i32_0 = arith.constant 0 : i32
    return %arg0, %c0_i32 : i32, i32
  }
  func.func @transform_1(%arg0: i32, %arg1: i32) -> (i32, i32) {
    %c0_i32 = arith.constant 0 : i32
    %c0_i32_0 = arith.constant 0 : i32
    return %c0_i32, %arg1 : i32, i32
  }
  func.func @transform_2(%arg0: i32, %arg1: i32) -> (i32, i32) {
    %c0_i32 = arith.constant 0 : i32
    %c0_i32_0 = arith.constant 0 : i32
    return %c0_i32, %arg1 : i32, i32
  }
  func.func @transform_3(%arg0: i32, %arg1: i32) -> (i32, i32) {
    %c0_i32 = arith.constant 0 : i32
    %c0_i32_0 = arith.constant 0 : i32
    return %arg1, %c0_i32 : i32, i32
  }
  func.func @transform_4(%arg0: i32, %arg1: i32) -> (i32, i32) {
    %c0_i32 = arith.constant 0 : i32
    %c0_i32_0 = arith.constant 0 : i32
    %c0_i32_1 = arith.constant 0 : i32
    return %c0_i32, %c0_i32_0 : i32, i32
  }
  func.func @transform_5(%arg0: i32, %arg1: i32) -> (i32, i32) {
    %c0_i32 = arith.constant 0 : i32
    %c0_i32_0 = arith.constant 0 : i32
    return %arg0, %c0_i32 : i32, i32
  }
}

</mosaic_0001>

<llo_original>
// kernel: feed_forward.1
$region0: #{feed_forward.1}
  #allocation0 [shape = 'u32[]', space=smem, size = 0x4, offset = 0x4, fixed_abs, tag = 'smem constant byte address 0x4 - core index']
  #allocation1 [shape = 'u32[144,128]{1,0:T(1,128)}', space=vmem, size = 0x12000, scoped, tag = 'internal scratch']
  %s0 = inlined_call_operand.vmem [shape: bf16[16,384], index: 0, kind: input, shape index: {}]
  %s1 = inlined_call_operand.hbm [shape: bf16[384,1536], index: 1, kind: input, shape index: {}]
  %s2 = inlined_call_operand.hbm [shape: f32[1,1536], index: 2, kind: input, shape index: {}]
  %s3 = inlined_call_operand.hbm [shape: bf16[1536,384], index: 3, kind: input, shape index: {}]
  %s4 = inlined_call_operand.hbm [shape: f32[1,384], index: 4, kind: input, shape index: {}]
  %s5 = inlined_call_operand.hbm [shape: f32[16,384], index: 5, kind: output, shape index: {}]
  %s6 = sld [smem:[#allocation0]]
  $region69: #{feed_forward.1} parent=0
    _
  %s8 = ssub.s32 1, %s6
  %s9 = scalar_select 0, %s8, %s6
  $region1: #{feed_forward.1} parent=0
    #allocation2 [shape = 'u8[1179648]{0}', space=vmem, size = 0x120000, scoped, tag = 'input window, operand 1, single buffered']
    #allocation3 [shape = 's32[2]{0}', space=sflag, size = 0x8, scoped, tag = 'scoped memory for feed_forward.1']
    #allocation4 [shape = 's32[2]{0}', space=sflag, size = 0x8, scoped, tag = 'scoped memory for feed_forward.1']
    #allocation5 [shape = 'u8[6144]{0}', space=vmem, size = 0x1800, scoped, tag = 'input window, operand 2, single buffered']
    #allocation6 [shape = 's32[1]{0}', space=sflag, size = 0x4, scoped, tag = 'scoped memory for feed_forward.1']
    #allocation7 [shape = 'u8[1179648]{0}', space=vmem, size = 0x120000, scoped, tag = 'input window, operand 3, single buffered']
    #allocation8 [shape = 'u8[1536]{0}', space=vmem, size = 0x800, scoped, tag = 'input window, operand 4, single buffered']
    #allocation9 [shape = 's32[1]{0}', space=sflag, size = 0x4, scoped, tag = 'scoped memory for feed_forward.1']
    #allocation10 [shape = 'u8[24576]{0}', space=vmem, size = 0x6000, scoped, tag = 'output window, operand 0']
    %10 = vsyncpa [#allocation3], 0
    %11 = vsyncpa [#allocation6], 0
    %12 = vsyncpa [#allocation9], 0
    %13 = vsyncpa [#allocation4], 0
    %s14 = scalar_lea.sflag [#allocation4], 1
    %15 = vsyncpa %s14, 0
    loop: start=0, step=1, limit=4
    $region2: #{feed_forward.1} parent=1 // loop_pre_header
      _
    $region3: #{feed_forward.1} parent=1 // loop_header
      %s17 = sphi 0, %s21
      %p18 = scmp.ge.s32.totalorder %s17, 4
      %s24 = sphi 0, %s36
      %s25 = sphi 0, %s32
      %s26 = sphi 0, %s24
      %s27 = sphi 0, %s25
      %s28 = sphi 0, %s26
      %s29 = sphi 0, %s27
      %s39 = sphi 0, %s41
      %s42 = sphi 0, %s39
      %s43 = sphi 0, %s42
      %s59 = sphi 0, %s43
      %s65 = sphi 0, %s67
      %s68 = sphi 0, %s65
      %s69 = sphi 0, %s68
      %s85 = sphi 0, %s69
      %s91 = sphi 0, %s93
      %s94 = sphi 0, %s91
      %s95 = sphi 0, %s94
      %s111 = sphi 0, %s95
      %s117 = sphi 0, %s119
      %s120 = sphi 0, %s117
      %s121 = sphi 0, %s120
      %s137 = sphi 0, %s121
      %s141 = sphi 0, %s141
      %s143 = sphi 0, %s141
      %s144 = sphi 0, %s143
      %s158 = sphi 0, %s144
      %s164 = sphi 0, %s166
      %s167 = sphi 0, %s164
      %s168 = sphi 0, %s167
      %s184 = sphi 0, %s168
    $region4: #{feed_forward.1} parent=1 // loop_header_branch
      %20 = sbr.rel (%p18) target = $region8
    $region5: #{feed_forward.1} parent=1 // loop_body
      %s22 = ssub.s32 %s17, 1
      %s23 = ssub.s32 %s17, 2
      %s30 = sadd.s32 1, %s25
      %p31 = scmp.ge.s32.totalorder %s30, 1
      %s32 = scalar_select %p31, 0, %s30
      %s33 = sadd.s32 1, %s24
      %s34 = scalar_select %p31, %s33, %s24
      %p35 = scmp.ge.s32.totalorder %s34, 2
      %s36 = scalar_select %p35, 0, %s34
      %s37 = ssub.s32 %s24, %s36
      %p38 = scmp.eq.s32.totalorder %s37, 0
      %s40 = sadd.s32 %s39, 1
      %s41 = scalar_select %p38, %s39, %s40
      %p44 = pneg %p38
      %p45 = scmp.eq.s32.totalorder %s17, 1
      %p46 = por %p44, %p45
      %p47 = scmp.ne.s32.totalorder %s39, %s42
      %p48 = scmp.eq.s32.totalorder %s17, 0
      %p49 = por %p47, %p48
      %p50 = scmp.ne.s32.totalorder %s39, %s42
      %p51 = scmp.eq.s32.totalorder %s22, 1
      %p52 = por %p50, %p51
      %p53 = scmp.ne.s32.totalorder %s42, %s43
      %p54 = scmp.eq.s32.totalorder %s22, 0
      %p55 = por %p53, %p54
      %p56 = scmp.ne.s32.totalorder %s42, %s43
      %p57 = scmp.eq.s32.totalorder %s23, 1
      %p58 = por %p56, %p57
      %p60 = scmp.ne.s32.totalorder %s43, %s59
      %p61 = scmp.eq.s32.totalorder %s23, 0
      %p62 = por %p60, %p61
      %s63 = ssub.s32 %s25, %s32
      %p64 = scmp.eq.s32.totalorder %s63, 0
      %s66 = sadd.s32 %s65, 1
      %s67 = scalar_select %p64, %s65, %s66
      %p70 = pneg %p64
      %p71 = scmp.eq.s32.totalorder %s17, 1
      %p72 = por %p70, %p71
      %p73 = scmp.ne.s32.totalorder %s65, %s68
      %p74 = scmp.eq.s32.totalorder %s17, 0
      %p75 = por %p73, %p74
      %p76 = scmp.ne.s32.totalorder %s65, %s68
      %p77 = scmp.eq.s32.totalorder %s22, 1
      %p78 = por %p76, %p77
      %p79 = scmp.ne.s32.totalorder %s68, %s69
      %p80 = scmp.eq.s32.totalorder %s22, 0
      %p81 = por %p79, %p80
      %p82 = scmp.ne.s32.totalorder %s68, %s69
      %p83 = scmp.eq.s32.totalorder %s23, 1
      %p84 = por %p82, %p83
      %p86 = scmp.ne.s32.totalorder %s69, %s85
      %p87 = scmp.eq.s32.totalorder %s23, 0
      %p88 = por %p86, %p87
      %s89 = ssub.s32 %s25, %s32
      %p90 = scmp.eq.s32.totalorder %s89, 0
      %s92 = sadd.s32 %s91, 1
      %s93 = scalar_select %p90, %s91, %s92
      %p96 = pneg %p90
      %p97 = scmp.eq.s32.totalorder %s17, 1
      %p98 = por %p96, %p97
      %p99 = scmp.ne.s32.totalorder %s91, %s94
      %p100 = scmp.eq.s32.totalorder %s17, 0
      %p101 = por %p99, %p100
      %p102 = scmp.ne.s32.totalorder %s91, %s94
      %p103 = scmp.eq.s32.totalorder %s22, 1
      %p104 = por %p102, %p103
      %p105 = scmp.ne.s32.totalorder %s94, %s95
      %p106 = scmp.eq.s32.totalorder %s22, 0
      %p107 = por %p105, %p106
      %p108 = scmp.ne.s32.totalorder %s94, %s95
      %p109 = scmp.eq.s32.totalorder %s23, 1
      %p110 = por %p108, %p109
      %p112 = scmp.ne.s32.totalorder %s95, %s111
      %p113 = scmp.eq.s32.totalorder %s23, 0
      %p114 = por %p112, %p113
      %s115 = ssub.s32 %s25, %s32
      %p116 = scmp.eq.s32.totalorder %s115, 0
      %s118 = sadd.s32 %s117, 1
      %s119 = scalar_select %p116, %s117, %s118
      %p122 = pneg %p116
      %p123 = scmp.eq.s32.totalorder %s17, 1
      %p124 = por %p122, %p123
      %p125 = scmp.ne.s32.totalorder %s117, %s120
      %p126 = scmp.eq.s32.totalorder %s17, 0
      %p127 = por %p125, %p126
      %p128 = scmp.ne.s32.totalorder %s117, %s120
      %p129 = scmp.eq.s32.totalorder %s22, 1
      %p130 = por %p128, %p129
      %p131 = scmp.ne.s32.totalorder %s120, %s121
      %p132 = scmp.eq.s32.totalorder %s22, 0
      %p133 = por %p131, %p132
      %p134 = scmp.ne.s32.totalorder %s120, %s121
      %p135 = scmp.eq.s32.totalorder %s23, 1
      %p136 = por %p134, %p135
      %p138 = scmp.ne.s32.totalorder %s121, %s137
      %p139 = scmp.eq.s32.totalorder %s23, 0
      %p140 = por %p138, %p139
      %s142 = sadd.s32 %s141, 1
      %p145 = scmp.eq.s32.totalorder %s17, 1
      %p146 = scmp.ne.s32.totalorder %s141, %s143
      %p147 = scmp.eq.s32.totalorder %s17, 0
      %p148 = por %p146, %p147
      %p149 = scmp.ne.s32.totalorder %s141, %s143
      %p150 = scmp.eq.s32.totalorder %s22, 1
      %p151 = por %p149, %p150
      %p152 = scmp.ne.s32.totalorder %s143, %s144
      %p153 = scmp.eq.s32.totalorder %s22, 0
      %p154 = por %p152, %p153
      %p155 = scmp.ne.s32.totalorder %s143, %s144
      %p156 = scmp.eq.s32.totalorder %s23, 1
      %p157 = por %p155, %p156
      %p159 = scmp.ne.s32.totalorder %s144, %s158
      %p160 = scmp.eq.s32.totalorder %s23, 0
      %p161 = por %p159, %p160
      %s162 = ssub.s32 %s24, %s36
      %p163 = scmp.eq.s32.totalorder %s162, 0
      %s165 = sadd.s32 %s164, 1
      %s166 = scalar_select %p163, %s164, %s165
      %p169 = pneg %p163
      %p170 = scmp.eq.s32.totalorder %s17, 1
      %p171 = por %p169, %p170
      %p172 = scmp.ne.s32.totalorder %s164, %s167
      %p173 = scmp.eq.s32.totalorder %s17, 0
      %p174 = por %p172, %p173
      %p175 = scmp.ne.s32.totalorder %s164, %s167
      %p176 = scmp.eq.s32.totalorder %s22, 1
      %p177 = por %p175, %p176
      %p178 = scmp.ne.s32.totalorder %s167, %s168
      %p179 = scmp.eq.s32.totalorder %s22, 0
      %p180 = por %p178, %p179
      %p181 = scmp.ne.s32.totalorder %s167, %s168
      %p182 = scmp.eq.s32.totalorder %s23, 1
      %p183 = por %p181, %p182
      %p185 = scmp.ne.s32.totalorder %s168, %s184
      %p186 = scmp.eq.s32.totalorder %s23, 0
      %p187 = por %p185, %p186
      %p188 = scmp.le.s32.totalorder 1, %s17
      %p189 = scmp.lt.s32.totalorder %s17, 3
      %p190 = pnand %p188, %p189
      %p191 = pneg %p190
      // Predicated region
      $region9: #{feed_forward.1} parent=5 // pred_check
        _
      $region10: #{feed_forward.1} parent=5 // pred_check_branch
        %193 = sbr.rel (%p190) target = $region12
      $region11: #{feed_forward.1} parent=5 // pred_region
        %s194 = ssub.s32 %s17, 1
        // Predicated region
        $region13: #{feed_forward.1} parent=11 // pred_check
          %p195 = pneg %p81
        $region14: #{feed_forward.1} parent=11 // pred_check_branch
          %197 = sbr.rel (%p195) target = $region16
        $region15: #{feed_forward.1} parent=11 // pred_region
          %s198 = smul.u32 12, %s27
          %s200 = ssub.s32 36864, 36864
          %201 = vsyncadd [#allocation3], %s200
          %s202 = smul.addr %s198, 64
          %s203 = scalar_lea.hbm %s1, %s202
          %s204 = sshll.u32 [#allocation2], 4
          %s205 = int_to_ptr.vmem [resolvable:$true] %s204
          %210 = dma.hbm_to_vmem [thread:$0]  %s203, 36864, %s205, [#allocation3], 768, 768, 48
        $region16: #{feed_forward.1} parent=11 // pred_fallthru
          _
        // Predicated region
        $region17: #{feed_forward.1} parent=11 // pred_check
          %p211 = pneg %p107
        $region18: #{feed_forward.1} parent=11 // pred_check_branch
          %213 = sbr.rel (%p211) target = $region20
        $region19: #{feed_forward.1} parent=11 // pred_region
          %s214 = smul.u32 12, %s27
          %s216 = ssub.s32 192, 192
          %217 = vsyncadd [#allocation6], %s216
          %s218 = smul.addr %s214, 16
          %s219 = scalar_lea.hbm %s2, %s218
          %s221 = sshll.u32 [#allocation5], 4
          %s222 = int_to_ptr.vmem [resolvable:$true] %s221
          %224 = dma.hbm_to_vmem [thread:$0]  %s219, 192, %s222, [#allocation6]
        $region20: #{feed_forward.1} parent=11 // pred_fallthru
          _
        // Predicated region
        $region21: #{feed_forward.1} parent=11 // pred_check
          %p225 = pneg %p133
        $region22: #{feed_forward.1} parent=11 // pred_check_branch
          %227 = sbr.rel (%p225) target = $region24
        $region23: #{feed_forward.1} parent=11 // pred_region
          %s228 = smul.u32 192, %s27
          %s230 = ssub.s32 36864, 36864
          %231 = vsyncadd [#allocation6], %s230
          %s232 = smul.addr %s228, 3
          %s233 = smul.addr %s232, 64
          %s234 = scalar_lea.hbm %s3, %s233
          %s235 = sshll.u32 [#allocation7], 4
          %s236 = int_to_ptr.vmem [resolvable:$true] %s235
          %241 = dma.hbm_to_vmem [thread:$0]  %s234, 36864, %s236, [#allocation6], 192, 192, 12
        $region24: #{feed_forward.1} parent=11 // pred_fallthru
          _
        // Predicated region
        $region25: #{feed_forward.1} parent=11 // pred_check
          %p242 = pneg %p154
        $region26: #{feed_forward.1} parent=11 // pred_check_branch
          %244 = sbr.rel (%p242) target = $region28
        $region27: #{feed_forward.1} parent=11 // pred_region
          %s246 = ssub.s32 48, 48
          %247 = vsyncadd [#allocation9], %s246
          %s249 = sshll.u32 [#allocation8], 4
          %s250 = int_to_ptr.vmem [resolvable:$true] %s249
          %252 = dma.hbm_to_vmem [thread:$0]  %s4, 48, %s250, [#allocation9]
        $region28: #{feed_forward.1} parent=11 // pred_fallthru
          _
      $region12: #{feed_forward.1} parent=5 // pred_fallthru
        _
      %p253 = scmp.lt.s32.totalorder %s17, 2
      // Predicated region
      $region29: #{feed_forward.1} parent=5 // pred_check
        %p254 = pneg %p253
      $region30: #{feed_forward.1} parent=5 // pred_check_branch
        %256 = sbr.rel (%p254) target = $region32
      $region31: #{feed_forward.1} parent=5 // pred_region
        // Predicated region
        $region33: #{feed_forward.1} parent=31 // pred_check
          %p257 = pneg %p49
        $region34: #{feed_forward.1} parent=31 // pred_check_branch
          %259 = sbr.rel (%p257) target = $region36
        $region35: #{feed_forward.1} parent=31 // pred_region
          %p260 = scmp.lt.s32.totalorder %s24, 1
          %s261 = scalar_select %p260, %s24, 1
          %s262 = smul.addr %s261, 3
          %s263 = smul.addr %s262, 4
          %s264 = scalar_lea.vmem %s0, %s263
        $region36: #{feed_forward.1} parent=31 // pred_fallthru
          _
      $region32: #{feed_forward.1} parent=5 // pred_fallthru
        _
      %p265 = scmp.le.s32.totalorder 1, %s17
      %p266 = scmp.lt.s32.totalorder %s17, 3
      %p267 = pnand %p265, %p266
      %p268 = pneg %p267
      // Predicated region
      $region37: #{feed_forward.1} parent=5 // pred_check
        _
      $region38: #{feed_forward.1} parent=5 // pred_check_branch
        %270 = sbr.rel (%p267) target = $region40
      $region39: #{feed_forward.1} parent=5 // pred_region
        %s271 = ssub.s32 %s17, 1
        // Predicated region
        $region41: #{feed_forward.1} parent=39 // pred_check
          %p272 = pneg %p81
        $region42: #{feed_forward.1} parent=39 // pred_check_branch
          %274 = sbr.rel (%p272) target = $region44
        $region43: #{feed_forward.1} parent=39 // pred_region
          %275 = dma.done [#allocation3], 36864
        $region44: #{feed_forward.1} parent=39 // pred_fallthru
          _
        // Predicated region
        $region45: #{feed_forward.1} parent=39 // pred_check
          %p276 = pneg %p107
        $region46: #{feed_forward.1} parent=39 // pred_check_branch
          %278 = sbr.rel (%p276) target = $region48
        $region47: #{feed_forward.1} parent=39 // pred_region
          %279 = dma.done [#allocation6], 192
        $region48: #{feed_forward.1} parent=39 // pred_fallthru
          _
        // Predicated region
        $region49: #{feed_forward.1} parent=39 // pred_check
          %p280 = pneg %p133
        $region50: #{feed_forward.1} parent=39 // pred_check_branch
          %282 = sbr.rel (%p280) target = $region52
        $region51: #{feed_forward.1} parent=39 // pred_region
          %283 = dma.done [#allocation6], 36864
        $region52: #{feed_forward.1} parent=39 // pred_fallthru
          _
        // Predicated region
        $region53: #{feed_forward.1} parent=39 // pred_check
          %p284 = pneg %p154
        $region54: #{feed_forward.1} parent=39 // pred_check_branch
          %286 = sbr.rel (%p284) target = $region56
        $region55: #{feed_forward.1} parent=39 // pred_region
          %287 = dma.done [#allocation9], 48
        $region56: #{feed_forward.1} parent=39 // pred_fallthru
          _
        %p288 = scmp.lt.s32.totalorder %s26, 1
        %s289 = scalar_select %p288, %s26, 1
        %s290 = smul.addr %s289, 3
        %s291 = smul.addr %s290, 4
        %s292 = scalar_lea.vmem %s0, %s291
        %p293 = pneg %p55
        %p294 = pneg %p52
        %p295 = pneg %p81
        %p296 = pneg %p78
        %p297 = pneg %p107
        %p298 = pneg %p104
        %p299 = pneg %p133
        %p300 = pneg %p130
        %p301 = pneg %p154
        %p302 = pneg %p151
        %p303 = pneg %p180
        %p304 = pneg %p177
        %s305 = sand.u32 %s167, 1
        %s306 = scalar_lea.sflag [#allocation4], %s305
        %s307 = sand.u32 %s167, 1
        %s308 = smul.addr %s307, 24
        %s309 = scalar_lea.vmem [#allocation10], %s308
        %p310 = scmp.lt.s32.totalorder %s26, 1
        %s311 = scalar_select %p310, %s26, 1
        %s312 = smul.addr %s311, 3
        %s313 = smul.addr %s312, 4
        %s314 = scalar_lea.vmem %s0, %s313
        %s315 = smul.u32 12, %s27
        %s316 = smul.u32 12, %s27
        %s317 = smul.u32 192, %s27
        %v319 = vld [vmem:[%s314] sm:$0xff]
        %v320 = vld [vmem:[%s314 + $0x8] sm:$0xf]
        %v321 = vld [vmem:[#allocation2] sm:$0xff]
        %v322 = vld [vmem:[#allocation2 + $0x8] sm:$0xff]
        %v323 = vld [vmem:[#allocation2 + $0x10] sm:$0xff]
        %v324 = vld [vmem:[#allocation2 + $0x18] sm:$0xff]
        %v325 = vld [vmem:[#allocation2 + $0x20] sm:$0xff]
        %v326 = vld [vmem:[#allocation2 + $0x28] sm:$0xff]
        %v327 = vld [vmem:[#allocation2 + $0x30] sm:$0xff]
        %v328 = vld [vmem:[#allocation2 + $0x38] sm:$0xff]
        %v329 = vld [vmem:[#allocation2 + $0x40] sm:$0xff]
        %v330 = vld [vmem:[#allocation2 + $0x48] sm:$0xff]
        %v331 = vld [vmem:[#allocation2 + $0x50] sm:$0xff]
        %v332 = vld [vmem:[#allocation2 + $0x58] sm:$0xff]
        %v333 = vld [vmem:[#allocation2 + $0x60] sm:$0xff]
        %v334 = vld [vmem:[#allocation2 + $0x68] sm:$0xff]
        %v335 = vld [vmem:[#allocation2 + $0x70] sm:$0xff]
        %v336 = vld [vmem:[#allocation2 + $0x78] sm:$0xff]
        %v337 = vld [vmem:[#allocation2 + $0x80] sm:$0xff]
        %v338 = vld [vmem:[#allocation2 + $0x88] sm:$0xff]
        %v339 = vld [vmem:[#allocation2 + $0x90] sm:$0xff]
        %v340 = vld [vmem:[#allocation2 + $0x98] sm:$0xff]
        %v341 = vld [vmem:[#allocation2 + $0xa0] sm:$0xff]
        %v342 = vld [vmem:[#allocation2 + $0xa8] sm:$0xff]
        %v343 = vld [vmem:[#allocation2 + $0xb0] sm:$0xff]
        %v344 = vld [vmem:[#allocation2 + $0xb8] sm:$0xff]
        %v345 = vld [vmem:[#allocation2 + $0xc0] sm:$0xff]
        %v346 = vld [vmem:[#allocation2 + $0xc8] sm:$0xff]
        %v347 = vld [vmem:[#allocation2 + $0xd0] sm:$0xff]
        %v348 = vld [vmem:[#allocation2 + $0xd8] sm:$0xff]
        %v349 = vld [vmem:[#allocation2 + $0xe0] sm:$0xff]
        %v350 = vld [vmem:[#allocation2 + $0xe8] sm:$0xff]
        %v351 = vld [vmem:[#allocation2 + $0xf0] sm:$0xff]
        %v352 = vld [vmem:[#allocation2 + $0xf8] sm:$0xff]
        %v353 = vld [vmem:[#allocation2 + $0x100] sm:$0xff]
        %v354 = vld [vmem:[#allocation2 + $0x108] sm:$0xff]
        %v355 = vld [vmem:[#allocation2 + $0x110] sm:$0xff]
        %v356 = vld [vmem:[#allocation2 + $0x118] sm:$0xff]
        %v357 = vld [vmem:[#allocation2 + $0x120] sm:$0xff]
        %v358 = vld [vmem:[#allocation2 + $0x128] sm:$0xff]
        %v359 = vld [vmem:[#allocation2 + $0x130] sm:$0xff]
        %v360 = vld [vmem:[#allocation2 + $0x138] sm:$0xff]
        %v361 = vld [vmem:[#allocation2 + $0x140] sm:$0xff]
        %v362 = vld [vmem:[#allocation2 + $0x148] sm:$0xff]
        %v363 = vld [vmem:[#allocation2 + $0x150] sm:$0xff]
        %v364 = vld [vmem:[#allocation2 + $0x158] sm:$0xff]
        %v365 = vld [vmem:[#allocation2 + $0x160] sm:$0xff]
        %v366 = vld [vmem:[#allocation2 + $0x168] sm:$0xff]
        %v367 = vld [vmem:[#allocation2 + $0x170] sm:$0xff]
        %v368 = vld [vmem:[#allocation2 + $0x178] sm:$0xff]
        %v369 = vld [vmem:[#allocation2 + $0x180] sm:$0xff]
        %v370 = vld [vmem:[#allocation2 + $0x188] sm:$0xff]
        %v371 = vld [vmem:[#allocation2 + $0x190] sm:$0xff]
        %v372 = vld [vmem:[#allocation2 + $0x198] sm:$0xff]
        %v373 = vld [vmem:[#allocation2 + $0x1a0] sm:$0xff]
        %v374 = vld [vmem:[#allocation2 + $0x1a8] sm:$0xff]
        %v375 = vld [vmem:[#allocation2 + $0x1b0] sm:$0xff]
        %v376 = vld [vmem:[#allocation2 + $0x1b8] sm:$0xff]
        %v377 = vld [vmem:[#allocation2 + $0x1c0] sm:$0xff]
        %v378 = vld [vmem:[#allocation2 + $0x1c8] sm:$0xff]
        %v379 = vld [vmem:[#allocation2 + $0x1d0] sm:$0xff]
        %v380 = vld [vmem:[#allocation2 + $0x1d8] sm:$0xff]
        %v381 = vld [vmem:[#allocation2 + $0x1e0] sm:$0xff]
        %v382 = vld [vmem:[#allocation2 + $0x1e8] sm:$0xff]
        %v383 = vld [vmem:[#allocation2 + $0x1f0] sm:$0xff]
        %v384 = vld [vmem:[#allocation2 + $0x1f8] sm:$0xff]
        %v385 = vld [vmem:[#allocation2 + $0x200] sm:$0xff]
        %v386 = vld [vmem:[#allocation2 + $0x208] sm:$0xff]
        %v387 = vld [vmem:[#allocation2 + $0x210] sm:$0xff]
        %v388 = vld [vmem:[#allocation2 + $0x218] sm:$0xff]
        %v389 = vld [vmem:[#allocation2 + $0x220] sm:$0xff]
        %v390 = vld [vmem:[#allocation2 + $0x228] sm:$0xff]
        %v391 = vld [vmem:[#allocation2 + $0x230] sm:$0xff]
        %v392 = vld [vmem:[#allocation2 + $0x238] sm:$0xff]
        %v393 = vld [vmem:[#allocation2 + $0x240] sm:$0xff]
        %v394 = vld [vmem:[#allocation2 + $0x248] sm:$0xff]
        %v395 = vld [vmem:[#allocation2 + $0x250] sm:$0xff]
        %v396 = vld [vmem:[#allocation2 + $0x258] sm:$0xff]
        %v397 = vld [vmem:[#allocation2 + $0x260] sm:$0xff]
        %v398 = vld [vmem:[#allocation2 + $0x268] sm:$0xff]
        %v399 = vld [vmem:[#allocation2 + $0x270] sm:$0xff]
        %v400 = vld [vmem:[#allocation2 + $0x278] sm:$0xff]
        %v401 = vld [vmem:[#allocation2 + $0x280] sm:$0xff]
        %v402 = vld [vmem:[#allocation2 + $0x288] sm:$0xff]
        %v403 = vld [vmem:[#allocation2 + $0x290] sm:$0xff]
        %v404 = vld [vmem:[#allocation2 + $0x298] sm:$0xff]
        %v405 = vld [vmem:[#allocation2 + $0x2a0] sm:$0xff]
        %v406 = vld [vmem:[#allocation2 + $0x2a8] sm:$0xff]
        %v407 = vld [vmem:[#allocation2 + $0x2b0] sm:$0xff]
        %v408 = vld [vmem:[#allocation2 + $0x2b8] sm:$0xff]
        %v409 = vld [vmem:[#allocation2 + $0x2c0] sm:$0xff]
        %v410 = vld [vmem:[#allocation2 + $0x2c8] sm:$0xff]
        %v411 = vld [vmem:[#allocation2 + $0x2d0] sm:$0xff]
        %v412 = vld [vmem:[#allocation2 + $0x2d8] sm:$0xff]
        %v413 = vld [vmem:[#allocation2 + $0x2e0] sm:$0xff]
        %v414 = vld [vmem:[#allocation2 + $0x2e8] sm:$0xff]
        %v415 = vld [vmem:[#allocation2 + $0x2f0] sm:$0xff]
        %v416 = vld [vmem:[#allocation2 + $0x2f8] sm:$0xff]
        %v417 = vld [vmem:[#allocation2 + $0x300] sm:$0xff]
        %v418 = vld [vmem:[#allocation2 + $0x308] sm:$0xff]
        %v419 = vld [vmem:[#allocation2 + $0x310] sm:$0xff]
        %v420 = vld [vmem:[#allocation2 + $0x318] sm:$0xff]
        %v421 = vld [vmem:[#allocation2 + $0x320] sm:$0xff]
        %v422 = vld [vmem:[#allocation2 + $0x328] sm:$0xff]
        %v423 = vld [vmem:[#allocation2 + $0x330] sm:$0xff]
        %v424 = vld [vmem:[#allocation2 + $0x338] sm:$0xff]
        %v425 = vld [vmem:[#allocation2 + $0x340] sm:$0xff]
        %v426 = vld [vmem:[#allocation2 + $0x348] sm:$0xff]
        %v427 = vld [vmem:[#allocation2 + $0x350] sm:$0xff]
        %v428 = vld [vmem:[#allocation2 + $0x358] sm:$0xff]
        %v429 = vld [vmem:[#allocation2 + $0x360] sm:$0xff]
        %v430 = vld [vmem:[#allocation2 + $0x368] sm:$0xff]
        %v431 = vld [vmem:[#allocation2 + $0x370] sm:$0xff]
        %v432 = vld [vmem:[#allocation2 + $0x378] sm:$0xff]
        %v433 = vld [vmem:[#allocation2 + $0x380] sm:$0xff]
        %v434 = vld [vmem:[#allocation2 + $0x388] sm:$0xff]
        %v435 = vld [vmem:[#allocation2 + $0x390] sm:$0xff]
        %v436 = vld [vmem:[#allocation2 + $0x398] sm:$0xff]
        %v437 = vld [vmem:[#allocation2 + $0x3a0] sm:$0xff]
        %v438 = vld [vmem:[#allocation2 + $0x3a8] sm:$0xff]
        %v439 = vld [vmem:[#allocation2 + $0x3b0] sm:$0xff]
        %v440 = vld [vmem:[#allocation2 + $0x3b8] sm:$0xff]
        %v441 = vld [vmem:[#allocation2 + $0x3c0] sm:$0xff]
        %v442 = vld [vmem:[#allocation2 + $0x3c8] sm:$0xff]
        %v443 = vld [vmem:[#allocation2 + $0x3d0] sm:$0xff]
        %v444 = vld [vmem:[#allocation2 + $0x3d8] sm:$0xff]
        %v445 = vld [vmem:[#allocation2 + $0x3e0] sm:$0xff]
        %v446 = vld [vmem:[#allocation2 + $0x3e8] sm:$0xff]
        %v447 = vld [vmem:[#allocation2 + $0x3f0] sm:$0xff]
        %v448 = vld [vmem:[#allocation2 + $0x3f8] sm:$0xff]
        %v449 = vld [vmem:[#allocation2 + $0x400] sm:$0xff]
        %v450 = vld [vmem:[#allocation2 + $0x408] sm:$0xff]
        %v451 = vld [vmem:[#allocation2 + $0x410] sm:$0xff]
        %v452 = vld [vmem:[#allocation2 + $0x418] sm:$0xff]
        %v453 = vld [vmem:[#allocation2 + $0x420] sm:$0xff]
        %v454 = vld [vmem:[#allocation2 + $0x428] sm:$0xff]
        %v455 = vld [vmem:[#allocation2 + $0x430] sm:$0xff]
        %v456 = vld [vmem:[#allocation2 + $0x438] sm:$0xff]
        %v457 = vld [vmem:[#allocation2 + $0x440] sm:$0xff]
        %v458 = vld [vmem:[#allocation2 + $0x448] sm:$0xff]
        %v459 = vld [vmem:[#allocation2 + $0x450] sm:$0xff]
        %v460 = vld [vmem:[#allocation2 + $0x458] sm:$0xff]
        %v461 = vld [vmem:[#allocation2 + $0x460] sm:$0xff]
        %v462 = vld [vmem:[#allocation2 + $0x468] sm:$0xff]
        %v463 = vld [vmem:[#allocation2 + $0x470] sm:$0xff]
        %v464 = vld [vmem:[#allocation2 + $0x478] sm:$0xff]
        %v465 = vld [vmem:[#allocation2 + $0x480] sm:$0xff]
        %v466 = vld [vmem:[#allocation2 + $0x488] sm:$0xff]
        %v467 = vld [vmem:[#allocation2 + $0x490] sm:$0xff]
        %v468 = vld [vmem:[#allocation2 + $0x498] sm:$0xff]
        %v469 = vld [vmem:[#allocation2 + $0x4a0] sm:$0xff]
        %v470 = vld [vmem:[#allocation2 + $0x4a8] sm:$0xff]
        %v471 = vld [vmem:[#allocation2 + $0x4b0] sm:$0xff]
        %v472 = vld [vmem:[#allocation2 + $0x4b8] sm:$0xff]
        %v473 = vld [vmem:[#allocation2 + $0x4c0] sm:$0xff]
        %v474 = vld [vmem:[#allocation2 + $0x4c8] sm:$0xff]
        %v475 = vld [vmem:[#allocation2 + $0x4d0] sm:$0xff]
        %v476 = vld [vmem:[#allocation2 + $0x4d8] sm:$0xff]
        %v477 = vld [vmem:[#allocation2 + $0x4e0] sm:$0xff]
        %v478 = vld [vmem:[#allocation2 + $0x4e8] sm:$0xff]
        %v479 = vld [vmem:[#allocation2 + $0x4f0] sm:$0xff]
        %v480 = vld [vmem:[#allocation2 + $0x4f8] sm:$0xff]
        %v481 = vld [vmem:[#allocation2 + $0x500] sm:$0xff]
        %v482 = vld [vmem:[#allocation2 + $0x508] sm:$0xff]
        %v483 = vld [vmem:[#allocation2 + $0x510] sm:$0xff]
        %v484 = vld [vmem:[#allocation2 + $0x518] sm:$0xff]
        %v485 = vld [vmem:[#allocation2 + $0x520] sm:$0xff]
        %v486 = vld [vmem:[#allocation2 + $0x528] sm:$0xff]
        %v487 = vld [vmem:[#allocation2 + $0x530] sm:$0xff]
        %v488 = vld [vmem:[#allocation2 + $0x538] sm:$0xff]
        %v489 = vld [vmem:[#allocation2 + $0x540] sm:$0xff]
        %v490 = vld [vmem:[#allocation2 + $0x548] sm:$0xff]
        %v491 = vld [vmem:[#allocation2 + $0x550] sm:$0xff]
        %v492 = vld [vmem:[#allocation2 + $0x558] sm:$0xff]
        %v493 = vld [vmem:[#allocation2 + $0x560] sm:$0xff]
        %v494 = vld [vmem:[#allocation2 + $0x568] sm:$0xff]
        %v495 = vld [vmem:[#allocation2 + $0x570] sm:$0xff]
        %v496 = vld [vmem:[#allocation2 + $0x578] sm:$0xff]
        %v497 = vld [vmem:[#allocation2 + $0x580] sm:$0xff]
        %v498 = vld [vmem:[#allocation2 + $0x588] sm:$0xff]
        %v499 = vld [vmem:[#allocation2 + $0x590] sm:$0xff]
        %v500 = vld [vmem:[#allocation2 + $0x598] sm:$0xff]
        %v501 = vld [vmem:[#allocation2 + $0x5a0] sm:$0xff]
        %v502 = vld [vmem:[#allocation2 + $0x5a8] sm:$0xff]
        %v503 = vld [vmem:[#allocation2 + $0x5b0] sm:$0xff]
        %v504 = vld [vmem:[#allocation2 + $0x5b8] sm:$0xff]
        %v505 = vld [vmem:[#allocation2 + $0x5c0] sm:$0xff]
        %v506 = vld [vmem:[#allocation2 + $0x5c8] sm:$0xff]
        %v507 = vld [vmem:[#allocation2 + $0x5d0] sm:$0xff]
        %v508 = vld [vmem:[#allocation2 + $0x5d8] sm:$0xff]
        %v509 = vld [vmem:[#allocation2 + $0x5e0] sm:$0xff]
        %v510 = vld [vmem:[#allocation2 + $0x5e8] sm:$0xff]
        %v511 = vld [vmem:[#allocation2 + $0x5f0] sm:$0xff]
        %v512 = vld [vmem:[#allocation2 + $0x5f8] sm:$0xff]
        %v513 = vld [vmem:[#allocation2 + $0x600] sm:$0xff]
        %v514 = vld [vmem:[#allocation2 + $0x608] sm:$0xff]
        %v515 = vld [vmem:[#allocation2 + $0x610] sm:$0xff]
        %v516 = vld [vmem:[#allocation2 + $0x618] sm:$0xff]
        %v517 = vld [vmem:[#allocation2 + $0x620] sm:$0xff]
        %v518 = vld [vmem:[#allocation2 + $0x628] sm:$0xff]
        %v519 = vld [vmem:[#allocation2 + $0x630] sm:$0xff]
        %v520 = vld [vmem:[#allocation2 + $0x638] sm:$0xff]
        %v521 = vld [vmem:[#allocation2 + $0x640] sm:$0xff]
        %v522 = vld [vmem:[#allocation2 + $0x648] sm:$0xff]
        %v523 = vld [vmem:[#allocation2 + $0x650] sm:$0xff]
        %v524 = vld [vmem:[#allocation2 + $0x658] sm:$0xff]
        %v525 = vld [vmem:[#allocation2 + $0x660] sm:$0xff]
        %v526 = vld [vmem:[#allocation2 + $0x668] sm:$0xff]
        %v527 = vld [vmem:[#allocation2 + $0x670] sm:$0xff]
        %v528 = vld [vmem:[#allocation2 + $0x678] sm:$0xff]
        %v529 = vld [vmem:[#allocation2 + $0x680] sm:$0xff]
        %v530 = vld [vmem:[#allocation2 + $0x688] sm:$0xff]
        %v531 = vld [vmem:[#allocation2 + $0x690] sm:$0xff]
        %v532 = vld [vmem:[#allocation2 + $0x698] sm:$0xff]
        %v533 = vld [vmem:[#allocation2 + $0x6a0] sm:$0xff]
        %v534 = vld [vmem:[#allocation2 + $0x6a8] sm:$0xff]
        %v535 = vld [vmem:[#allocation2 + $0x6b0] sm:$0xff]
        %v536 = vld [vmem:[#allocation2 + $0x6b8] sm:$0xff]
        %v537 = vld [vmem:[#allocation2 + $0x6c0] sm:$0xff]
        %v538 = vld [vmem:[#allocation2 + $0x6c8] sm:$0xff]
        %v539 = vld [vmem:[#allocation2 + $0x6d0] sm:$0xff]
        %v540 = vld [vmem:[#allocation2 + $0x6d8] sm:$0xff]
        %v541 = vld [vmem:[#allocation2 + $0x6e0] sm:$0xff]
        %v542 = vld [vmem:[#allocation2 + $0x6e8] sm:$0xff]
        %v543 = vld [vmem:[#allocation2 + $0x6f0] sm:$0xff]
        %v544 = vld [vmem:[#allocation2 + $0x6f8] sm:$0xff]
        %v545 = vld [vmem:[#allocation2 + $0x700] sm:$0xff]
        %v546 = vld [vmem:[#allocation2 + $0x708] sm:$0xff]
        %v547 = vld [vmem:[#allocation2 + $0x710] sm:$0xff]
        %v548 = vld [vmem:[#allocation2 + $0x718] sm:$0xff]
        %v549 = vld [vmem:[#allocation2 + $0x720] sm:$0xff]
        %v550 = vld [vmem:[#allocation2 + $0x728] sm:$0xff]
        %v551 = vld [vmem:[#allocation2 + $0x730] sm:$0xff]
        %v552 = vld [vmem:[#allocation2 + $0x738] sm:$0xff]
        %v553 = vld [vmem:[#allocation2 + $0x740] sm:$0xff]
        %v554 = vld [vmem:[#allocation2 + $0x748] sm:$0xff]
        %v555 = vld [vmem:[#allocation2 + $0x750] sm:$0xff]
        %v556 = vld [vmem:[#allocation2 + $0x758] sm:$0xff]
        %v557 = vld [vmem:[#allocation2 + $0x760] sm:$0xff]
        %v558 = vld [vmem:[#allocation2 + $0x768] sm:$0xff]
        %v559 = vld [vmem:[#allocation2 + $0x770] sm:$0xff]
        %v560 = vld [vmem:[#allocation2 + $0x778] sm:$0xff]
        %v561 = vld [vmem:[#allocation2 + $0x780] sm:$0xff]
        %v562 = vld [vmem:[#allocation2 + $0x788] sm:$0xff]
        %v563 = vld [vmem:[#allocation2 + $0x790] sm:$0xff]
        %v564 = vld [vmem:[#allocation2 + $0x798] sm:$0xff]
        %v565 = vld [vmem:[#allocation2 + $0x7a0] sm:$0xff]
        %v566 = vld [vmem:[#allocation2 + $0x7a8] sm:$0xff]
        %v567 = vld [vmem:[#allocation2 + $0x7b0] sm:$0xff]
        %v568 = vld [vmem:[#allocation2 + $0x7b8] sm:$0xff]
        %v569 = vld [vmem:[#allocation2 + $0x7c0] sm:$0xff]
        %v570 = vld [vmem:[#allocation2 + $0x7c8] sm:$0xff]
        %v571 = vld [vmem:[#allocation2 + $0x7d0] sm:$0xff]
        %v572 = vld [vmem:[#allocation2 + $0x7d8] sm:$0xff]
        %v573 = vld [vmem:[#allocation2 + $0x7e0] sm:$0xff]
        %v574 = vld [vmem:[#allocation2 + $0x7e8] sm:$0xff]
        %v575 = vld [vmem:[#allocation2 + $0x7f0] sm:$0xff]
        %v576 = vld [vmem:[#allocation2 + $0x7f8] sm:$0xff]
        %v577 = vld [vmem:[#allocation2 + $0x800] sm:$0xff]
        %v578 = vld [vmem:[#allocation2 + $0x808] sm:$0xff]
        %v579 = vld [vmem:[#allocation2 + $0x810] sm:$0xff]
        %v580 = vld [vmem:[#allocation2 + $0x818] sm:$0xff]
        %v581 = vld [vmem:[#allocation2 + $0x820] sm:$0xff]
        %v582 = vld [vmem:[#allocation2 + $0x828] sm:$0xff]
        %v583 = vld [vmem:[#allocation2 + $0x830] sm:$0xff]
        %v584 = vld [vmem:[#allocation2 + $0x838] sm:$0xff]
        %v585 = vld [vmem:[#allocation2 + $0x840] sm:$0xff]
        %v586 = vld [vmem:[#allocation2 + $0x848] sm:$0xff]
        %v587 = vld [vmem:[#allocation2 + $0x850] sm:$0xff]
        %v588 = vld [vmem:[#allocation2 + $0x858] sm:$0xff]
        %v589 = vld [vmem:[#allocation2 + $0x860] sm:$0xff]
        %v590 = vld [vmem:[#allocation2 + $0x868] sm:$0xff]
        %v591 = vld [vmem:[#allocation2 + $0x870] sm:$0xff]
        %v592 = vld [vmem:[#allocation2 + $0x878] sm:$0xff]
        %v593 = vld [vmem:[#allocation2 + $0x880] sm:$0xff]
        %v594 = vld [vmem:[#allocation2 + $0x888] sm:$0xff]
        %v595 = vld [vmem:[#allocation2 + $0x890] sm:$0xff]
        %v596 = vld [vmem:[#allocation2 + $0x898] sm:$0xff]
        %v597 = vld [vmem:[#allocation2 + $0x8a0] sm:$0xff]
        %v598 = vld [vmem:[#allocation2 + $0x8a8] sm:$0xff]
        %v599 = vld [vmem:[#allocation2 + $0x8b0] sm:$0xff]
        %v600 = vld [vmem:[#allocation2 + $0x8b8] sm:$0xff]
        %v601 = vld [vmem:[#allocation2 + $0x8c0] sm:$0xff]
        %v602 = vld [vmem:[#allocation2 + $0x8c8] sm:$0xff]
        %v603 = vld [vmem:[#allocation2 + $0x8d0] sm:$0xff]
        %v604 = vld [vmem:[#allocation2 + $0x8d8] sm:$0xff]
        %v605 = vld [vmem:[#allocation2 + $0x8e0] sm:$0xff]
        %v606 = vld [vmem:[#allocation2 + $0x8e8] sm:$0xff]
        %v607 = vld [vmem:[#allocation2 + $0x8f0] sm:$0xff]
        %v608 = vld [vmem:[#allocation2 + $0x8f8] sm:$0xff]
        %v609 = vld [vmem:[#allocation5] sm:$0xff]
        %v610 = vld [vmem:[#allocation5 + $0x8] sm:$0xf]
        %v613 = vlaneseq
        %v614 = vshrl.u32 %v613, 7
        %v615 = vsub.s32 0, %v614
        %v616 = vrot.slane %v609, %v615
        %v617 = vlaneseq
        %v618 = vshrl.u32 %v617, 7
        %v619 = vsub.s32 1, %v618
        %v620 = vrot.slane %v609, %v619
        %v621 = vlaneseq
        %v622 = vshrl.u32 %v621, 7
        %v623 = vsub.s32 2, %v622
        %v624 = vrot.slane %v609, %v623
        %v625 = vlaneseq
        %v626 = vshrl.u32 %v625, 7
        %v627 = vsub.s32 3, %v626
        %v628 = vrot.slane %v609, %v627
        %v629 = vlaneseq
        %v630 = vshrl.u32 %v629, 7
        %v631 = vsub.s32 4, %v630
        %v632 = vrot.slane %v609, %v631
        %v633 = vlaneseq
        %v634 = vshrl.u32 %v633, 7
        %v635 = vsub.s32 5, %v634
        %v636 = vrot.slane %v609, %v635
        %v637 = vlaneseq
        %v638 = vshrl.u32 %v637, 7
        %v639 = vsub.s32 6, %v638
        %v640 = vrot.slane %v609, %v639
        %v641 = vlaneseq
        %v642 = vshrl.u32 %v641, 7
        %v643 = vsub.s32 7, %v642
        %v644 = vrot.slane %v609, %v643
        %v645 = vlaneseq
        %v646 = vshrl.u32 %v645, 7
        %v647 = vsub.s32 0, %v646
        %v648 = vrot.slane %v610, %v647
        %v649 = vlaneseq
        %v650 = vshrl.u32 %v649, 7
        %v651 = vsub.s32 1, %v650
        %v652 = vrot.slane %v610, %v651
        %v653 = vlaneseq
        %v654 = vshrl.u32 %v653, 7
        %v655 = vsub.s32 2, %v654
        %v656 = vrot.slane %v610, %v655
        %v657 = vlaneseq
        %v658 = vshrl.u32 %v657, 7
        %v659 = vsub.s32 3, %v658
        %v660 = vrot.slane %v610, %v659
        %v675 = vunpack.c.l.b16 %v319
        %v676 = vunpack.c.h.b16 %v319
        %v677 = vunpack.c.l.b16 %v320
        %v678 = vpack.c.b16 %v675, %v675
        %v679 = vpack.c.b16 %v676, %v676
        %v680 = vpack.c.b16 %v677, %v677
        %v972 = vunpack.c.l.b16 %v321
        %v973 = vunpack.c.h.b16 %v321
        %v974 = vunpack.c.l.b16 %v322
        %v975 = vunpack.c.h.b16 %v322
        %v976 = vunpack.c.l.b16 %v323
        %v977 = vunpack.c.h.b16 %v323
        %v978 = vunpack.c.l.b16 %v324
        %v979 = vunpack.c.h.b16 %v324
        %v980 = vunpack.c.l.b16 %v325
        %v981 = vunpack.c.h.b16 %v325
        %v982 = vunpack.c.l.b16 %v326
        %v983 = vunpack.c.h.b16 %v326
        %v984 = vunpack.c.l.b16 %v327
        %v985 = vunpack.c.h.b16 %v327
        %v986 = vunpack.c.l.b16 %v328
        %v987 = vunpack.c.h.b16 %v328
        %v988 = vunpack.c.l.b16 %v329
        %v989 = vunpack.c.h.b16 %v329
        %v990 = vunpack.c.l.b16 %v330
        %v991 = vunpack.c.h.b16 %v330
        %v992 = vunpack.c.l.b16 %v331
        %v993 = vunpack.c.h.b16 %v331
        %v994 = vunpack.c.l.b16 %v332
        %v995 = vunpack.c.h.b16 %v332
        %v996 = vunpack.c.l.b16 %v333
        %v997 = vunpack.c.h.b16 %v333
        %v998 = vunpack.c.l.b16 %v334
        %v999 = vunpack.c.h.b16 %v334
        %v1000 = vunpack.c.l.b16 %v335
        %v1001 = vunpack.c.h.b16 %v335
        %v1002 = vunpack.c.l.b16 %v336
        %v1003 = vunpack.c.h.b16 %v336
        %v1004 = vunpack.c.l.b16 %v337
        %v1005 = vunpack.c.h.b16 %v337
        %v1006 = vunpack.c.l.b16 %v338
        %v1007 = vunpack.c.h.b16 %v338
        %v1008 = vunpack.c.l.b16 %v339
        %v1009 = vunpack.c.h.b16 %v339
        %v1010 = vunpack.c.l.b16 %v340
        %v1011 = vunpack.c.h.b16 %v340
        %v1012 = vunpack.c.l.b16 %v341
        %v1013 = vunpack.c.h.b16 %v341
        %v1014 = vunpack.c.l.b16 %v342
        %v1015 = vunpack.c.h.b16 %v342
        %v1016 = vunpack.c.l.b16 %v343
        %v1017 = vunpack.c.h.b16 %v343
        %v1018 = vunpack.c.l.b16 %v344
        %v1019 = vunpack.c.h.b16 %v344
        %v1020 = vunpack.c.l.b16 %v345
        %v1021 = vunpack.c.h.b16 %v345
        %v1022 = vunpack.c.l.b16 %v346
        %v1023 = vunpack.c.h.b16 %v346
        %v1024 = vunpack.c.l.b16 %v347
        %v1025 = vunpack.c.h.b16 %v347
        %v1026 = vunpack.c.l.b16 %v348
        %v1027 = vunpack.c.h.b16 %v348
        %v1028 = vunpack.c.l.b16 %v349
        %v1029 = vunpack.c.h.b16 %v349
        %v1030 = vunpack.c.l.b16 %v350
        %v1031 = vunpack.c.h.b16 %v350
        %v1032 = vunpack.c.l.b16 %v351
        %v1033 = vunpack.c.h.b16 %v351
        %v1034 = vunpack.c.l.b16 %v352
        %v1035 = vunpack.c.h.b16 %v352
        %v1036 = vunpack.c.l.b16 %v353
        %v1037 = vunpack.c.h.b16 %v353
        %v1038 = vunpack.c.l.b16 %v354
        %v1039 = vunpack.c.h.b16 %v354
        %v1040 = vunpack.c.l.b16 %v355
        %v1041 = vunpack.c.h.b16 %v355
        %v1042 = vunpack.c.l.b16 %v356
        %v1043 = vunpack.c.h.b16 %v356
        %v1044 = vunpack.c.l.b16 %v357
        %v1045 = vunpack.c.h.b16 %v357
        %v1046 = vunpack.c.l.b16 %v358
        %v1047 = vunpack.c.h.b16 %v358
        %v1048 = vunpack.c.l.b16 %v359
        %v1049 = vunpack.c.h.b16 %v359
        %v1050 = vunpack.c.l.b16 %v360
        %v1051 = vunpack.c.h.b16 %v360
        %v1052 = vunpack.c.l.b16 %v361
        %v1053 = vunpack.c.h.b16 %v361
        %v1054 = vunpack.c.l.b16 %v362
        %v1055 = vunpack.c.h.b16 %v362
        %v1056 = vunpack.c.l.b16 %v363
        %v1057 = vunpack.c.h.b16 %v363
        %v1058 = vunpack.c.l.b16 %v364
        %v1059 = vunpack.c.h.b16 %v364
        %v1060 = vunpack.c.l.b16 %v365
        %v1061 = vunpack.c.h.b16 %v365
        %v1062 = vunpack.c.l.b16 %v366
        %v1063 = vunpack.c.h.b16 %v366
        %v1064 = vunpack.c.l.b16 %v367
        %v1065 = vunpack.c.h.b16 %v367
        %v1066 = vunpack.c.l.b16 %v368
        %v1067 = vunpack.c.h.b16 %v368
        %v1068 = vunpack.c.l.b16 %v369
        %v1069 = vunpack.c.h.b16 %v369
        %v1070 = vunpack.c.l.b16 %v370
        %v1071 = vunpack.c.h.b16 %v370
        %v1072 = vunpack.c.l.b16 %v371
        %v1073 = vunpack.c.h.b16 %v371
        %v1074 = vunpack.c.l.b16 %v372
        %v1075 = vunpack.c.h.b16 %v372
        %v1076 = vunpack.c.l.b16 %v373
        %v1077 = vunpack.c.h.b16 %v373
        %v1078 = vunpack.c.l.b16 %v374
        %v1079 = vunpack.c.h.b16 %v374
        %v1080 = vunpack.c.l.b16 %v375
        %v1081 = vunpack.c.h.b16 %v375
        %v1082 = vunpack.c.l.b16 %v376
        %v1083 = vunpack.c.h.b16 %v376
        %v1084 = vunpack.c.l.b16 %v377
        %v1085 = vunpack.c.h.b16 %v377
        %v1086 = vunpack.c.l.b16 %v378
        %v1087 = vunpack.c.h.b16 %v378
        %v1088 = vunpack.c.l.b16 %v379
        %v1089 = vunpack.c.h.b16 %v379
        %v1090 = vunpack.c.l.b16 %v380
        %v1091 = vunpack.c.h.b16 %v380
        %v1092 = vunpack.c.l.b16 %v381
        %v1093 = vunpack.c.h.b16 %v381
        %v1094 = vunpack.c.l.b16 %v382
        %v1095 = vunpack.c.h.b16 %v382
        %v1096 = vunpack.c.l.b16 %v383
        %v1097 = vunpack.c.h.b16 %v383
        %v1098 = vunpack.c.l.b16 %v384
        %v1099 = vunpack.c.h.b16 %v384
        %v1100 = vunpack.c.l.b16 %v385
        %v1101 = vunpack.c.h.b16 %v385
        %v1102 = vunpack.c.l.b16 %v386
        %v1103 = vunpack.c.h.b16 %v386
        %v1104 = vunpack.c.l.b16 %v387
        %v1105 = vunpack.c.h.b16 %v387
        %v1106 = vunpack.c.l.b16 %v388
        %v1107 = vunpack.c.h.b16 %v388
        %v1108 = vunpack.c.l.b16 %v389
        %v1109 = vunpack.c.h.b16 %v389
        %v1110 = vunpack.c.l.b16 %v390
        %v1111 = vunpack.c.h.b16 %v390
        %v1112 = vunpack.c.l.b16 %v391
        %v1113 = vunpack.c.h.b16 %v391
        %v1114 = vunpack.c.l.b16 %v392
        %v1115 = vunpack.c.h.b16 %v392
        %v1116 = vunpack.c.l.b16 %v393
        %v1117 = vunpack.c.h.b16 %v393
        %v1118 = vunpack.c.l.b16 %v394
        %v1119 = vunpack.c.h.b16 %v394
        %v1120 = vunpack.c.l.b16 %v395
        %v1121 = vunpack.c.h.b16 %v395
        %v1122 = vunpack.c.l.b16 %v396
        %v1123 = vunpack.c.h.b16 %v396
        %v1124 = vunpack.c.l.b16 %v397
        %v1125 = vunpack.c.h.b16 %v397
        %v1126 = vunpack.c.l.b16 %v398
        %v1127 = vunpack.c.h.b16 %v398
        %v1128 = vunpack.c.l.b16 %v399
        %v1129 = vunpack.c.h.b16 %v399
        %v1130 = vunpack.c.l.b16 %v400
        %v1131 = vunpack.c.h.b16 %v400
        %v1132 = vunpack.c.l.b16 %v401
        %v1133 = vunpack.c.h.b16 %v401
        %v1134 = vunpack.c.l.b16 %v402
        %v1135 = vunpack.c.h.b16 %v402
        %v1136 = vunpack.c.l.b16 %v403
        %v1137 = vunpack.c.h.b16 %v403
        %v1138 = vunpack.c.l.b16 %v404
        %v1139 = vunpack.c.h.b16 %v404
        %v1140 = vunpack.c.l.b16 %v405
        %v1141 = vunpack.c.h.b16 %v405
        %v1142 = vunpack.c.l.b16 %v406
        %v1143 = vunpack.c.h.b16 %v406
        %v1144 = vunpack.c.l.b16 %v407
        %v1145 = vunpack.c.h.b16 %v407
        %v1146 = vunpack.c.l.b16 %v408
        %v1147 = vunpack.c.h.b16 %v408
        %v1148 = vunpack.c.l.b16 %v409
        %v1149 = vunpack.c.h.b16 %v409
        %v1150 = vunpack.c.l.b16 %v410
        %v1151 = vunpack.c.h.b16 %v410
        %v1152 = vunpack.c.l.b16 %v411
        %v1153 = vunpack.c.h.b16 %v411
        %v1154 = vunpack.c.l.b16 %v412
        %v1155 = vunpack.c.h.b16 %v412
        %v1156 = vunpack.c.l.b16 %v413
        %v1157 = vunpack.c.h.b16 %v413
        %v1158 = vunpack.c.l.b16 %v414
        %v1159 = vunpack.c.h.b16 %v414
        %v1160 = vunpack.c.l.b16 %v415
        %v1161 = vunpack.c.h.b16 %v415
        %v1162 = vunpack.c.l.b16 %v416
        %v1163 = vunpack.c.h.b16 %v416
        %v1164 = vunpack.c.l.b16 %v417
        %v1165 = vunpack.c.h.b16 %v417
        %v1166 = vunpack.c.l.b16 %v418
        %v1167 = vunpack.c.h.b16 %v418
        %v1168 = vunpack.c.l.b16 %v419
        %v1169 = vunpack.c.h.b16 %v419
        %v1170 = vunpack.c.l.b16 %v420
        %v1171 = vunpack.c.h.b16 %v420
        %v1172 = vunpack.c.l.b16 %v421
        %v1173 = vunpack.c.h.b16 %v421
        %v1174 = vunpack.c.l.b16 %v422
        %v1175 = vunpack.c.h.b16 %v422
        %v1176 = vunpack.c.l.b16 %v423
        %v1177 = vunpack.c.h.b16 %v423
        %v1178 = vunpack.c.l.b16 %v424
        %v1179 = vunpack.c.h.b16 %v424
        %v1180 = vunpack.c.l.b16 %v425
        %v1181 = vunpack.c.h.b16 %v425
        %v1182 = vunpack.c.l.b16 %v426
        %v1183 = vunpack.c.h.b16 %v426
        %v1184 = vunpack.c.l.b16 %v427
        %v1185 = vunpack.c.h.b16 %v427
        %v1186 = vunpack.c.l.b16 %v428
        %v1187 = vunpack.c.h.b16 %v428
        %v1188 = vunpack.c.l.b16 %v429
        %v1189 = vunpack.c.h.b16 %v429
        %v1190 = vunpack.c.l.b16 %v430
        %v1191 = vunpack.c.h.b16 %v430
        %v1192 = vunpack.c.l.b16 %v431
        %v1193 = vunpack.c.h.b16 %v431
        %v1194 = vunpack.c.l.b16 %v432
        %v1195 = vunpack.c.h.b16 %v432
        %v1196 = vunpack.c.l.b16 %v433
        %v1197 = vunpack.c.h.b16 %v433
        %v1198 = vunpack.c.l.b16 %v434
        %v1199 = vunpack.c.h.b16 %v434
        %v1200 = vunpack.c.l.b16 %v435
        %v1201 = vunpack.c.h.b16 %v435
        %v1202 = vunpack.c.l.b16 %v436
        %v1203 = vunpack.c.h.b16 %v436
        %v1204 = vunpack.c.l.b16 %v437
        %v1205 = vunpack.c.h.b16 %v437
        %v1206 = vunpack.c.l.b16 %v438
        %v1207 = vunpack.c.h.b16 %v438
        %v1208 = vunpack.c.l.b16 %v439
        %v1209 = vunpack.c.h.b16 %v439
        %v1210 = vunpack.c.l.b16 %v440
        %v1211 = vunpack.c.h.b16 %v440
        %v1212 = vunpack.c.l.b16 %v441
        %v1213 = vunpack.c.h.b16 %v441
        %v1214 = vunpack.c.l.b16 %v442
        %v1215 = vunpack.c.h.b16 %v442
        %v1216 = vunpack.c.l.b16 %v443
        %v1217 = vunpack.c.h.b16 %v443
        %v1218 = vunpack.c.l.b16 %v444
        %v1219 = vunpack.c.h.b16 %v444
        %v1220 = vunpack.c.l.b16 %v445
        %v1221 = vunpack.c.h.b16 %v445
        %v1222 = vunpack.c.l.b16 %v446
        %v1223 = vunpack.c.h.b16 %v446
        %v1224 = vunpack.c.l.b16 %v447
        %v1225 = vunpack.c.h.b16 %v447
        %v1226 = vunpack.c.l.b16 %v448
        %v1227 = vunpack.c.h.b16 %v448
        %v1228 = vunpack.c.l.b16 %v449
        %v1229 = vunpack.c.h.b16 %v449
        %v1230 = vunpack.c.l.b16 %v450
        %v1231 = vunpack.c.h.b16 %v450
        %v1232 = vunpack.c.l.b16 %v451
        %v1233 = vunpack.c.h.b16 %v451
        %v1234 = vunpack.c.l.b16 %v452
        %v1235 = vunpack.c.h.b16 %v452
        %v1236 = vunpack.c.l.b16 %v453
        %v1237 = vunpack.c.h.b16 %v453
        %v1238 = vunpack.c.l.b16 %v454
        %v1239 = vunpack.c.h.b16 %v454
        %v1240 = vunpack.c.l.b16 %v455
        %v1241 = vunpack.c.h.b16 %v455
        %v1242 = vunpack.c.l.b16 %v456
        %v1243 = vunpack.c.h.b16 %v456
        %v1244 = vunpack.c.l.b16 %v457
        %v1245 = vunpack.c.h.b16 %v457
        %v1246 = vunpack.c.l.b16 %v458
        %v1247 = vunpack.c.h.b16 %v458
        %v1248 = vunpack.c.l.b16 %v459
        %v1249 = vunpack.c.h.b16 %v459
        %v1250 = vunpack.c.l.b16 %v460
        %v1251 = vunpack.c.h.b16 %v460
        %v1252 = vunpack.c.l.b16 %v461
        %v1253 = vunpack.c.h.b16 %v461
        %v1254 = vunpack.c.l.b16 %v462
        %v1255 = vunpack.c.h.b16 %v462
        %v1256 = vunpack.c.l.b16 %v463
        %v1257 = vunpack.c.h.b16 %v463
        %v1258 = vunpack.c.l.b16 %v464
        %v1259 = vunpack.c.h.b16 %v464
        %v1260 = vunpack.c.l.b16 %v465
        %v1261 = vunpack.c.h.b16 %v465
        %v1262 = vunpack.c.l.b16 %v466
        %v1263 = vunpack.c.h.b16 %v466
        %v1264 = vunpack.c.l.b16 %v467
        %v1265 = vunpack.c.h.b16 %v467
        %v1266 = vunpack.c.l.b16 %v468
        %v1267 = vunpack.c.h.b16 %v468
        %v1268 = vunpack.c.l.b16 %v469
        %v1269 = vunpack.c.h.b16 %v469
        %v1270 = vunpack.c.l.b16 %v470
        %v1271 = vunpack.c.h.b16 %v470
        %v1272 = vunpack.c.l.b16 %v471
        %v1273 = vunpack.c.h.b16 %v471
        %v1274 = vunpack.c.l.b16 %v472
        %v1275 = vunpack.c.h.b16 %v472
        %v1276 = vunpack.c.l.b16 %v473
        %v1277 = vunpack.c.h.b16 %v473
        %v1278 = vunpack.c.l.b16 %v474
        %v1279 = vunpack.c.h.b16 %v474
        %v1280 = vunpack.c.l.b16 %v475
        %v1281 = vunpack.c.h.b16 %v475
        %v1282 = vunpack.c.l.b16 %v476
        %v1283 = vunpack.c.h.b16 %v476
        %v1284 = vunpack.c.l.b16 %v477
        %v1285 = vunpack.c.h.b16 %v477
        %v1286 = vunpack.c.l.b16 %v478
        %v1287 = vunpack.c.h.b16 %v478
        %v1288 = vunpack.c.l.b16 %v479
        %v1289 = vunpack.c.h.b16 %v479
        %v1290 = vunpack.c.l.b16 %v480
        %v1291 = vunpack.c.h.b16 %v480
        %v1292 = vunpack.c.l.b16 %v481
        %v1293 = vunpack.c.h.b16 %v481
        %v1294 = vunpack.c.l.b16 %v482
        %v1295 = vunpack.c.h.b16 %v482
        %v1296 = vunpack.c.l.b16 %v483
        %v1297 = vunpack.c.h.b16 %v483
        %v1298 = vunpack.c.l.b16 %v484
        %v1299 = vunpack.c.h.b16 %v484
        %v1300 = vunpack.c.l.b16 %v485
        %v1301 = vunpack.c.h.b16 %v485
        %v1302 = vunpack.c.l.b16 %v486
        %v1303 = vunpack.c.h.b16 %v486
        %v1304 = vunpack.c.l.b16 %v487
        %v1305 = vunpack.c.h.b16 %v487
        %v1306 = vunpack.c.l.b16 %v488
        %v1307 = vunpack.c.h.b16 %v488
        %v1308 = vunpack.c.l.b16 %v489
        %v1309 = vunpack.c.h.b16 %v489
        %v1310 = vunpack.c.l.b16 %v490
        %v1311 = vunpack.c.h.b16 %v490
        %v1312 = vunpack.c.l.b16 %v491
        %v1313 = vunpack.c.h.b16 %v491
        %v1314 = vunpack.c.l.b16 %v492
        %v1315 = vunpack.c.h.b16 %v492
        %v1316 = vunpack.c.l.b16 %v493
        %v1317 = vunpack.c.h.b16 %v493
        %v1318 = vunpack.c.l.b16 %v494
        %v1319 = vunpack.c.h.b16 %v494
        %v1320 = vunpack.c.l.b16 %v495
        %v1321 = vunpack.c.h.b16 %v495
        %v1322 = vunpack.c.l.b16 %v496
        %v1323 = vunpack.c.h.b16 %v496
        %v1324 = vunpack.c.l.b16 %v497
        %v1325 = vunpack.c.h.b16 %v497
        %v1326 = vunpack.c.l.b16 %v498
        %v1327 = vunpack.c.h.b16 %v498
        %v1328 = vunpack.c.l.b16 %v499
        %v1329 = vunpack.c.h.b16 %v499
        %v1330 = vunpack.c.l.b16 %v500
        %v1331 = vunpack.c.h.b16 %v500
        %v1332 = vunpack.c.l.b16 %v501
        %v1333 = vunpack.c.h.b16 %v501
        %v1334 = vunpack.c.l.b16 %v502
        %v1335 = vunpack.c.h.b16 %v502
        %v1336 = vunpack.c.l.b16 %v503
        %v1337 = vunpack.c.h.b16 %v503
        %v1338 = vunpack.c.l.b16 %v504
        %v1339 = vunpack.c.h.b16 %v504
        %v1340 = vunpack.c.l.b16 %v505
        %v1341 = vunpack.c.h.b16 %v505
        %v1342 = vunpack.c.l.b16 %v506
        %v1343 = vunpack.c.h.b16 %v506
        %v1344 = vunpack.c.l.b16 %v507
        %v1345 = vunpack.c.h.b16 %v507
        %v1346 = vunpack.c.l.b16 %v508
        %v1347 = vunpack.c.h.b16 %v508
        %v1348 = vunpack.c.l.b16 %v509
        %v1349 = vunpack.c.h.b16 %v509
        %v1350 = vunpack.c.l.b16 %v510
        %v1351 = vunpack.c.h.b16 %v510
        %v1352 = vunpack.c.l.b16 %v511
        %v1353 = vunpack.c.h.b16 %v511
        %v1354 = vunpack.c.l.b16 %v512
        %v1355 = vunpack.c.h.b16 %v512
        %v1356 = vunpack.c.l.b16 %v513
        %v1357 = vunpack.c.h.b16 %v513
        %v1358 = vunpack.c.l.b16 %v514
        %v1359 = vunpack.c.h.b16 %v514
        %v1360 = vunpack.c.l.b16 %v515
        %v1361 = vunpack.c.h.b16 %v515
        %v1362 = vunpack.c.l.b16 %v516
        %v1363 = vunpack.c.h.b16 %v516
        %v1364 = vunpack.c.l.b16 %v517
        %v1365 = vunpack.c.h.b16 %v517
        %v1366 = vunpack.c.l.b16 %v518
        %v1367 = vunpack.c.h.b16 %v518
        %v1368 = vunpack.c.l.b16 %v519
        %v1369 = vunpack.c.h.b16 %v519
        %v1370 = vunpack.c.l.b16 %v520
        %v1371 = vunpack.c.h.b16 %v520
        %v1372 = vunpack.c.l.b16 %v521
        %v1373 = vunpack.c.h.b16 %v521
        %v1374 = vunpack.c.l.b16 %v522
        %v1375 = vunpack.c.h.b16 %v522
        %v1376 = vunpack.c.l.b16 %v523
        %v1377 = vunpack.c.h.b16 %v523
        %v1378 = vunpack.c.l.b16 %v524
        %v1379 = vunpack.c.h.b16 %v524
        %v1380 = vunpack.c.l.b16 %v525
        %v1381 = vunpack.c.h.b16 %v525
        %v1382 = vunpack.c.l.b16 %v526
        %v1383 = vunpack.c.h.b16 %v526
        %v1384 = vunpack.c.l.b16 %v527
        %v1385 = vunpack.c.h.b16 %v527
        %v1386 = vunpack.c.l.b16 %v528
        %v1387 = vunpack.c.h.b16 %v528
        %v1388 = vunpack.c.l.b16 %v529
        %v1389 = vunpack.c.h.b16 %v529
        %v1390 = vunpack.c.l.b16 %v530
        %v1391 = vunpack.c.h.b16 %v530
        %v1392 = vunpack.c.l.b16 %v531
        %v1393 = vunpack.c.h.b16 %v531
        %v1394 = vunpack.c.l.b16 %v532
        %v1395 = vunpack.c.h.b16 %v532
        %v1396 = vunpack.c.l.b16 %v533
        %v1397 = vunpack.c.h.b16 %v533
        %v1398 = vunpack.c.l.b16 %v534
        %v1399 = vunpack.c.h.b16 %v534
        %v1400 = vunpack.c.l.b16 %v535
        %v1401 = vunpack.c.h.b16 %v535
        %v1402 = vunpack.c.l.b16 %v536
        %v1403 = vunpack.c.h.b16 %v536
        %v1404 = vunpack.c.l.b16 %v537
        %v1405 = vunpack.c.h.b16 %v537
        %v1406 = vunpack.c.l.b16 %v538
        %v1407 = vunpack.c.h.b16 %v538
        %v1408 = vunpack.c.l.b16 %v539
        %v1409 = vunpack.c.h.b16 %v539
        %v1410 = vunpack.c.l.b16 %v540
        %v1411 = vunpack.c.h.b16 %v540
        %v1412 = vunpack.c.l.b16 %v541
        %v1413 = vunpack.c.h.b16 %v541
        %v1414 = vunpack.c.l.b16 %v542
        %v1415 = vunpack.c.h.b16 %v542
        %v1416 = vunpack.c.l.b16 %v543
        %v1417 = vunpack.c.h.b16 %v543
        %v1418 = vunpack.c.l.b16 %v544
        %v1419 = vunpack.c.h.b16 %v544
        %v1420 = vunpack.c.l.b16 %v545
        %v1421 = vunpack.c.h.b16 %v545
        %v1422 = vunpack.c.l.b16 %v546
        %v1423 = vunpack.c.h.b16 %v546
        %v1424 = vunpack.c.l.b16 %v547
        %v1425 = vunpack.c.h.b16 %v547
        %v1426 = vunpack.c.l.b16 %v548
        %v1427 = vunpack.c.h.b16 %v548
        %v1428 = vunpack.c.l.b16 %v549
        %v1429 = vunpack.c.h.b16 %v549
        %v1430 = vunpack.c.l.b16 %v550
        %v1431 = vunpack.c.h.b16 %v550
        %v1432 = vunpack.c.l.b16 %v551
        %v1433 = vunpack.c.h.b16 %v551
        %v1434 = vunpack.c.l.b16 %v552
        %v1435 = vunpack.c.h.b16 %v552
        %v1436 = vunpack.c.l.b16 %v553
        %v1437 = vunpack.c.h.b16 %v553
        %v1438 = vunpack.c.l.b16 %v554
        %v1439 = vunpack.c.h.b16 %v554
        %v1440 = vunpack.c.l.b16 %v555
        %v1441 = vunpack.c.h.b16 %v555
        %v1442 = vunpack.c.l.b16 %v556
        %v1443 = vunpack.c.h.b16 %v556
        %v1444 = vunpack.c.l.b16 %v557
        %v1445 = vunpack.c.h.b16 %v557
        %v1446 = vunpack.c.l.b16 %v558
        %v1447 = vunpack.c.h.b16 %v558
        %v1448 = vunpack.c.l.b16 %v559
        %v1449 = vunpack.c.h.b16 %v559
        %v1450 = vunpack.c.l.b16 %v560
        %v1451 = vunpack.c.h.b16 %v560
        %v1452 = vunpack.c.l.b16 %v561
        %v1453 = vunpack.c.h.b16 %v561
        %v1454 = vunpack.c.l.b16 %v562
        %v1455 = vunpack.c.h.b16 %v562
        %v1456 = vunpack.c.l.b16 %v563
        %v1457 = vunpack.c.h.b16 %v563
        %v1458 = vunpack.c.l.b16 %v564
        %v1459 = vunpack.c.h.b16 %v564
        %v1460 = vunpack.c.l.b16 %v565
        %v1461 = vunpack.c.h.b16 %v565
        %v1462 = vunpack.c.l.b16 %v566
        %v1463 = vunpack.c.h.b16 %v566
        %v1464 = vunpack.c.l.b16 %v567
        %v1465 = vunpack.c.h.b16 %v567
        %v1466 = vunpack.c.l.b16 %v568
        %v1467 = vunpack.c.h.b16 %v568
        %v1468 = vunpack.c.l.b16 %v569
        %v1469 = vunpack.c.h.b16 %v569
        %v1470 = vunpack.c.l.b16 %v570
        %v1471 = vunpack.c.h.b16 %v570
        %v1472 = vunpack.c.l.b16 %v571
        %v1473 = vunpack.c.h.b16 %v571
        %v1474 = vunpack.c.l.b16 %v572
        %v1475 = vunpack.c.h.b16 %v572
        %v1476 = vunpack.c.l.b16 %v573
        %v1477 = vunpack.c.h.b16 %v573
        %v1478 = vunpack.c.l.b16 %v574
        %v1479 = vunpack.c.h.b16 %v574
        %v1480 = vunpack.c.l.b16 %v575
        %v1481 = vunpack.c.h.b16 %v575
        %v1482 = vunpack.c.l.b16 %v576
        %v1483 = vunpack.c.h.b16 %v576
        %v1484 = vunpack.c.l.b16 %v577
        %v1485 = vunpack.c.h.b16 %v577
        %v1486 = vunpack.c.l.b16 %v578
        %v1487 = vunpack.c.h.b16 %v578
        %v1488 = vunpack.c.l.b16 %v579
        %v1489 = vunpack.c.h.b16 %v579
        %v1490 = vunpack.c.l.b16 %v580
        %v1491 = vunpack.c.h.b16 %v580
        %v1492 = vunpack.c.l.b16 %v581
        %v1493 = vunpack.c.h.b16 %v581
        %v1494 = vunpack.c.l.b16 %v582
        %v1495 = vunpack.c.h.b16 %v582
        %v1496 = vunpack.c.l.b16 %v583
        %v1497 = vunpack.c.h.b16 %v583
        %v1498 = vunpack.c.l.b16 %v584
        %v1499 = vunpack.c.h.b16 %v584
        %v1500 = vunpack.c.l.b16 %v585
        %v1501 = vunpack.c.h.b16 %v585
        %v1502 = vunpack.c.l.b16 %v586
        %v1503 = vunpack.c.h.b16 %v586
        %v1504 = vunpack.c.l.b16 %v587
        %v1505 = vunpack.c.h.b16 %v587
        %v1506 = vunpack.c.l.b16 %v588
        %v1507 = vunpack.c.h.b16 %v588
        %v1508 = vunpack.c.l.b16 %v589
        %v1509 = vunpack.c.h.b16 %v589
        %v1510 = vunpack.c.l.b16 %v590
        %v1511 = vunpack.c.h.b16 %v590
        %v1512 = vunpack.c.l.b16 %v591
        %v1513 = vunpack.c.h.b16 %v591
        %v1514 = vunpack.c.l.b16 %v592
        %v1515 = vunpack.c.h.b16 %v592
        %v1516 = vunpack.c.l.b16 %v593
        %v1517 = vunpack.c.h.b16 %v593
        %v1518 = vunpack.c.l.b16 %v594
        %v1519 = vunpack.c.h.b16 %v594
        %v1520 = vunpack.c.l.b16 %v595
        %v1521 = vunpack.c.h.b16 %v595
        %v1522 = vunpack.c.l.b16 %v596
        %v1523 = vunpack.c.h.b16 %v596
        %v1524 = vunpack.c.l.b16 %v597
        %v1525 = vunpack.c.h.b16 %v597
        %v1526 = vunpack.c.l.b16 %v598
        %v1527 = vunpack.c.h.b16 %v598
        %v1528 = vunpack.c.l.b16 %v599
        %v1529 = vunpack.c.h.b16 %v599
        %v1530 = vunpack.c.l.b16 %v600
        %v1531 = vunpack.c.h.b16 %v600
        %v1532 = vunpack.c.l.b16 %v601
        %v1533 = vunpack.c.h.b16 %v601
        %v1534 = vunpack.c.l.b16 %v602
        %v1535 = vunpack.c.h.b16 %v602
        %v1536 = vunpack.c.l.b16 %v603
        %v1537 = vunpack.c.h.b16 %v603
        %v1538 = vunpack.c.l.b16 %v604
        %v1539 = vunpack.c.h.b16 %v604
        %v1540 = vunpack.c.l.b16 %v605
        %v1541 = vunpack.c.h.b16 %v605
        %v1542 = vunpack.c.l.b16 %v606
        %v1543 = vunpack.c.h.b16 %v606
        %v1544 = vunpack.c.l.b16 %v607
        %v1545 = vunpack.c.h.b16 %v607
        %v1546 = vunpack.c.l.b16 %v608
        %v1547 = vunpack.c.h.b16 %v608
        %v1548 = vpack.c.b16 %v984, %v972
        %v1549 = vpack.c.b16 %v985, %v973
        %v1550 = vpack.c.b16 %v986, %v974
        %v1551 = vpack.c.b16 %v987, %v975
        %v1552 = vpack.c.b16 %v988, %v976
        %v1553 = vpack.c.b16 %v989, %v977
        %v1554 = vpack.c.b16 %v990, %v978
        %v1555 = vpack.c.b16 %v991, %v979
        %v1556 = vpack.c.b16 %v992, %v980
        %v1557 = vpack.c.b16 %v993, %v981
        %v1558 = vpack.c.b16 %v994, %v982
        %v1559 = vpack.c.b16 %v995, %v983
        %v1560 = vpack.c.b16 %v1008, %v996
        %v1561 = vpack.c.b16 %v1009, %v997
        %v1562 = vpack.c.b16 %v1010, %v998
        %v1563 = vpack.c.b16 %v1011, %v999
        %v1564 = vpack.c.b16 %v1012, %v1000
        %v1565 = vpack.c.b16 %v1013, %v1001
        %v1566 = vpack.c.b16 %v1014, %v1002
        %v1567 = vpack.c.b16 %v1015, %v1003
        %v1568 = vpack.c.b16 %v1016, %v1004
        %v1569 = vpack.c.b16 %v1017, %v1005
        %v1570 = vpack.c.b16 %v1018, %v1006
        %v1571 = vpack.c.b16 %v1019, %v1007
        %v1572 = vpack.c.b16 %v1032, %v1020
        %v1573 = vpack.c.b16 %v1033, %v1021
        %v1574 = vpack.c.b16 %v1034, %v1022
        %v1575 = vpack.c.b16 %v1035, %v1023
        %v1576 = vpack.c.b16 %v1036, %v1024
        %v1577 = vpack.c.b16 %v1037, %v1025
        %v1578 = vpack.c.b16 %v1038, %v1026
        %v1579 = vpack.c.b16 %v1039, %v1027
        %v1580 = vpack.c.b16 %v1040, %v1028
        %v1581 = vpack.c.b16 %v1041, %v1029
        %v1582 = vpack.c.b16 %v1042, %v1030
        %v1583 = vpack.c.b16 %v1043, %v1031
        %v1584 = vpack.c.b16 %v1056, %v1044
        %v1585 = vpack.c.b16 %v1057, %v1045
        %v1586 = vpack.c.b16 %v1058, %v1046
        %v1587 = vpack.c.b16 %v1059, %v1047
        %v1588 = vpack.c.b16 %v1060, %v1048
        %v1589 = vpack.c.b16 %v1061, %v1049
        %v1590 = vpack.c.b16 %v1062, %v1050
        %v1591 = vpack.c.b16 %v1063, %v1051
        %v1592 = vpack.c.b16 %v1064, %v1052
        %v1593 = vpack.c.b16 %v1065, %v1053
        %v1594 = vpack.c.b16 %v1066, %v1054
        %v1595 = vpack.c.b16 %v1067, %v1055
        %v1596 = vpack.c.b16 %v1080, %v1068
        %v1597 = vpack.c.b16 %v1081, %v1069
        %v1598 = vpack.c.b16 %v1082, %v1070
        %v1599 = vpack.c.b16 %v1083, %v1071
        %v1600 = vpack.c.b16 %v1084, %v1072
        %v1601 = vpack.c.b16 %v1085, %v1073
        %v1602 = vpack.c.b16 %v1086, %v1074
        %v1603 = vpack.c.b16 %v1087, %v1075
        %v1604 = vpack.c.b16 %v1088, %v1076
        %v1605 = vpack.c.b16 %v1089, %v1077
        %v1606 = vpack.c.b16 %v1090, %v1078
        %v1607 = vpack.c.b16 %v1091, %v1079
        %v1608 = vpack.c.b16 %v1104, %v1092
        %v1609 = vpack.c.b16 %v1105, %v1093
        %v1610 = vpack.c.b16 %v1106, %v1094
        %v1611 = vpack.c.b16 %v1107, %v1095
        %v1612 = vpack.c.b16 %v1108, %v1096
        %v1613 = vpack.c.b16 %v1109, %v1097
        %v1614 = vpack.c.b16 %v1110, %v1098
        %v1615 = vpack.c.b16 %v1111, %v1099
        %v1616 = vpack.c.b16 %v1112, %v1100
        %v1617 = vpack.c.b16 %v1113, %v1101
        %v1618 = vpack.c.b16 %v1114, %v1102
        %v1619 = vpack.c.b16 %v1115, %v1103
        %v1620 = vpack.c.b16 %v1128, %v1116
        %v1621 = vpack.c.b16 %v1129, %v1117
        %v1622 = vpack.c.b16 %v1130, %v1118
        %v1623 = vpack.c.b16 %v1131, %v1119
        %v1624 = vpack.c.b16 %v1132, %v1120
        %v1625 = vpack.c.b16 %v1133, %v1121
        %v1626 = vpack.c.b16 %v1134, %v1122
        %v1627 = vpack.c.b16 %v1135, %v1123
        %v1628 = vpack.c.b16 %v1136, %v1124
        %v1629 = vpack.c.b16 %v1137, %v1125
        %v1630 = vpack.c.b16 %v1138, %v1126
        %v1631 = vpack.c.b16 %v1139, %v1127
        %v1632 = vpack.c.b16 %v1152, %v1140
        %v1633 = vpack.c.b16 %v1153, %v1141
        %v1634 = vpack.c.b16 %v1154, %v1142
        %v1635 = vpack.c.b16 %v1155, %v1143
        %v1636 = vpack.c.b16 %v1156, %v1144
        %v1637 = vpack.c.b16 %v1157, %v1145
        %v1638 = vpack.c.b16 %v1158, %v1146
        %v1639 = vpack.c.b16 %v1159, %v1147
        %v1640 = vpack.c.b16 %v1160, %v1148
        %v1641 = vpack.c.b16 %v1161, %v1149
        %v1642 = vpack.c.b16 %v1162, %v1150
        %v1643 = vpack.c.b16 %v1163, %v1151
        %v1644 = vpack.c.b16 %v1176, %v1164
        %v1645 = vpack.c.b16 %v1177, %v1165
        %v1646 = vpack.c.b16 %v1178, %v1166
        %v1647 = vpack.c.b16 %v1179, %v1167
        %v1648 = vpack.c.b16 %v1180, %v1168
        %v1649 = vpack.c.b16 %v1181, %v1169
        %v1650 = vpack.c.b16 %v1182, %v1170
        %v1651 = vpack.c.b16 %v1183, %v1171
        %v1652 = vpack.c.b16 %v1184, %v1172
        %v1653 = vpack.c.b16 %v1185, %v1173
        %v1654 = vpack.c.b16 %v1186, %v1174
        %v1655 = vpack.c.b16 %v1187, %v1175
        %v1656 = vpack.c.b16 %v1200, %v1188
        %v1657 = vpack.c.b16 %v1201, %v1189
        %v1658 = vpack.c.b16 %v1202, %v1190
        %v1659 = vpack.c.b16 %v1203, %v1191
        %v1660 = vpack.c.b16 %v1204, %v1192
        %v1661 = vpack.c.b16 %v1205, %v1193
        %v1662 = vpack.c.b16 %v1206, %v1194
        %v1663 = vpack.c.b16 %v1207, %v1195
        %v1664 = vpack.c.b16 %v1208, %v1196
        %v1665 = vpack.c.b16 %v1209, %v1197
        %v1666 = vpack.c.b16 %v1210, %v1198
        %v1667 = vpack.c.b16 %v1211, %v1199
        %v1668 = vpack.c.b16 %v1224, %v1212
        %v1669 = vpack.c.b16 %v1225, %v1213
        %v1670 = vpack.c.b16 %v1226, %v1214
        %v1671 = vpack.c.b16 %v1227, %v1215
        %v1672 = vpack.c.b16 %v1228, %v1216
        %v1673 = vpack.c.b16 %v1229, %v1217
        %v1674 = vpack.c.b16 %v1230, %v1218
        %v1675 = vpack.c.b16 %v1231, %v1219
        %v1676 = vpack.c.b16 %v1232, %v1220
        %v1677 = vpack.c.b16 %v1233, %v1221
        %v1678 = vpack.c.b16 %v1234, %v1222
        %v1679 = vpack.c.b16 %v1235, %v1223
        %v1680 = vpack.c.b16 %v1248, %v1236
        %v1681 = vpack.c.b16 %v1249, %v1237
        %v1682 = vpack.c.b16 %v1250, %v1238
        %v1683 = vpack.c.b16 %v1251, %v1239
        %v1684 = vpack.c.b16 %v1252, %v1240
        %v1685 = vpack.c.b16 %v1253, %v1241
        %v1686 = vpack.c.b16 %v1254, %v1242
        %v1687 = vpack.c.b16 %v1255, %v1243
        %v1688 = vpack.c.b16 %v1256, %v1244
        %v1689 = vpack.c.b16 %v1257, %v1245
        %v1690 = vpack.c.b16 %v1258, %v1246
        %v1691 = vpack.c.b16 %v1259, %v1247
        %v1692 = vpack.c.b16 %v1272, %v1260
        %v1693 = vpack.c.b16 %v1273, %v1261
        %v1694 = vpack.c.b16 %v1274, %v1262
        %v1695 = vpack.c.b16 %v1275, %v1263
        %v1696 = vpack.c.b16 %v1276, %v1264
        %v1697 = vpack.c.b16 %v1277, %v1265
        %v1698 = vpack.c.b16 %v1278, %v1266
        %v1699 = vpack.c.b16 %v1279, %v1267
        %v1700 = vpack.c.b16 %v1280, %v1268
        %v1701 = vpack.c.b16 %v1281, %v1269
        %v1702 = vpack.c.b16 %v1282, %v1270
        %v1703 = vpack.c.b16 %v1283, %v1271
        %v1704 = vpack.c.b16 %v1296, %v1284
        %v1705 = vpack.c.b16 %v1297, %v1285
        %v1706 = vpack.c.b16 %v1298, %v1286
        %v1707 = vpack.c.b16 %v1299, %v1287
        %v1708 = vpack.c.b16 %v1300, %v1288
        %v1709 = vpack.c.b16 %v1301, %v1289
        %v1710 = vpack.c.b16 %v1302, %v1290
        %v1711 = vpack.c.b16 %v1303, %v1291
        %v1712 = vpack.c.b16 %v1304, %v1292
        %v1713 = vpack.c.b16 %v1305, %v1293
        %v1714 = vpack.c.b16 %v1306, %v1294
        %v1715 = vpack.c.b16 %v1307, %v1295
        %v1716 = vpack.c.b16 %v1320, %v1308
        %v1717 = vpack.c.b16 %v1321, %v1309
        %v1718 = vpack.c.b16 %v1322, %v1310
        %v1719 = vpack.c.b16 %v1323, %v1311
        %v1720 = vpack.c.b16 %v1324, %v1312
        %v1721 = vpack.c.b16 %v1325, %v1313
        %v1722 = vpack.c.b16 %v1326, %v1314
        %v1723 = vpack.c.b16 %v1327, %v1315
        %v1724 = vpack.c.b16 %v1328, %v1316
        %v1725 = vpack.c.b16 %v1329, %v1317
        %v1726 = vpack.c.b16 %v1330, %v1318
        %v1727 = vpack.c.b16 %v1331, %v1319
        %v1728 = vpack.c.b16 %v1344, %v1332
        %v1729 = vpack.c.b16 %v1345, %v1333
        %v1730 = vpack.c.b16 %v1346, %v1334
        %v1731 = vpack.c.b16 %v1347, %v1335
        %v1732 = vpack.c.b16 %v1348, %v1336
        %v1733 = vpack.c.b16 %v1349, %v1337
        %v1734 = vpack.c.b16 %v1350, %v1338
        %v1735 = vpack.c.b16 %v1351, %v1339
        %v1736 = vpack.c.b16 %v1352, %v1340
        %v1737 = vpack.c.b16 %v1353, %v1341
        %v1738 = vpack.c.b16 %v1354, %v1342
        %v1739 = vpack.c.b16 %v1355, %v1343
        %v1740 = vpack.c.b16 %v1368, %v1356
        %v1741 = vpack.c.b16 %v1369, %v1357
        %v1742 = vpack.c.b16 %v1370, %v1358
        %v1743 = vpack.c.b16 %v1371, %v1359
        %v1744 = vpack.c.b16 %v1372, %v1360
        %v1745 = vpack.c.b16 %v1373, %v1361
        %v1746 = vpack.c.b16 %v1374, %v1362
        %v1747 = vpack.c.b16 %v1375, %v1363
        %v1748 = vpack.c.b16 %v1376, %v1364
        %v1749 = vpack.c.b16 %v1377, %v1365
        %v1750 = vpack.c.b16 %v1378, %v1366
        %v1751 = vpack.c.b16 %v1379, %v1367
        %v1752 = vpack.c.b16 %v1392, %v1380
        %v1753 = vpack.c.b16 %v1393, %v1381
        %v1754 = vpack.c.b16 %v1394, %v1382
        %v1755 = vpack.c.b16 %v1395, %v1383
        %v1756 = vpack.c.b16 %v1396, %v1384
        %v1757 = vpack.c.b16 %v1397, %v1385
        %v1758 = vpack.c.b16 %v1398, %v1386
        %v1759 = vpack.c.b16 %v1399, %v1387
        %v1760 = vpack.c.b16 %v1400, %v1388
        %v1761 = vpack.c.b16 %v1401, %v1389
        %v1762 = vpack.c.b16 %v1402, %v1390
        %v1763 = vpack.c.b16 %v1403, %v1391
        %v1764 = vpack.c.b16 %v1416, %v1404
        %v1765 = vpack.c.b16 %v1417, %v1405
        %v1766 = vpack.c.b16 %v1418, %v1406
        %v1767 = vpack.c.b16 %v1419, %v1407
        %v1768 = vpack.c.b16 %v1420, %v1408
        %v1769 = vpack.c.b16 %v1421, %v1409
        %v1770 = vpack.c.b16 %v1422, %v1410
        %v1771 = vpack.c.b16 %v1423, %v1411
        %v1772 = vpack.c.b16 %v1424, %v1412
        %v1773 = vpack.c.b16 %v1425, %v1413
        %v1774 = vpack.c.b16 %v1426, %v1414
        %v1775 = vpack.c.b16 %v1427, %v1415
        %v1776 = vpack.c.b16 %v1440, %v1428
        %v1777 = vpack.c.b16 %v1441, %v1429
        %v1778 = vpack.c.b16 %v1442, %v1430
        %v1779 = vpack.c.b16 %v1443, %v1431
        %v1780 = vpack.c.b16 %v1444, %v1432
        %v1781 = vpack.c.b16 %v1445, %v1433
        %v1782 = vpack.c.b16 %v1446, %v1434
        %v1783 = vpack.c.b16 %v1447, %v1435
        %v1784 = vpack.c.b16 %v1448, %v1436
        %v1785 = vpack.c.b16 %v1449, %v1437
        %v1786 = vpack.c.b16 %v1450, %v1438
        %v1787 = vpack.c.b16 %v1451, %v1439
        %v1788 = vpack.c.b16 %v1464, %v1452
        %v1789 = vpack.c.b16 %v1465, %v1453
        %v1790 = vpack.c.b16 %v1466, %v1454
        %v1791 = vpack.c.b16 %v1467, %v1455
        %v1792 = vpack.c.b16 %v1468, %v1456
        %v1793 = vpack.c.b16 %v1469, %v1457
        %v1794 = vpack.c.b16 %v1470, %v1458
        %v1795 = vpack.c.b16 %v1471, %v1459
        %v1796 = vpack.c.b16 %v1472, %v1460
        %v1797 = vpack.c.b16 %v1473, %v1461
        %v1798 = vpack.c.b16 %v1474, %v1462
        %v1799 = vpack.c.b16 %v1475, %v1463
        %v1800 = vpack.c.b16 %v1488, %v1476
        %v1801 = vpack.c.b16 %v1489, %v1477
        %v1802 = vpack.c.b16 %v1490, %v1478
        %v1803 = vpack.c.b16 %v1491, %v1479
        %v1804 = vpack.c.b16 %v1492, %v1480
        %v1805 = vpack.c.b16 %v1493, %v1481
        %v1806 = vpack.c.b16 %v1494, %v1482
        %v1807 = vpack.c.b16 %v1495, %v1483
        %v1808 = vpack.c.b16 %v1496, %v1484
        %v1809 = vpack.c.b16 %v1497, %v1485
        %v1810 = vpack.c.b16 %v1498, %v1486
        %v1811 = vpack.c.b16 %v1499, %v1487
        %v1812 = vpack.c.b16 %v1512, %v1500
        %v1813 = vpack.c.b16 %v1513, %v1501
        %v1814 = vpack.c.b16 %v1514, %v1502
        %v1815 = vpack.c.b16 %v1515, %v1503
        %v1816 = vpack.c.b16 %v1516, %v1504
        %v1817 = vpack.c.b16 %v1517, %v1505
        %v1818 = vpack.c.b16 %v1518, %v1506
        %v1819 = vpack.c.b16 %v1519, %v1507
        %v1820 = vpack.c.b16 %v1520, %v1508
        %v1821 = vpack.c.b16 %v1521, %v1509
        %v1822 = vpack.c.b16 %v1522, %v1510
        %v1823 = vpack.c.b16 %v1523, %v1511
        %v1824 = vpack.c.b16 %v1536, %v1524
        %v1825 = vpack.c.b16 %v1537, %v1525
        %v1826 = vpack.c.b16 %v1538, %v1526
        %v1827 = vpack.c.b16 %v1539, %v1527
        %v1828 = vpack.c.b16 %v1540, %v1528
        %v1829 = vpack.c.b16 %v1541, %v1529
        %v1830 = vpack.c.b16 %v1542, %v1530
        %v1831 = vpack.c.b16 %v1543, %v1531
        %v1832 = vpack.c.b16 %v1544, %v1532
        %v1833 = vpack.c.b16 %v1545, %v1533
        %v1834 = vpack.c.b16 %v1546, %v1534
        %v1835 = vpack.c.b16 %v1547, %v1535
        %2124 = vmatprep.subr.bf16.mxu0 %v1633
        %2125 = vmatpush1.bf16.msra.mxu0 %v1632
        %2126 = vmatprep.subr.bf16.mxu0 %v1621
        %2127 = vmatpush1.bf16.msra.mxu0 %v1620
        %2128 = vmatprep.subr.bf16.mxu0 %v1609
        %2129 = vmatpush1.bf16.msra.mxu0 %v1608
        %2130 = vmatprep.subr.bf16.mxu0 %v1597
        %2131 = vmatpush1.bf16.msra.mxu0 %v1596
        %2132 = vmatprep.subr.bf16.mxu0 %v1585
        %2133 = vmatpush1.bf16.msra.mxu0 %v1584
        %2134 = vmatprep.subr.bf16.mxu0 %v1573
        %2135 = vmatpush1.bf16.msra.mxu0 %v1572
        %2136 = vmatprep.subr.bf16.mxu0 %v1561
        %2137 = vmatpush1.bf16.msra.mxu0 %v1560
        %2138 = vmatprep.subr.bf16.mxu0 %v1549
        %2139 = vmatpush1.bf16.msra.mxu0 %v1548
        %2140 = vmatprep.subr.bf16.mxu0 %v1729
        %2141 = vmatpush2.bf16.msra.mxu0 %v1728
        %2142 = vmatprep.subr.bf16.mxu0 %v1717
        %2143 = vmatpush2.bf16.msra.mxu0 %v1716
        %2144 = vmatprep.subr.bf16.mxu0 %v1705
        %2145 = vmatpush2.bf16.msra.mxu0 %v1704
        %2146 = vmatprep.subr.bf16.mxu0 %v1693
        %2147 = vmatpush2.bf16.msra.mxu0 %v1692
        %2148 = vmatprep.subr.bf16.mxu0 %v1681
        %2149 = vmatpush2.bf16.msra.mxu0 %v1680
        %2150 = vmatprep.subr.bf16.mxu0 %v1669
        %2151 = vmatpush2.bf16.msra.mxu0 %v1668
        %2152 = vmatprep.subr.bf16.mxu0 %v1657
        %2153 = vmatpush2.bf16.msra.mxu0 %v1656
        %2154 = vmatprep.subr.bf16.mxu0 %v1645
        %2155 = vmatpush2.bf16.msra.mxu0 %v1644
        %2156 = vmatprep.mubr.bf16.mxu0 %v679
        %2157 = vmatmul.mubr.bf16.gmra.mxu0 %v678
        %v2158 = vpop.f32.mrf.mxu0
        %v2159 = vadd.f32 %v616, %v2158
        %v2160 = vpop.f32.mrf.mxu0
        %v2161 = vadd.f32 %v620, %v2160
        %v2162 = vpop.f32.mrf.mxu0
        %v2163 = vpop.f32.mrf.mxu0
        %2164 = vdwg.mxu0
        %2165 = vmatprep.subr.bf16.mxu0 %v1825
        %2166 = vmatpush1.bf16.msra.mxu0 %v1824
        %2167 = vmatprep.subr.bf16.mxu0 %v1813
        %2168 = vmatpush1.bf16.msra.mxu0 %v1812
        %2169 = vmatprep.subr.bf16.mxu0 %v1801
        %2170 = vmatpush1.bf16.msra.mxu0 %v1800
        %2171 = vmatprep.subr.bf16.mxu0 %v1789
        %2172 = vmatpush1.bf16.msra.mxu0 %v1788
        %2173 = vmatprep.subr.bf16.mxu0 %v1777
        %2174 = vmatpush1.bf16.msra.mxu0 %v1776
        %2175 = vmatprep.subr.bf16.mxu0 %v1765
        %2176 = vmatpush1.bf16.msra.mxu0 %v1764
        %2177 = vmatprep.subr.bf16.mxu0 %v1753
        %2178 = vmatpush1.bf16.msra.mxu0 %v1752
        %2179 = vmatprep.subr.bf16.mxu0 %v1741
        %2180 = vmatpush1.bf16.msra.mxu0 %v1740
        %2181 = vmatprep.subr.bf16.mxu0 0
        %2182 = vmatpush2.bf16.msra.mxu0 0
        %2183 = vmatprep.subr.bf16.mxu0 0
        %2184 = vmatpush2.bf16.msra.mxu0 0
        %2185 = vmatprep.subr.bf16.mxu0 0
        %2186 = vmatpush2.bf16.msra.mxu0 0
        %2187 = vmatprep.subr.bf16.mxu0 0
        %2188 = vmatpush2.bf16.msra.mxu0 0
        %2189 = vmatprep.subr.bf16.mxu0 0
        %2190 = vmatpush2.bf16.msra.mxu0 0
        %2191 = vmatprep.subr.bf16.mxu0 0
        %2192 = vmatpush2.bf16.msra.mxu0 0
        %2193 = vmatprep.subr.bf16.mxu0 0
        %2194 = vmatpush2.bf16.msra.mxu0 0
        %2195 = vmatprep.subr.bf16.mxu0 0
        %2196 = vmatpush2.bf16.msra.mxu0 0
        %2197 = vmatprep.mubr.bf16.mxu0 0
        %2198 = vmatmul.mubr.bf16.gmra.mxu0 %v680
        %v2199 = vpop.f32.mrf.mxu0
        %v2200 = vadd.f32 %v2159, %v2199
        %v2201 = vpop.f32.mrf.mxu0
        %v2202 = vadd.f32 %v2161, %v2201
        %v2203 = vpop.f32.mrf.mxu0
        %v2204 = vpop.f32.mrf.mxu0
        %2205 = vdwg.mxu0
        %2206 = vmatprep.subr.bf16.mxu0 %v1635
        %2207 = vmatpush1.bf16.msra.mxu0 %v1634
        %2208 = vmatprep.subr.bf16.mxu0 %v1623
        %2209 = vmatpush1.bf16.msra.mxu0 %v1622
        %2210 = vmatprep.subr.bf16.mxu0 %v1611
        %2211 = vmatpush1.bf16.msra.mxu0 %v1610
        %2212 = vmatprep.subr.bf16.mxu0 %v1599
        %2213 = vmatpush1.bf16.msra.mxu0 %v1598
        %2214 = vmatprep.subr.bf16.mxu0 %v1587
        %2215 = vmatpush1.bf16.msra.mxu0 %v1586
        %2216 = vmatprep.subr.bf16.mxu0 %v1575
        %2217 = vmatpush1.bf16.msra.mxu0 %v1574
        %2218 = vmatprep.subr.bf16.mxu0 %v1563
        %2219 = vmatpush1.bf16.msra.mxu0 %v1562
        %2220 = vmatprep.subr.bf16.mxu0 %v1551
        %2221 = vmatpush1.bf16.msra.mxu0 %v1550
        %2222 = vmatprep.subr.bf16.mxu0 %v1731
        %2223 = vmatpush2.bf16.msra.mxu0 %v1730
        %2224 = vmatprep.subr.bf16.mxu0 %v1719
        %2225 = vmatpush2.bf16.msra.mxu0 %v1718
        %2226 = vmatprep.subr.bf16.mxu0 %v1707
        %2227 = vmatpush2.bf16.msra.mxu0 %v1706
        %2228 = vmatprep.subr.bf16.mxu0 %v1695
        %2229 = vmatpush2.bf16.msra.mxu0 %v1694
        %2230 = vmatprep.subr.bf16.mxu0 %v1683
        %2231 = vmatpush2.bf16.msra.mxu0 %v1682
        %2232 = vmatprep.subr.bf16.mxu0 %v1671
        %2233 = vmatpush2.bf16.msra.mxu0 %v1670
        %2234 = vmatprep.subr.bf16.mxu0 %v1659
        %2235 = vmatpush2.bf16.msra.mxu0 %v1658
        %2236 = vmatprep.subr.bf16.mxu0 %v1647
        %2237 = vmatpush2.bf16.msra.mxu0 %v1646
        %2238 = vmatprep.mubr.bf16.mxu0 %v679
        %2239 = vmatmul.mubr.bf16.gmra.mxu0 %v678
        %v2240 = vpop.f32.mrf.mxu0
        %v2241 = vadd.f32 %v624, %v2240
        %v2242 = vpop.f32.mrf.mxu0
        %v2243 = vadd.f32 %v628, %v2242
        %v2244 = vpop.f32.mrf.mxu0
        %v2245 = vpop.f32.mrf.mxu0
        %2246 = vdwg.mxu0
        %2247 = vmatprep.subr.bf16.mxu0 %v1827
        %2248 = vmatpush1.bf16.msra.mxu0 %v1826
        %2249 = vmatprep.subr.bf16.mxu0 %v1815
        %2250 = vmatpush1.bf16.msra.mxu0 %v1814
        %2251 = vmatprep.subr.bf16.mxu0 %v1803
        %2252 = vmatpush1.bf16.msra.mxu0 %v1802
        %2253 = vmatprep.subr.bf16.mxu0 %v1791
        %2254 = vmatpush1.bf16.msra.mxu0 %v1790
        %2255 = vmatprep.subr.bf16.mxu0 %v1779
        %2256 = vmatpush1.bf16.msra.mxu0 %v1778
        %2257 = vmatprep.subr.bf16.mxu0 %v1767
        %2258 = vmatpush1.bf16.msra.mxu0 %v1766
        %2259 = vmatprep.subr.bf16.mxu0 %v1755
        %2260 = vmatpush1.bf16.msra.mxu0 %v1754
        %2261 = vmatprep.subr.bf16.mxu0 %v1743
        %2262 = vmatpush1.bf16.msra.mxu0 %v1742
        %2263 = vmatprep.subr.bf16.mxu0 0
        %2264 = vmatpush2.bf16.msra.mxu0 0
        %2265 = vmatprep.subr.bf16.mxu0 0
        %2266 = vmatpush2.bf16.msra.mxu0 0
        %2267 = vmatprep.subr.bf16.mxu0 0
        %2268 = vmatpush2.bf16.msra.mxu0 0
        %2269 = vmatprep.subr.bf16.mxu0 0
        %2270 = vmatpush2.bf16.msra.mxu0 0
        %2271 = vmatprep.subr.bf16.mxu0 0
        %2272 = vmatpush2.bf16.msra.mxu0 0
        %2273 = vmatprep.subr.bf16.mxu0 0
        %2274 = vmatpush2.bf16.msra.mxu0 0
        %2275 = vmatprep.subr.bf16.mxu0 0
        %2276 = vmatpush2.bf16.msra.mxu0 0
        %2277 = vmatprep.subr.bf16.mxu0 0
        %2278 = vmatpush2.bf16.msra.mxu0 0
        %2279 = vmatprep.mubr.bf16.mxu0 0
        %2280 = vmatmul.mubr.bf16.gmra.mxu0 %v680
        %v2281 = vpop.f32.mrf.mxu0
        %v2282 = vadd.f32 %v2241, %v2281
        %v2283 = vpop.f32.mrf.mxu0
        %v2284 = vadd.f32 %v2243, %v2283
        %v2285 = vpop.f32.mrf.mxu0
        %v2286 = vpop.f32.mrf.mxu0
        %2287 = vdwg.mxu0
        %2288 = vmatprep.subr.bf16.mxu0 %v1637
        %2289 = vmatpush1.bf16.msra.mxu0 %v1636
        %2290 = vmatprep.subr.bf16.mxu0 %v1625
        %2291 = vmatpush1.bf16.msra.mxu0 %v1624
        %2292 = vmatprep.subr.bf16.mxu0 %v1613
        %2293 = vmatpush1.bf16.msra.mxu0 %v1612
        %2294 = vmatprep.subr.bf16.mxu0 %v1601
        %2295 = vmatpush1.bf16.msra.mxu0 %v1600
        %2296 = vmatprep.subr.bf16.mxu0 %v1589
        %2297 = vmatpush1.bf16.msra.mxu0 %v1588
        %2298 = vmatprep.subr.bf16.mxu0 %v1577
        %2299 = vmatpush1.bf16.msra.mxu0 %v1576
        %2300 = vmatprep.subr.bf16.mxu0 %v1565
        %2301 = vmatpush1.bf16.msra.mxu0 %v1564
        %2302 = vmatprep.subr.bf16.mxu0 %v1553
        %2303 = vmatpush1.bf16.msra.mxu0 %v1552
        %2304 = vmatprep.subr.bf16.mxu0 %v1733
        %2305 = vmatpush2.bf16.msra.mxu0 %v1732
        %2306 = vmatprep.subr.bf16.mxu0 %v1721
        %2307 = vmatpush2.bf16.msra.mxu0 %v1720
        %2308 = vmatprep.subr.bf16.mxu0 %v1709
        %2309 = vmatpush2.bf16.msra.mxu0 %v1708
        %2310 = vmatprep.subr.bf16.mxu0 %v1697
        %2311 = vmatpush2.bf16.msra.mxu0 %v1696
        %2312 = vmatprep.subr.bf16.mxu0 %v1685
        %2313 = vmatpush2.bf16.msra.mxu0 %v1684
        %2314 = vmatprep.subr.bf16.mxu0 %v1673
        %2315 = vmatpush2.bf16.msra.mxu0 %v1672
        %2316 = vmatprep.subr.bf16.mxu0 %v1661
        %2317 = vmatpush2.bf16.msra.mxu0 %v1660
        %2318 = vmatprep.subr.bf16.mxu0 %v1649
        %2319 = vmatpush2.bf16.msra.mxu0 %v1648
        %2320 = vmatprep.mubr.bf16.mxu0 %v679
        %2321 = vmatmul.mubr.bf16.gmra.mxu0 %v678
        %v2322 = vpop.f32.mrf.mxu0
        %v2323 = vadd.f32 %v632, %v2322
        %v2324 = vpop.f32.mrf.mxu0
        %v2325 = vadd.f32 %v636, %v2324
        %v2326 = vpop.f32.mrf.mxu0
        %v2327 = vpop.f32.mrf.mxu0
        %2328 = vdwg.mxu0
        %2329 = vmatprep.subr.bf16.mxu0 %v1829
        %2330 = vmatpush1.bf16.msra.mxu0 %v1828
        %2331 = vmatprep.subr.bf16.mxu0 %v1817
        %2332 = vmatpush1.bf16.msra.mxu0 %v1816
        %2333 = vmatprep.subr.bf16.mxu0 %v1805
        %2334 = vmatpush1.bf16.msra.mxu0 %v1804
        %2335 = vmatprep.subr.bf16.mxu0 %v1793
        %2336 = vmatpush1.bf16.msra.mxu0 %v1792
        %2337 = vmatprep.subr.bf16.mxu0 %v1781
        %2338 = vmatpush1.bf16.msra.mxu0 %v1780
        %2339 = vmatprep.subr.bf16.mxu0 %v1769
        %2340 = vmatpush1.bf16.msra.mxu0 %v1768
        %2341 = vmatprep.subr.bf16.mxu0 %v1757
        %2342 = vmatpush1.bf16.msra.mxu0 %v1756
        %2343 = vmatprep.subr.bf16.mxu0 %v1745
        %2344 = vmatpush1.bf16.msra.mxu0 %v1744
        %2345 = vmatprep.subr.bf16.mxu0 0
        %2346 = vmatpush2.bf16.msra.mxu0 0
        %2347 = vmatprep.subr.bf16.mxu0 0
        %2348 = vmatpush2.bf16.msra.mxu0 0
        %2349 = vmatprep.subr.bf16.mxu0 0
        %2350 = vmatpush2.bf16.msra.mxu0 0
        %2351 = vmatprep.subr.bf16.mxu0 0
        %2352 = vmatpush2.bf16.msra.mxu0 0
        %2353 = vmatprep.subr.bf16.mxu0 0
        %2354 = vmatpush2.bf16.msra.mxu0 0
        %2355 = vmatprep.subr.bf16.mxu0 0
        %2356 = vmatpush2.bf16.msra.mxu0 0
        %2357 = vmatprep.subr.bf16.mxu0 0
        %2358 = vmatpush2.bf16.msra.mxu0 0
        %2359 = vmatprep.subr.bf16.mxu0 0
        %2360 = vmatpush2.bf16.msra.mxu0 0
        %2361 = vmatprep.mubr.bf16.mxu0 0
        %2362 = vmatmul.mubr.bf16.gmra.mxu0 %v680
        %v2363 = vpop.f32.mrf.mxu0
        %v2364 = vadd.f32 %v2323, %v2363
        %v2365 = vpop.f32.mrf.mxu0
        %v2366 = vadd.f32 %v2325, %v2365
        %v2367 = vpop.f32.mrf.mxu0
        %v2368 = vpop.f32.mrf.mxu0
        %2369 = vdwg.mxu0
        %2370 = vmatprep.subr.bf16.mxu0 %v1639
        %2371 = vmatpush1.bf16.msra.mxu0 %v1638
        %2372 = vmatprep.subr.bf16.mxu0 %v1627
        %2373 = vmatpush1.bf16.msra.mxu0 %v1626
        %2374 = vmatprep.subr.bf16.mxu0 %v1615
        %2375 = vmatpush1.bf16.msra.mxu0 %v1614
        %2376 = vmatprep.subr.bf16.mxu0 %v1603
        %2377 = vmatpush1.bf16.msra.mxu0 %v1602
        %2378 = vmatprep.subr.bf16.mxu0 %v1591
        %2379 = vmatpush1.bf16.msra.mxu0 %v1590
        %2380 = vmatprep.subr.bf16.mxu0 %v1579
        %2381 = vmatpush1.bf16.msra.mxu0 %v1578
        %2382 = vmatprep.subr.bf16.mxu0 %v1567
        %2383 = vmatpush1.bf16.msra.mxu0 %v1566
        %2384 = vmatprep.subr.bf16.mxu0 %v1555
        %2385 = vmatpush1.bf16.msra.mxu0 %v1554
        %2386 = vmatprep.subr.bf16.mxu0 %v1735
        %2387 = vmatpush2.bf16.msra.mxu0 %v1734
        %2388 = vmatprep.subr.bf16.mxu0 %v1723
        %2389 = vmatpush2.bf16.msra.mxu0 %v1722
        %2390 = vmatprep.subr.bf16.mxu0 %v1711
        %2391 = vmatpush2.bf16.msra.mxu0 %v1710
        %2392 = vmatprep.subr.bf16.mxu0 %v1699
        %2393 = vmatpush2.bf16.msra.mxu0 %v1698
        %2394 = vmatprep.subr.bf16.mxu0 %v1687
        %2395 = vmatpush2.bf16.msra.mxu0 %v1686
        %2396 = vmatprep.subr.bf16.mxu0 %v1675
        %2397 = vmatpush2.bf16.msra.mxu0 %v1674
        %2398 = vmatprep.subr.bf16.mxu0 %v1663
        %2399 = vmatpush2.bf16.msra.mxu0 %v1662
        %2400 = vmatprep.subr.bf16.mxu0 %v1651
        %2401 = vmatpush2.bf16.msra.mxu0 %v1650
        %2402 = vmatprep.mubr.bf16.mxu0 %v679
        %2403 = vmatmul.mubr.bf16.gmra.mxu0 %v678
        %v2404 = vpop.f32.mrf.mxu0
        %v2405 = vadd.f32 %v640, %v2404
        %v2406 = vpop.f32.mrf.mxu0
        %v2407 = vadd.f32 %v644, %v2406
        %v2408 = vpop.f32.mrf.mxu0
        %v2409 = vpop.f32.mrf.mxu0
        %2410 = vdwg.mxu0
        %2411 = vmatprep.subr.bf16.mxu0 %v1831
        %2412 = vmatpush1.bf16.msra.mxu0 %v1830
        %2413 = vmatprep.subr.bf16.mxu0 %v1819
        %2414 = vmatpush1.bf16.msra.mxu0 %v1818
        %2415 = vmatprep.subr.bf16.mxu0 %v1807
        %2416 = vmatpush1.bf16.msra.mxu0 %v1806
        %2417 = vmatprep.subr.bf16.mxu0 %v1795
        %2418 = vmatpush1.bf16.msra.mxu0 %v1794
        %2419 = vmatprep.subr.bf16.mxu0 %v1783
        %2420 = vmatpush1.bf16.msra.mxu0 %v1782
        %2421 = vmatprep.subr.bf16.mxu0 %v1771
        %2422 = vmatpush1.bf16.msra.mxu0 %v1770
        %2423 = vmatprep.subr.bf16.mxu0 %v1759
        %2424 = vmatpush1.bf16.msra.mxu0 %v1758
        %2425 = vmatprep.subr.bf16.mxu0 %v1747
        %2426 = vmatpush1.bf16.msra.mxu0 %v1746
        %2427 = vmatprep.subr.bf16.mxu0 0
        %2428 = vmatpush2.bf16.msra.mxu0 0
        %2429 = vmatprep.subr.bf16.mxu0 0
        %2430 = vmatpush2.bf16.msra.mxu0 0
        %2431 = vmatprep.subr.bf16.mxu0 0
        %2432 = vmatpush2.bf16.msra.mxu0 0
        %2433 = vmatprep.subr.bf16.mxu0 0
        %2434 = vmatpush2.bf16.msra.mxu0 0
        %2435 = vmatprep.subr.bf16.mxu0 0
        %2436 = vmatpush2.bf16.msra.mxu0 0
        %2437 = vmatprep.subr.bf16.mxu0 0
        %2438 = vmatpush2.bf16.msra.mxu0 0
        %2439 = vmatprep.subr.bf16.mxu0 0
        %2440 = vmatpush2.bf16.msra.mxu0 0
        %2441 = vmatprep.subr.bf16.mxu0 0
        %2442 = vmatpush2.bf16.msra.mxu0 0
        %2443 = vmatprep.mubr.bf16.mxu0 0
        %2444 = vmatmul.mubr.bf16.gmra.mxu0 %v680
        %v2445 = vpop.f32.mrf.mxu0
        %v2446 = vadd.f32 %v2405, %v2445
        %v2447 = vpop.f32.mrf.mxu0
        %v2448 = vadd.f32 %v2407, %v2447
        %v2449 = vpop.f32.mrf.mxu0
        %v2450 = vpop.f32.mrf.mxu0
        %2451 = vdwg.mxu0
        %2452 = vmatprep.subr.bf16.mxu0 %v1641
        %2453 = vmatpush1.bf16.msra.mxu0 %v1640
        %2454 = vmatprep.subr.bf16.mxu0 %v1629
        %2455 = vmatpush1.bf16.msra.mxu0 %v1628
        %2456 = vmatprep.subr.bf16.mxu0 %v1617
        %2457 = vmatpush1.bf16.msra.mxu0 %v1616
        %2458 = vmatprep.subr.bf16.mxu0 %v1605
        %2459 = vmatpush1.bf16.msra.mxu0 %v1604
        %2460 = vmatprep.subr.bf16.mxu0 %v1593
        %2461 = vmatpush1.bf16.msra.mxu0 %v1592
        %2462 = vmatprep.subr.bf16.mxu0 %v1581
        %2463 = vmatpush1.bf16.msra.mxu0 %v1580
        %2464 = vmatprep.subr.bf16.mxu0 %v1569
        %2465 = vmatpush1.bf16.msra.mxu0 %v1568
        %2466 = vmatprep.subr.bf16.mxu0 %v1557
        %2467 = vmatpush1.bf16.msra.mxu0 %v1556
        %2468 = vmatprep.subr.bf16.mxu0 %v1737
        %2469 = vmatpush2.bf16.msra.mxu0 %v1736
        %2470 = vmatprep.subr.bf16.mxu0 %v1725
        %2471 = vmatpush2.bf16.msra.mxu0 %v1724
        %2472 = vmatprep.subr.bf16.mxu0 %v1713
        %2473 = vmatpush2.bf16.msra.mxu0 %v1712
        %2474 = vmatprep.subr.bf16.mxu0 %v1701
        %2475 = vmatpush2.bf16.msra.mxu0 %v1700
        %2476 = vmatprep.subr.bf16.mxu0 %v1689
        %2477 = vmatpush2.bf16.msra.mxu0 %v1688
        %2478 = vmatprep.subr.bf16.mxu0 %v1677
        %2479 = vmatpush2.bf16.msra.mxu0 %v1676
        %2480 = vmatprep.subr.bf16.mxu0 %v1665
        %2481 = vmatpush2.bf16.msra.mxu0 %v1664
        %2482 = vmatprep.subr.bf16.mxu0 %v1653
        %2483 = vmatpush2.bf16.msra.mxu0 %v1652
        %2484 = vmatprep.mubr.bf16.mxu0 %v679
        %2485 = vmatmul.mubr.bf16.gmra.mxu0 %v678
        %v2486 = vpop.f32.mrf.mxu0
        %v2487 = vadd.f32 %v648, %v2486
        %v2488 = vpop.f32.mrf.mxu0
        %v2489 = vadd.f32 %v652, %v2488
        %v2490 = vpop.f32.mrf.mxu0
        %v2491 = vpop.f32.mrf.mxu0
        %2492 = vdwg.mxu0
        %2493 = vmatprep.subr.bf16.mxu0 %v1833
        %2494 = vmatpush1.bf16.msra.mxu0 %v1832
        %2495 = vmatprep.subr.bf16.mxu0 %v1821
        %2496 = vmatpush1.bf16.msra.mxu0 %v1820
        %2497 = vmatprep.subr.bf16.mxu0 %v1809
        %2498 = vmatpush1.bf16.msra.mxu0 %v1808
        %2499 = vmatprep.subr.bf16.mxu0 %v1797
        %2500 = vmatpush1.bf16.msra.mxu0 %v1796
        %2501 = vmatprep.subr.bf16.mxu0 %v1785
        %2502 = vmatpush1.bf16.msra.mxu0 %v1784
        %2503 = vmatprep.subr.bf16.mxu0 %v1773
        %2504 = vmatpush1.bf16.msra.mxu0 %v1772
        %2505 = vmatprep.subr.bf16.mxu0 %v1761
        %2506 = vmatpush1.bf16.msra.mxu0 %v1760
        %2507 = vmatprep.subr.bf16.mxu0 %v1749
        %2508 = vmatpush1.bf16.msra.mxu0 %v1748
        %2509 = vmatprep.subr.bf16.mxu0 0
        %2510 = vmatpush2.bf16.msra.mxu0 0
        %2511 = vmatprep.subr.bf16.mxu0 0
        %2512 = vmatpush2.bf16.msra.mxu0 0
        %2513 = vmatprep.subr.bf16.mxu0 0
        %2514 = vmatpush2.bf16.msra.mxu0 0
        %2515 = vmatprep.subr.bf16.mxu0 0
        %2516 = vmatpush2.bf16.msra.mxu0 0
        %2517 = vmatprep.subr.bf16.mxu0 0
        %2518 = vmatpush2.bf16.msra.mxu0 0
        %2519 = vmatprep.subr.bf16.mxu0 0
        %2520 = vmatpush2.bf16.msra.mxu0 0
        %2521 = vmatprep.subr.bf16.mxu0 0
        %2522 = vmatpush2.bf16.msra.mxu0 0
        %2523 = vmatprep.subr.bf16.mxu0 0
        %2524 = vmatpush2.bf16.msra.mxu0 0
        %2525 = vmatprep.mubr.bf16.mxu0 0
        %2526 = vmatmul.mubr.bf16.gmra.mxu0 %v680
        %v2527 = vpop.f32.mrf.mxu0
        %v2528 = vadd.f32 %v2487, %v2527
        %v2529 = vpop.f32.mrf.mxu0
        %v2530 = vadd.f32 %v2489, %v2529
        %v2531 = vpop.f32.mrf.mxu0
        %v2532 = vpop.f32.mrf.mxu0
        %2533 = vdwg.mxu0
        %2534 = vmatprep.subr.bf16.mxu0 %v1643
        %2535 = vmatpush1.bf16.msra.mxu0 %v1642
        %2536 = vmatprep.subr.bf16.mxu0 %v1631
        %2537 = vmatpush1.bf16.msra.mxu0 %v1630
        %2538 = vmatprep.subr.bf16.mxu0 %v1619
        %2539 = vmatpush1.bf16.msra.mxu0 %v1618
        %2540 = vmatprep.subr.bf16.mxu0 %v1607
        %2541 = vmatpush1.bf16.msra.mxu0 %v1606
        %2542 = vmatprep.subr.bf16.mxu0 %v1595
        %2543 = vmatpush1.bf16.msra.mxu0 %v1594
        %2544 = vmatprep.subr.bf16.mxu0 %v1583
        %2545 = vmatpush1.bf16.msra.mxu0 %v1582
        %2546 = vmatprep.subr.bf16.mxu0 %v1571
        %2547 = vmatpush1.bf16.msra.mxu0 %v1570
        %2548 = vmatprep.subr.bf16.mxu0 %v1559
        %2549 = vmatpush1.bf16.msra.mxu0 %v1558
        %2550 = vmatprep.subr.bf16.mxu0 %v1739
        %2551 = vmatpush2.bf16.msra.mxu0 %v1738
        %2552 = vmatprep.subr.bf16.mxu0 %v1727
        %2553 = vmatpush2.bf16.msra.mxu0 %v1726
        %2554 = vmatprep.subr.bf16.mxu0 %v1715
        %2555 = vmatpush2.bf16.msra.mxu0 %v1714
        %2556 = vmatprep.subr.bf16.mxu0 %v1703
        %2557 = vmatpush2.bf16.msra.mxu0 %v1702
        %2558 = vmatprep.subr.bf16.mxu0 %v1691
        %2559 = vmatpush2.bf16.msra.mxu0 %v1690
        %2560 = vmatprep.subr.bf16.mxu0 %v1679
        %2561 = vmatpush2.bf16.msra.mxu0 %v1678
        %2562 = vmatprep.subr.bf16.mxu0 %v1667
        %2563 = vmatpush2.bf16.msra.mxu0 %v1666
        %2564 = vmatprep.subr.bf16.mxu0 %v1655
        %2565 = vmatpush2.bf16.msra.mxu0 %v1654
        %2566 = vmatprep.mubr.bf16.mxu0 %v679
        %2567 = vmatmul.mubr.bf16.gmra.mxu0 %v678
        %v2568 = vpop.f32.mrf.mxu0
        %v2569 = vadd.f32 %v656, %v2568
        %v2570 = vpop.f32.mrf.mxu0
        %v2571 = vadd.f32 %v660, %v2570
        %v2572 = vpop.f32.mrf.mxu0
        %v2573 = vpop.f32.mrf.mxu0
        %2574 = vdwg.mxu0
        %2575 = vmatprep.subr.bf16.mxu0 %v1835
        %2576 = vmatpush1.bf16.msra.mxu0 %v1834
        %2577 = vmatprep.subr.bf16.mxu0 %v1823
        %2578 = vmatpush1.bf16.msra.mxu0 %v1822
        %2579 = vmatprep.subr.bf16.mxu0 %v1811
        %2580 = vmatpush1.bf16.msra.mxu0 %v1810
        %2581 = vmatprep.subr.bf16.mxu0 %v1799
        %2582 = vmatpush1.bf16.msra.mxu0 %v1798
        %2583 = vmatprep.subr.bf16.mxu0 %v1787
        %2584 = vmatpush1.bf16.msra.mxu0 %v1786
        %2585 = vmatprep.subr.bf16.mxu0 %v1775
        %2586 = vmatpush1.bf16.msra.mxu0 %v1774
        %2587 = vmatprep.subr.bf16.mxu0 %v1763
        %2588 = vmatpush1.bf16.msra.mxu0 %v1762
        %2589 = vmatprep.subr.bf16.mxu0 %v1751
        %2590 = vmatpush1.bf16.msra.mxu0 %v1750
        %2591 = vmatprep.subr.bf16.mxu0 0
        %2592 = vmatpush2.bf16.msra.mxu0 0
        %2593 = vmatprep.subr.bf16.mxu0 0
        %2594 = vmatpush2.bf16.msra.mxu0 0
        %2595 = vmatprep.subr.bf16.mxu0 0
        %2596 = vmatpush2.bf16.msra.mxu0 0
        %2597 = vmatprep.subr.bf16.mxu0 0
        %2598 = vmatpush2.bf16.msra.mxu0 0
        %2599 = vmatprep.subr.bf16.mxu0 0
        %2600 = vmatpush2.bf16.msra.mxu0 0
        %2601 = vmatprep.subr.bf16.mxu0 0
        %2602 = vmatpush2.bf16.msra.mxu0 0
        %2603 = vmatprep.subr.bf16.mxu0 0
        %2604 = vmatpush2.bf16.msra.mxu0 0
        %2605 = vmatprep.subr.bf16.mxu0 0
        %2606 = vmatpush2.bf16.msra.mxu0 0
        %2607 = vmatprep.mubr.bf16.mxu0 0
        %2608 = vmatmul.mubr.bf16.gmra.mxu0 %v680
        %v2609 = vpop.f32.mrf.mxu0
        %v2610 = vadd.f32 %v2569, %v2609
        %v2611 = vpop.f32.mrf.mxu0
        %v2612 = vadd.f32 %v2571, %v2611
        %v2613 = vpop.f32.mrf.mxu0
        %v2614 = vpop.f32.mrf.mxu0
        %2615 = vdwg.mxu0
        %v2616 = vmax.f32 %v2200, 0.0
        %v2617 = vmax.f32 %v2202, 0.0
        %v2618 = vmax.f32 %v2282, 0.0
        %v2619 = vmax.f32 %v2284, 0.0
        %v2620 = vmax.f32 %v2364, 0.0
        %v2621 = vmax.f32 %v2366, 0.0
        %v2622 = vmax.f32 %v2446, 0.0
        %v2623 = vmax.f32 %v2448, 0.0
        %v2624 = vmax.f32 %v2528, 0.0
        %v2625 = vmax.f32 %v2530, 0.0
        %v2626 = vmax.f32 %v2610, 0.0
        %v2627 = vmax.f32 %v2612, 0.0
        %v2628 = vpack.c.bf16 %v2616, %v2616
        %v2629 = vpack.c.bf16 %v2617, %v2617
        %v2630 = vpack.c.bf16 %v2618, %v2618
        %v2631 = vpack.c.bf16 %v2619, %v2619
        %v2632 = vpack.c.bf16 %v2620, %v2620
        %v2633 = vpack.c.bf16 %v2621, %v2621
        %v2634 = vpack.c.bf16 %v2622, %v2622
        %v2635 = vpack.c.bf16 %v2623, %v2623
        %v2636 = vpack.c.bf16 %v2624, %v2624
        %v2637 = vpack.c.bf16 %v2625, %v2625
        %v2638 = vpack.c.bf16 %v2626, %v2626
        %v2639 = vpack.c.bf16 %v2627, %v2627
        %v2640 = vld [vmem:[#allocation7] sm:$0xff]
        %v2641 = vld [vmem:[#allocation7 + $0x8] sm:$0xf]
        %v2642 = vld [vmem:[#allocation7 + $0xc] sm:$0xff]
        %v2643 = vld [vmem:[#allocation7 + $0x14] sm:$0xf]
        %v2644 = vld [vmem:[#allocation7 + $0x18] sm:$0xff]
        %v2645 = vld [vmem:[#allocation7 + $0x20] sm:$0xf]
        %v2646 = vld [vmem:[#allocation7 + $0x24] sm:$0xff]
        %v2647 = vld [vmem:[#allocation7 + $0x2c] sm:$0xf]
        %v2648 = vld [vmem:[#allocation7 + $0x30] sm:$0xff]
        %v2649 = vld [vmem:[#allocation7 + $0x38] sm:$0xf]
        %v2650 = vld [vmem:[#allocation7 + $0x3c] sm:$0xff]
        %v2651 = vld [vmem:[#allocation7 + $0x44] sm:$0xf]
        %v2652 = vld [vmem:[#allocation7 + $0x48] sm:$0xff]
        %v2653 = vld [vmem:[#allocation7 + $0x50] sm:$0xf]
        %v2654 = vld [vmem:[#allocation7 + $0x54] sm:$0xff]
        %v2655 = vld [vmem:[#allocation7 + $0x5c] sm:$0xf]
        %v2656 = vld [vmem:[#allocation7 + $0x60] sm:$0xff]
        %v2657 = vld [vmem:[#allocation7 + $0x68] sm:$0xf]
        %v2658 = vld [vmem:[#allocation7 + $0x6c] sm:$0xff]
        %v2659 = vld [vmem:[#allocation7 + $0x74] sm:$0xf]
        %v2660 = vld [vmem:[#allocation7 + $0x78] sm:$0xff]
        %v2661 = vld [vmem:[#allocation7 + $0x80] sm:$0xf]
        %v2662 = vld [vmem:[#allocation7 + $0x84] sm:$0xff]
        %v2663 = vld [vmem:[#allocation7 + $0x8c] sm:$0xf]
        %v2664 = vld [vmem:[#allocation7 + $0x90] sm:$0xff]
        %v2665 = vld [vmem:[#allocation7 + $0x98] sm:$0xf]
        %v2666 = vld [vmem:[#allocation7 + $0x9c] sm:$0xff]
        %v2667 = vld [vmem:[#allocation7 + $0xa4] sm:$0xf]
        %v2668 = vld [vmem:[#allocation7 + $0xa8] sm:$0xff]
        %v2669 = vld [vmem:[#allocation7 + $0xb0] sm:$0xf]
        %v2670 = vld [vmem:[#allocation7 + $0xb4] sm:$0xff]
        %v2671 = vld [vmem:[#allocation7 + $0xbc] sm:$0xf]
        %v2672 = vld [vmem:[#allocation7 + $0xc0] sm:$0xff]
        %v2673 = vld [vmem:[#allocation7 + $0xc8] sm:$0xf]
        %v2674 = vld [vmem:[#allocation7 + $0xcc] sm:$0xff]
        %v2675 = vld [vmem:[#allocation7 + $0xd4] sm:$0xf]
        %v2676 = vld [vmem:[#allocation7 + $0xd8] sm:$0xff]
        %v2677 = vld [vmem:[#allocation7 + $0xe0] sm:$0xf]
        %v2678 = vld [vmem:[#allocation7 + $0xe4] sm:$0xff]
        %v2679 = vld [vmem:[#allocation7 + $0xec] sm:$0xf]
        %v2680 = vld [vmem:[#allocation7 + $0xf0] sm:$0xff]
        %v2681 = vld [vmem:[#allocation7 + $0xf8] sm:$0xf]
        %v2682 = vld [vmem:[#allocation7 + $0xfc] sm:$0xff]
        %v2683 = vld [vmem:[#allocation7 + $0x104] sm:$0xf]
        %v2684 = vld [vmem:[#allocation7 + $0x108] sm:$0xff]
        %v2685 = vld [vmem:[#allocation7 + $0x110] sm:$0xf]
        %v2686 = vld [vmem:[#allocation7 + $0x114] sm:$0xff]
        %v2687 = vld [vmem:[#allocation7 + $0x11c] sm:$0xf]
        %v2688 = vld [vmem:[#allocation7 + $0x120] sm:$0xff]
        %v2689 = vld [vmem:[#allocation7 + $0x128] sm:$0xf]
        %v2690 = vld [vmem:[#allocation7 + $0x12c] sm:$0xff]
        %v2691 = vld [vmem:[#allocation7 + $0x134] sm:$0xf]
        %v2692 = vld [vmem:[#allocation7 + $0x138] sm:$0xff]
        %v2693 = vld [vmem:[#allocation7 + $0x140] sm:$0xf]
        %v2694 = vld [vmem:[#allocation7 + $0x144] sm:$0xff]
        %v2695 = vld [vmem:[#allocation7 + $0x14c] sm:$0xf]
        %v2696 = vld [vmem:[#allocation7 + $0x150] sm:$0xff]
        %v2697 = vld [vmem:[#allocation7 + $0x158] sm:$0xf]
        %v2698 = vld [vmem:[#allocation7 + $0x15c] sm:$0xff]
        %v2699 = vld [vmem:[#allocation7 + $0x164] sm:$0xf]
        %v2700 = vld [vmem:[#allocation7 + $0x168] sm:$0xff]
        %v2701 = vld [vmem:[#allocation7 + $0x170] sm:$0xf]
        %v2702 = vld [vmem:[#allocation7 + $0x174] sm:$0xff]
        %v2703 = vld [vmem:[#allocation7 + $0x17c] sm:$0xf]
        %v2704 = vld [vmem:[#allocation7 + $0x180] sm:$0xff]
        %v2705 = vld [vmem:[#allocation7 + $0x188] sm:$0xf]
        %v2706 = vld [vmem:[#allocation7 + $0x18c] sm:$0xff]
        %v2707 = vld [vmem:[#allocation7 + $0x194] sm:$0xf]
        %v2708 = vld [vmem:[#allocation7 + $0x198] sm:$0xff]
        %v2709 = vld [vmem:[#allocation7 + $0x1a0] sm:$0xf]
        %v2710 = vld [vmem:[#allocation7 + $0x1a4] sm:$0xff]
        %v2711 = vld [vmem:[#allocation7 + $0x1ac] sm:$0xf]
        %v2712 = vld [vmem:[#allocation7 + $0x1b0] sm:$0xff]
        %v2713 = vld [vmem:[#allocation7 + $0x1b8] sm:$0xf]
        %v2714 = vld [vmem:[#allocation7 + $0x1bc] sm:$0xff]
        %v2715 = vld [vmem:[#allocation7 + $0x1c4] sm:$0xf]
        %v2716 = vld [vmem:[#allocation7 + $0x1c8] sm:$0xff]
        %v2717 = vld [vmem:[#allocation7 + $0x1d0] sm:$0xf]
        %v2718 = vld [vmem:[#allocation7 + $0x1d4] sm:$0xff]
        %v2719 = vld [vmem:[#allocation7 + $0x1dc] sm:$0xf]
        %v2720 = vld [vmem:[#allocation7 + $0x1e0] sm:$0xff]
        %v2721 = vld [vmem:[#allocation7 + $0x1e8] sm:$0xf]
        %v2722 = vld [vmem:[#allocation7 + $0x1ec] sm:$0xff]
        %v2723 = vld [vmem:[#allocation7 + $0x1f4] sm:$0xf]
        %v2724 = vld [vmem:[#allocation7 + $0x1f8] sm:$0xff]
        %v2725 = vld [vmem:[#allocation7 + $0x200] sm:$0xf]
        %v2726 = vld [vmem:[#allocation7 + $0x204] sm:$0xff]
        %v2727 = vld [vmem:[#allocation7 + $0x20c] sm:$0xf]
        %v2728 = vld [vmem:[#allocation7 + $0x210] sm:$0xff]
        %v2729 = vld [vmem:[#allocation7 + $0x218] sm:$0xf]
        %v2730 = vld [vmem:[#allocation7 + $0x21c] sm:$0xff]
        %v2731 = vld [vmem:[#allocation7 + $0x224] sm:$0xf]
        %v2732 = vld [vmem:[#allocation7 + $0x228] sm:$0xff]
        %v2733 = vld [vmem:[#allocation7 + $0x230] sm:$0xf]
        %v2734 = vld [vmem:[#allocation7 + $0x234] sm:$0xff]
        %v2735 = vld [vmem:[#allocation7 + $0x23c] sm:$0xf]
        %v2736 = vld [vmem:[#allocation7 + $0x240] sm:$0xff]
        %v2737 = vld [vmem:[#allocation7 + $0x248] sm:$0xf]
        %v2738 = vld [vmem:[#allocation7 + $0x24c] sm:$0xff]
        %v2739 = vld [vmem:[#allocation7 + $0x254] sm:$0xf]
        %v2740 = vld [vmem:[#allocation7 + $0x258] sm:$0xff]
        %v2741 = vld [vmem:[#allocation7 + $0x260] sm:$0xf]
        %v2742 = vld [vmem:[#allocation7 + $0x264] sm:$0xff]
        %v2743 = vld [vmem:[#allocation7 + $0x26c] sm:$0xf]
        %v2744 = vld [vmem:[#allocation7 + $0x270] sm:$0xff]
        %v2745 = vld [vmem:[#allocation7 + $0x278] sm:$0xf]
        %v2746 = vld [vmem:[#allocation7 + $0x27c] sm:$0xff]
        %v2747 = vld [vmem:[#allocation7 + $0x284] sm:$0xf]
        %v2748 = vld [vmem:[#allocation7 + $0x288] sm:$0xff]
        %v2749 = vld [vmem:[#allocation7 + $0x290] sm:$0xf]
        %v2750 = vld [vmem:[#allocation7 + $0x294] sm:$0xff]
        %v2751 = vld [vmem:[#allocation7 + $0x29c] sm:$0xf]
        %v2752 = vld [vmem:[#allocation7 + $0x2a0] sm:$0xff]
        %v2753 = vld [vmem:[#allocation7 + $0x2a8] sm:$0xf]
        %v2754 = vld [vmem:[#allocation7 + $0x2ac] sm:$0xff]
        %v2755 = vld [vmem:[#allocation7 + $0x2b4] sm:$0xf]
        %v2756 = vld [vmem:[#allocation7 + $0x2b8] sm:$0xff]
        %v2757 = vld [vmem:[#allocation7 + $0x2c0] sm:$0xf]
        %v2758 = vld [vmem:[#allocation7 + $0x2c4] sm:$0xff]
        %v2759 = vld [vmem:[#allocation7 + $0x2cc] sm:$0xf]
        %v2760 = vld [vmem:[#allocation7 + $0x2d0] sm:$0xff]
        %v2761 = vld [vmem:[#allocation7 + $0x2d8] sm:$0xf]
        %v2762 = vld [vmem:[#allocation7 + $0x2dc] sm:$0xff]
        %v2763 = vld [vmem:[#allocation7 + $0x2e4] sm:$0xf]
        %v2764 = vld [vmem:[#allocation7 + $0x2e8] sm:$0xff]
        %v2765 = vld [vmem:[#allocation7 + $0x2f0] sm:$0xf]
        %v2766 = vld [vmem:[#allocation7 + $0x2f4] sm:$0xff]
        %v2767 = vld [vmem:[#allocation7 + $0x2fc] sm:$0xf]
        %v2768 = vld [vmem:[#allocation7 + $0x300] sm:$0xff]
        %v2769 = vld [vmem:[#allocation7 + $0x308] sm:$0xf]
        %v2770 = vld [vmem:[#allocation7 + $0x30c] sm:$0xff]
        %v2771 = vld [vmem:[#allocation7 + $0x314] sm:$0xf]
        %v2772 = vld [vmem:[#allocation7 + $0x318] sm:$0xff]
        %v2773 = vld [vmem:[#allocation7 + $0x320] sm:$0xf]
        %v2774 = vld [vmem:[#allocation7 + $0x324] sm:$0xff]
        %v2775 = vld [vmem:[#allocation7 + $0x32c] sm:$0xf]
        %v2776 = vld [vmem:[#allocation7 + $0x330] sm:$0xff]
        %v2777 = vld [vmem:[#allocation7 + $0x338] sm:$0xf]
        %v2778 = vld [vmem:[#allocation7 + $0x33c] sm:$0xff]
        %v2779 = vld [vmem:[#allocation7 + $0x344] sm:$0xf]
        %v2780 = vld [vmem:[#allocation7 + $0x348] sm:$0xff]
        %v2781 = vld [vmem:[#allocation7 + $0x350] sm:$0xf]
        %v2782 = vld [vmem:[#allocation7 + $0x354] sm:$0xff]
        %v2783 = vld [vmem:[#allocation7 + $0x35c] sm:$0xf]
        %v2784 = vld [vmem:[#allocation7 + $0x360] sm:$0xff]
        %v2785 = vld [vmem:[#allocation7 + $0x368] sm:$0xf]
        %v2786 = vld [vmem:[#allocation7 + $0x36c] sm:$0xff]
        %v2787 = vld [vmem:[#allocation7 + $0x374] sm:$0xf]
        %v2788 = vld [vmem:[#allocation7 + $0x378] sm:$0xff]
        %v2789 = vld [vmem:[#allocation7 + $0x380] sm:$0xf]
        %v2790 = vld [vmem:[#allocation7 + $0x384] sm:$0xff]
        %v2791 = vld [vmem:[#allocation7 + $0x38c] sm:$0xf]
        %v2792 = vld [vmem:[#allocation7 + $0x390] sm:$0xff]
        %v2793 = vld [vmem:[#allocation7 + $0x398] sm:$0xf]
        %v2794 = vld [vmem:[#allocation7 + $0x39c] sm:$0xff]
        %v2795 = vld [vmem:[#allocation7 + $0x3a4] sm:$0xf]
        %v2796 = vld [vmem:[#allocation7 + $0x3a8] sm:$0xff]
        %v2797 = vld [vmem:[#allocation7 + $0x3b0] sm:$0xf]
        %v2798 = vld [vmem:[#allocation7 + $0x3b4] sm:$0xff]
        %v2799 = vld [vmem:[#allocation7 + $0x3bc] sm:$0xf]
        %v2800 = vld [vmem:[#allocation7 + $0x3c0] sm:$0xff]
        %v2801 = vld [vmem:[#allocation7 + $0x3c8] sm:$0xf]
        %v2802 = vld [vmem:[#allocation7 + $0x3cc] sm:$0xff]
        %v2803 = vld [vmem:[#allocation7 + $0x3d4] sm:$0xf]
        %v2804 = vld [vmem:[#allocation7 + $0x3d8] sm:$0xff]
        %v2805 = vld [vmem:[#allocation7 + $0x3e0] sm:$0xf]
        %v2806 = vld [vmem:[#allocation7 + $0x3e4] sm:$0xff]
        %v2807 = vld [vmem:[#allocation7 + $0x3ec] sm:$0xf]
        %v2808 = vld [vmem:[#allocation7 + $0x3f0] sm:$0xff]
        %v2809 = vld [vmem:[#allocation7 + $0x3f8] sm:$0xf]
        %v2810 = vld [vmem:[#allocation7 + $0x3fc] sm:$0xff]
        %v2811 = vld [vmem:[#allocation7 + $0x404] sm:$0xf]
        %v2812 = vld [vmem:[#allocation7 + $0x408] sm:$0xff]
        %v2813 = vld [vmem:[#allocation7 + $0x410] sm:$0xf]
        %v2814 = vld [vmem:[#allocation7 + $0x414] sm:$0xff]
        %v2815 = vld [vmem:[#allocation7 + $0x41c] sm:$0xf]
        %v2816 = vld [vmem:[#allocation7 + $0x420] sm:$0xff]
        %v2817 = vld [vmem:[#allocation7 + $0x428] sm:$0xf]
        %v2818 = vld [vmem:[#allocation7 + $0x42c] sm:$0xff]
        %v2819 = vld [vmem:[#allocation7 + $0x434] sm:$0xf]
        %v2820 = vld [vmem:[#allocation7 + $0x438] sm:$0xff]
        %v2821 = vld [vmem:[#allocation7 + $0x440] sm:$0xf]
        %v2822 = vld [vmem:[#allocation7 + $0x444] sm:$0xff]
        %v2823 = vld [vmem:[#allocation7 + $0x44c] sm:$0xf]
        %v2824 = vld [vmem:[#allocation7 + $0x450] sm:$0xff]
        %v2825 = vld [vmem:[#allocation7 + $0x458] sm:$0xf]
        %v2826 = vld [vmem:[#allocation7 + $0x45c] sm:$0xff]
        %v2827 = vld [vmem:[#allocation7 + $0x464] sm:$0xf]
        %v2828 = vld [vmem:[#allocation7 + $0x468] sm:$0xff]
        %v2829 = vld [vmem:[#allocation7 + $0x470] sm:$0xf]
        %v2830 = vld [vmem:[#allocation7 + $0x474] sm:$0xff]
        %v2831 = vld [vmem:[#allocation7 + $0x47c] sm:$0xf]
        %v2832 = vld [vmem:[#allocation7 + $0x480] sm:$0xff]
        %v2833 = vld [vmem:[#allocation7 + $0x488] sm:$0xf]
        %v2834 = vld [vmem:[#allocation7 + $0x48c] sm:$0xff]
        %v2835 = vld [vmem:[#allocation7 + $0x494] sm:$0xf]
        %v2836 = vld [vmem:[#allocation7 + $0x498] sm:$0xff]
        %v2837 = vld [vmem:[#allocation7 + $0x4a0] sm:$0xf]
        %v2838 = vld [vmem:[#allocation7 + $0x4a4] sm:$0xff]
        %v2839 = vld [vmem:[#allocation7 + $0x4ac] sm:$0xf]
        %v2840 = vld [vmem:[#allocation7 + $0x4b0] sm:$0xff]
        %v2841 = vld [vmem:[#allocation7 + $0x4b8] sm:$0xf]
        %v2842 = vld [vmem:[#allocation7 + $0x4bc] sm:$0xff]
        %v2843 = vld [vmem:[#allocation7 + $0x4c4] sm:$0xf]
        %v2844 = vld [vmem:[#allocation7 + $0x4c8] sm:$0xff]
        %v2845 = vld [vmem:[#allocation7 + $0x4d0] sm:$0xf]
        %v2846 = vld [vmem:[#allocation7 + $0x4d4] sm:$0xff]
        %v2847 = vld [vmem:[#allocation7 + $0x4dc] sm:$0xf]
        %v2848 = vld [vmem:[#allocation7 + $0x4e0] sm:$0xff]
        %v2849 = vld [vmem:[#allocation7 + $0x4e8] sm:$0xf]
        %v2850 = vld [vmem:[#allocation7 + $0x4ec] sm:$0xff]
        %v2851 = vld [vmem:[#allocation7 + $0x4f4] sm:$0xf]
        %v2852 = vld [vmem:[#allocation7 + $0x4f8] sm:$0xff]
        %v2853 = vld [vmem:[#allocation7 + $0x500] sm:$0xf]
        %v2854 = vld [vmem:[#allocation7 + $0x504] sm:$0xff]
        %v2855 = vld [vmem:[#allocation7 + $0x50c] sm:$0xf]
        %v2856 = vld [vmem:[#allocation7 + $0x510] sm:$0xff]
        %v2857 = vld [vmem:[#allocation7 + $0x518] sm:$0xf]
        %v2858 = vld [vmem:[#allocation7 + $0x51c] sm:$0xff]
        %v2859 = vld [vmem:[#allocation7 + $0x524] sm:$0xf]
        %v2860 = vld [vmem:[#allocation7 + $0x528] sm:$0xff]
        %v2861 = vld [vmem:[#allocation7 + $0x530] sm:$0xf]
        %v2862 = vld [vmem:[#allocation7 + $0x534] sm:$0xff]
        %v2863 = vld [vmem:[#allocation7 + $0x53c] sm:$0xf]
        %v2864 = vld [vmem:[#allocation7 + $0x540] sm:$0xff]
        %v2865 = vld [vmem:[#allocation7 + $0x548] sm:$0xf]
        %v2866 = vld [vmem:[#allocation7 + $0x54c] sm:$0xff]
        %v2867 = vld [vmem:[#allocation7 + $0x554] sm:$0xf]
        %v2868 = vld [vmem:[#allocation7 + $0x558] sm:$0xff]
        %v2869 = vld [vmem:[#allocation7 + $0x560] sm:$0xf]
        %v2870 = vld [vmem:[#allocation7 + $0x564] sm:$0xff]
        %v2871 = vld [vmem:[#allocation7 + $0x56c] sm:$0xf]
        %v2872 = vld [vmem:[#allocation7 + $0x570] sm:$0xff]
        %v2873 = vld [vmem:[#allocation7 + $0x578] sm:$0xf]
        %v2874 = vld [vmem:[#allocation7 + $0x57c] sm:$0xff]
        %v2875 = vld [vmem:[#allocation7 + $0x584] sm:$0xf]
        %v2876 = vld [vmem:[#allocation7 + $0x588] sm:$0xff]
        %v2877 = vld [vmem:[#allocation7 + $0x590] sm:$0xf]
        %v2878 = vld [vmem:[#allocation7 + $0x594] sm:$0xff]
        %v2879 = vld [vmem:[#allocation7 + $0x59c] sm:$0xf]
        %v2880 = vld [vmem:[#allocation7 + $0x5a0] sm:$0xff]
        %v2881 = vld [vmem:[#allocation7 + $0x5a8] sm:$0xf]
        %v2882 = vld [vmem:[#allocation7 + $0x5ac] sm:$0xff]
        %v2883 = vld [vmem:[#allocation7 + $0x5b4] sm:$0xf]
        %v2884 = vld [vmem:[#allocation7 + $0x5b8] sm:$0xff]
        %v2885 = vld [vmem:[#allocation7 + $0x5c0] sm:$0xf]
        %v2886 = vld [vmem:[#allocation7 + $0x5c4] sm:$0xff]
        %v2887 = vld [vmem:[#allocation7 + $0x5cc] sm:$0xf]
        %v2888 = vld [vmem:[#allocation7 + $0x5d0] sm:$0xff]
        %v2889 = vld [vmem:[#allocation7 + $0x5d8] sm:$0xf]
        %v2890 = vld [vmem:[#allocation7 + $0x5dc] sm:$0xff]
        %v2891 = vld [vmem:[#allocation7 + $0x5e4] sm:$0xf]
        %v2892 = vld [vmem:[#allocation7 + $0x5e8] sm:$0xff]
        %v2893 = vld [vmem:[#allocation7 + $0x5f0] sm:$0xf]
        %v2894 = vld [vmem:[#allocation7 + $0x5f4] sm:$0xff]
        %v2895 = vld [vmem:[#allocation7 + $0x5fc] sm:$0xf]
        %v2896 = vld [vmem:[#allocation7 + $0x600] sm:$0xff]
        %v2897 = vld [vmem:[#allocation7 + $0x608] sm:$0xf]
        %v2898 = vld [vmem:[#allocation7 + $0x60c] sm:$0xff]
        %v2899 = vld [vmem:[#allocation7 + $0x614] sm:$0xf]
        %v2900 = vld [vmem:[#allocation7 + $0x618] sm:$0xff]
        %v2901 = vld [vmem:[#allocation7 + $0x620] sm:$0xf]
        %v2902 = vld [vmem:[#allocation7 + $0x624] sm:$0xff]
        %v2903 = vld [vmem:[#allocation7 + $0x62c] sm:$0xf]
        %v2904 = vld [vmem:[#allocation7 + $0x630] sm:$0xff]
        %v2905 = vld [vmem:[#allocation7 + $0x638] sm:$0xf]
        %v2906 = vld [vmem:[#allocation7 + $0x63c] sm:$0xff]
        %v2907 = vld [vmem:[#allocation7 + $0x644] sm:$0xf]
        %v2908 = vld [vmem:[#allocation7 + $0x648] sm:$0xff]
        %v2909 = vld [vmem:[#allocation7 + $0x650] sm:$0xf]
        %v2910 = vld [vmem:[#allocation7 + $0x654] sm:$0xff]
        %v2911 = vld [vmem:[#allocation7 + $0x65c] sm:$0xf]
        %v2912 = vld [vmem:[#allocation7 + $0x660] sm:$0xff]
        %v2913 = vld [vmem:[#allocation7 + $0x668] sm:$0xf]
        %v2914 = vld [vmem:[#allocation7 + $0x66c] sm:$0xff]
        %v2915 = vld [vmem:[#allocation7 + $0x674] sm:$0xf]
        %v2916 = vld [vmem:[#allocation7 + $0x678] sm:$0xff]
        %v2917 = vld [vmem:[#allocation7 + $0x680] sm:$0xf]
        %v2918 = vld [vmem:[#allocation7 + $0x684] sm:$0xff]
        %v2919 = vld [vmem:[#allocation7 + $0x68c] sm:$0xf]
        %v2920 = vld [vmem:[#allocation7 + $0x690] sm:$0xff]
        %v2921 = vld [vmem:[#allocation7 + $0x698] sm:$0xf]
        %v2922 = vld [vmem:[#allocation7 + $0x69c] sm:$0xff]
        %v2923 = vld [vmem:[#allocation7 + $0x6a4] sm:$0xf]
        %v2924 = vld [vmem:[#allocation7 + $0x6a8] sm:$0xff]
        %v2925 = vld [vmem:[#allocation7 + $0x6b0] sm:$0xf]
        %v2926 = vld [vmem:[#allocation7 + $0x6b4] sm:$0xff]
        %v2927 = vld [vmem:[#allocation7 + $0x6bc] sm:$0xf]
        %v2928 = vld [vmem:[#allocation7 + $0x6c0] sm:$0xff]
        %v2929 = vld [vmem:[#allocation7 + $0x6c8] sm:$0xf]
        %v2930 = vld [vmem:[#allocation7 + $0x6cc] sm:$0xff]
        %v2931 = vld [vmem:[#allocation7 + $0x6d4] sm:$0xf]
        %v2932 = vld [vmem:[#allocation7 + $0x6d8] sm:$0xff]
        %v2933 = vld [vmem:[#allocation7 + $0x6e0] sm:$0xf]
        %v2934 = vld [vmem:[#allocation7 + $0x6e4] sm:$0xff]
        %v2935 = vld [vmem:[#allocation7 + $0x6ec] sm:$0xf]
        %v2936 = vld [vmem:[#allocation7 + $0x6f0] sm:$0xff]
        %v2937 = vld [vmem:[#allocation7 + $0x6f8] sm:$0xf]
        %v2938 = vld [vmem:[#allocation7 + $0x6fc] sm:$0xff]
        %v2939 = vld [vmem:[#allocation7 + $0x704] sm:$0xf]
        %v2940 = vld [vmem:[#allocation7 + $0x708] sm:$0xff]
        %v2941 = vld [vmem:[#allocation7 + $0x710] sm:$0xf]
        %v2942 = vld [vmem:[#allocation7 + $0x714] sm:$0xff]
        %v2943 = vld [vmem:[#allocation7 + $0x71c] sm:$0xf]
        %v2944 = vld [vmem:[#allocation7 + $0x720] sm:$0xff]
        %v2945 = vld [vmem:[#allocation7 + $0x728] sm:$0xf]
        %v2946 = vld [vmem:[#allocation7 + $0x72c] sm:$0xff]
        %v2947 = vld [vmem:[#allocation7 + $0x734] sm:$0xf]
        %v2948 = vld [vmem:[#allocation7 + $0x738] sm:$0xff]
        %v2949 = vld [vmem:[#allocation7 + $0x740] sm:$0xf]
        %v2950 = vld [vmem:[#allocation7 + $0x744] sm:$0xff]
        %v2951 = vld [vmem:[#allocation7 + $0x74c] sm:$0xf]
        %v2952 = vld [vmem:[#allocation7 + $0x750] sm:$0xff]
        %v2953 = vld [vmem:[#allocation7 + $0x758] sm:$0xf]
        %v2954 = vld [vmem:[#allocation7 + $0x75c] sm:$0xff]
        %v2955 = vld [vmem:[#allocation7 + $0x764] sm:$0xf]
        %v2956 = vld [vmem:[#allocation7 + $0x768] sm:$0xff]
        %v2957 = vld [vmem:[#allocation7 + $0x770] sm:$0xf]
        %v2958 = vld [vmem:[#allocation7 + $0x774] sm:$0xff]
        %v2959 = vld [vmem:[#allocation7 + $0x77c] sm:$0xf]
        %v2960 = vld [vmem:[#allocation7 + $0x780] sm:$0xff]
        %v2961 = vld [vmem:[#allocation7 + $0x788] sm:$0xf]
        %v2962 = vld [vmem:[#allocation7 + $0x78c] sm:$0xff]
        %v2963 = vld [vmem:[#allocation7 + $0x794] sm:$0xf]
        %v2964 = vld [vmem:[#allocation7 + $0x798] sm:$0xff]
        %v2965 = vld [vmem:[#allocation7 + $0x7a0] sm:$0xf]
        %v2966 = vld [vmem:[#allocation7 + $0x7a4] sm:$0xff]
        %v2967 = vld [vmem:[#allocation7 + $0x7ac] sm:$0xf]
        %v2968 = vld [vmem:[#allocation7 + $0x7b0] sm:$0xff]
        %v2969 = vld [vmem:[#allocation7 + $0x7b8] sm:$0xf]
        %v2970 = vld [vmem:[#allocation7 + $0x7bc] sm:$0xff]
        %v2971 = vld [vmem:[#allocation7 + $0x7c4] sm:$0xf]
        %v2972 = vld [vmem:[#allocation7 + $0x7c8] sm:$0xff]
        %v2973 = vld [vmem:[#allocation7 + $0x7d0] sm:$0xf]
        %v2974 = vld [vmem:[#allocation7 + $0x7d4] sm:$0xff]
        %v2975 = vld [vmem:[#allocation7 + $0x7dc] sm:$0xf]
        %v2976 = vld [vmem:[#allocation7 + $0x7e0] sm:$0xff]
        %v2977 = vld [vmem:[#allocation7 + $0x7e8] sm:$0xf]
        %v2978 = vld [vmem:[#allocation7 + $0x7ec] sm:$0xff]
        %v2979 = vld [vmem:[#allocation7 + $0x7f4] sm:$0xf]
        %v2980 = vld [vmem:[#allocation7 + $0x7f8] sm:$0xff]
        %v2981 = vld [vmem:[#allocation7 + $0x800] sm:$0xf]
        %v2982 = vld [vmem:[#allocation7 + $0x804] sm:$0xff]
        %v2983 = vld [vmem:[#allocation7 + $0x80c] sm:$0xf]
        %v2984 = vld [vmem:[#allocation7 + $0x810] sm:$0xff]
        %v2985 = vld [vmem:[#allocation7 + $0x818] sm:$0xf]
        %v2986 = vld [vmem:[#allocation7 + $0x81c] sm:$0xff]
        %v2987 = vld [vmem:[#allocation7 + $0x824] sm:$0xf]
        %v2988 = vld [vmem:[#allocation7 + $0x828] sm:$0xff]
        %v2989 = vld [vmem:[#allocation7 + $0x830] sm:$0xf]
        %v2990 = vld [vmem:[#allocation7 + $0x834] sm:$0xff]
        %v2991 = vld [vmem:[#allocation7 + $0x83c] sm:$0xf]
        %v2992 = vld [vmem:[#allocation7 + $0x840] sm:$0xff]
        %v2993 = vld [vmem:[#allocation7 + $0x848] sm:$0xf]
        %v2994 = vld [vmem:[#allocation7 + $0x84c] sm:$0xff]
        %v2995 = vld [vmem:[#allocation7 + $0x854] sm:$0xf]
        %v2996 = vld [vmem:[#allocation7 + $0x858] sm:$0xff]
        %v2997 = vld [vmem:[#allocation7 + $0x860] sm:$0xf]
        %v2998 = vld [vmem:[#allocation7 + $0x864] sm:$0xff]
        %v2999 = vld [vmem:[#allocation7 + $0x86c] sm:$0xf]
        %v3000 = vld [vmem:[#allocation7 + $0x870] sm:$0xff]
        %v3001 = vld [vmem:[#allocation7 + $0x878] sm:$0xf]
        %v3002 = vld [vmem:[#allocation7 + $0x87c] sm:$0xff]
        %v3003 = vld [vmem:[#allocation7 + $0x884] sm:$0xf]
        %v3004 = vld [vmem:[#allocation7 + $0x888] sm:$0xff]
        %v3005 = vld [vmem:[#allocation7 + $0x890] sm:$0xf]
        %v3006 = vld [vmem:[#allocation7 + $0x894] sm:$0xff]
        %v3007 = vld [vmem:[#allocation7 + $0x89c] sm:$0xf]
        %v3008 = vld [vmem:[#allocation7 + $0x8a0] sm:$0xff]
        %v3009 = vld [vmem:[#allocation7 + $0x8a8] sm:$0xf]
        %v3010 = vld [vmem:[#allocation7 + $0x8ac] sm:$0xff]
        %v3011 = vld [vmem:[#allocation7 + $0x8b4] sm:$0xf]
        %v3012 = vld [vmem:[#allocation7 + $0x8b8] sm:$0xff]
        %v3013 = vld [vmem:[#allocation7 + $0x8c0] sm:$0xf]
        %v3014 = vld [vmem:[#allocation7 + $0x8c4] sm:$0xff]
        %v3015 = vld [vmem:[#allocation7 + $0x8cc] sm:$0xf]
        %v3016 = vld [vmem:[#allocation7 + $0x8d0] sm:$0xff]
        %v3017 = vld [vmem:[#allocation7 + $0x8d8] sm:$0xf]
        %v3018 = vld [vmem:[#allocation7 + $0x8dc] sm:$0xff]
        %v3019 = vld [vmem:[#allocation7 + $0x8e4] sm:$0xf]
        %v3020 = vld [vmem:[#allocation7 + $0x8e8] sm:$0xff]
        %v3021 = vld [vmem:[#allocation7 + $0x8f0] sm:$0xf]
        %v3022 = vld [vmem:[#allocation7 + $0x8f4] sm:$0xff]
        %v3023 = vld [vmem:[#allocation7 + $0x8fc] sm:$0xf]
        %v3024 = vld [vmem:[#allocation8] sm:$0x7]
        %v3026 = vlaneseq
        %v3027 = vshrl.u32 %v3026, 7
        %v3028 = vsub.s32 0, %v3027
        %v3029 = vrot.slane %v3024, %v3028
        %v3030 = vlaneseq
        %v3031 = vshrl.u32 %v3030, 7
        %v3032 = vsub.s32 1, %v3031
        %v3033 = vrot.slane %v3024, %v3032
        %v3034 = vlaneseq
        %v3035 = vshrl.u32 %v3034, 7
        %v3036 = vsub.s32 2, %v3035
        %v3037 = vrot.slane %v3024, %v3036
        %v3425 = vunpack.c.l.b16 %v2640
        %v3426 = vunpack.c.h.b16 %v2640
        %v3427 = vunpack.c.l.b16 %v2641
        %v3428 = vunpack.c.l.b16 %v2642
        %v3429 = vunpack.c.h.b16 %v2642
        %v3430 = vunpack.c.l.b16 %v2643
        %v3431 = vunpack.c.l.b16 %v2644
        %v3432 = vunpack.c.h.b16 %v2644
        %v3433 = vunpack.c.l.b16 %v2645
        %v3434 = vunpack.c.l.b16 %v2646
        %v3435 = vunpack.c.h.b16 %v2646
        %v3436 = vunpack.c.l.b16 %v2647
        %v3437 = vunpack.c.l.b16 %v2648
        %v3438 = vunpack.c.h.b16 %v2648
        %v3439 = vunpack.c.l.b16 %v2649
        %v3440 = vunpack.c.l.b16 %v2650
        %v3441 = vunpack.c.h.b16 %v2650
        %v3442 = vunpack.c.l.b16 %v2651
        %v3443 = vunpack.c.l.b16 %v2652
        %v3444 = vunpack.c.h.b16 %v2652
        %v3445 = vunpack.c.l.b16 %v2653
        %v3446 = vunpack.c.l.b16 %v2654
        %v3447 = vunpack.c.h.b16 %v2654
        %v3448 = vunpack.c.l.b16 %v2655
        %v3449 = vunpack.c.l.b16 %v2656
        %v3450 = vunpack.c.h.b16 %v2656
        %v3451 = vunpack.c.l.b16 %v2657
        %v3452 = vunpack.c.l.b16 %v2658
        %v3453 = vunpack.c.h.b16 %v2658
        %v3454 = vunpack.c.l.b16 %v2659
        %v3455 = vunpack.c.l.b16 %v2660
        %v3456 = vunpack.c.h.b16 %v2660
        %v3457 = vunpack.c.l.b16 %v2661
        %v3458 = vunpack.c.l.b16 %v2662
        %v3459 = vunpack.c.h.b16 %v2662
        %v3460 = vunpack.c.l.b16 %v2663
        %v3461 = vunpack.c.l.b16 %v2664
        %v3462 = vunpack.c.h.b16 %v2664
        %v3463 = vunpack.c.l.b16 %v2665
        %v3464 = vunpack.c.l.b16 %v2666
        %v3465 = vunpack.c.h.b16 %v2666
        %v3466 = vunpack.c.l.b16 %v2667
        %v3467 = vunpack.c.l.b16 %v2668
        %v3468 = vunpack.c.h.b16 %v2668
        %v3469 = vunpack.c.l.b16 %v2669
        %v3470 = vunpack.c.l.b16 %v2670
        %v3471 = vunpack.c.h.b16 %v2670
        %v3472 = vunpack.c.l.b16 %v2671
        %v3473 = vunpack.c.l.b16 %v2672
        %v3474 = vunpack.c.h.b16 %v2672
        %v3475 = vunpack.c.l.b16 %v2673
        %v3476 = vunpack.c.l.b16 %v2674
        %v3477 = vunpack.c.h.b16 %v2674
        %v3478 = vunpack.c.l.b16 %v2675
        %v3479 = vunpack.c.l.b16 %v2676
        %v3480 = vunpack.c.h.b16 %v2676
        %v3481 = vunpack.c.l.b16 %v2677
        %v3482 = vunpack.c.l.b16 %v2678
        %v3483 = vunpack.c.h.b16 %v2678
        %v3484 = vunpack.c.l.b16 %v2679
        %v3485 = vunpack.c.l.b16 %v2680
        %v3486 = vunpack.c.h.b16 %v2680
        %v3487 = vunpack.c.l.b16 %v2681
        %v3488 = vunpack.c.l.b16 %v2682
        %v3489 = vunpack.c.h.b16 %v2682
        %v3490 = vunpack.c.l.b16 %v2683
        %v3491 = vunpack.c.l.b16 %v2684
        %v3492 = vunpack.c.h.b16 %v2684
        %v3493 = vunpack.c.l.b16 %v2685
        %v3494 = vunpack.c.l.b16 %v2686
        %v3495 = vunpack.c.h.b16 %v2686
        %v3496 = vunpack.c.l.b16 %v2687
        %v3497 = vunpack.c.l.b16 %v2688
        %v3498 = vunpack.c.h.b16 %v2688
        %v3499 = vunpack.c.l.b16 %v2689
        %v3500 = vunpack.c.l.b16 %v2690
        %v3501 = vunpack.c.h.b16 %v2690
        %v3502 = vunpack.c.l.b16 %v2691
        %v3503 = vunpack.c.l.b16 %v2692
        %v3504 = vunpack.c.h.b16 %v2692
        %v3505 = vunpack.c.l.b16 %v2693
        %v3506 = vunpack.c.l.b16 %v2694
        %v3507 = vunpack.c.h.b16 %v2694
        %v3508 = vunpack.c.l.b16 %v2695
        %v3509 = vunpack.c.l.b16 %v2696
        %v3510 = vunpack.c.h.b16 %v2696
        %v3511 = vunpack.c.l.b16 %v2697
        %v3512 = vunpack.c.l.b16 %v2698
        %v3513 = vunpack.c.h.b16 %v2698
        %v3514 = vunpack.c.l.b16 %v2699
        %v3515 = vunpack.c.l.b16 %v2700
        %v3516 = vunpack.c.h.b16 %v2700
        %v3517 = vunpack.c.l.b16 %v2701
        %v3518 = vunpack.c.l.b16 %v2702
        %v3519 = vunpack.c.h.b16 %v2702
        %v3520 = vunpack.c.l.b16 %v2703
        %v3521 = vunpack.c.l.b16 %v2704
        %v3522 = vunpack.c.h.b16 %v2704
        %v3523 = vunpack.c.l.b16 %v2705
        %v3524 = vunpack.c.l.b16 %v2706
        %v3525 = vunpack.c.h.b16 %v2706
        %v3526 = vunpack.c.l.b16 %v2707
        %v3527 = vunpack.c.l.b16 %v2708
        %v3528 = vunpack.c.h.b16 %v2708
        %v3529 = vunpack.c.l.b16 %v2709
        %v3530 = vunpack.c.l.b16 %v2710
        %v3531 = vunpack.c.h.b16 %v2710
        %v3532 = vunpack.c.l.b16 %v2711
        %v3533 = vunpack.c.l.b16 %v2712
        %v3534 = vunpack.c.h.b16 %v2712
        %v3535 = vunpack.c.l.b16 %v2713
        %v3536 = vunpack.c.l.b16 %v2714
        %v3537 = vunpack.c.h.b16 %v2714
        %v3538 = vunpack.c.l.b16 %v2715
        %v3539 = vunpack.c.l.b16 %v2716
        %v3540 = vunpack.c.h.b16 %v2716
        %v3541 = vunpack.c.l.b16 %v2717
        %v3542 = vunpack.c.l.b16 %v2718
        %v3543 = vunpack.c.h.b16 %v2718
        %v3544 = vunpack.c.l.b16 %v2719
        %v3545 = vunpack.c.l.b16 %v2720
        %v3546 = vunpack.c.h.b16 %v2720
        %v3547 = vunpack.c.l.b16 %v2721
        %v3548 = vunpack.c.l.b16 %v2722
        %v3549 = vunpack.c.h.b16 %v2722
        %v3550 = vunpack.c.l.b16 %v2723
        %v3551 = vunpack.c.l.b16 %v2724
        %v3552 = vunpack.c.h.b16 %v2724
        %v3553 = vunpack.c.l.b16 %v2725
        %v3554 = vunpack.c.l.b16 %v2726
        %v3555 = vunpack.c.h.b16 %v2726
        %v3556 = vunpack.c.l.b16 %v2727
        %v3557 = vunpack.c.l.b16 %v2728
        %v3558 = vunpack.c.h.b16 %v2728
        %v3559 = vunpack.c.l.b16 %v2729
        %v3560 = vunpack.c.l.b16 %v2730
        %v3561 = vunpack.c.h.b16 %v2730
        %v3562 = vunpack.c.l.b16 %v2731
        %v3563 = vunpack.c.l.b16 %v2732
        %v3564 = vunpack.c.h.b16 %v2732
        %v3565 = vunpack.c.l.b16 %v2733
        %v3566 = vunpack.c.l.b16 %v2734
        %v3567 = vunpack.c.h.b16 %v2734
        %v3568 = vunpack.c.l.b16 %v2735
        %v3569 = vunpack.c.l.b16 %v2736
        %v3570 = vunpack.c.h.b16 %v2736
        %v3571 = vunpack.c.l.b16 %v2737
        %v3572 = vunpack.c.l.b16 %v2738
        %v3573 = vunpack.c.h.b16 %v2738
        %v3574 = vunpack.c.l.b16 %v2739
        %v3575 = vunpack.c.l.b16 %v2740
        %v3576 = vunpack.c.h.b16 %v2740
        %v3577 = vunpack.c.l.b16 %v2741
        %v3578 = vunpack.c.l.b16 %v2742
        %v3579 = vunpack.c.h.b16 %v2742
        %v3580 = vunpack.c.l.b16 %v2743
        %v3581 = vunpack.c.l.b16 %v2744
        %v3582 = vunpack.c.h.b16 %v2744
        %v3583 = vunpack.c.l.b16 %v2745
        %v3584 = vunpack.c.l.b16 %v2746
        %v3585 = vunpack.c.h.b16 %v2746
        %v3586 = vunpack.c.l.b16 %v2747
        %v3587 = vunpack.c.l.b16 %v2748
        %v3588 = vunpack.c.h.b16 %v2748
        %v3589 = vunpack.c.l.b16 %v2749
        %v3590 = vunpack.c.l.b16 %v2750
        %v3591 = vunpack.c.h.b16 %v2750
        %v3592 = vunpack.c.l.b16 %v2751
        %v3593 = vunpack.c.l.b16 %v2752
        %v3594 = vunpack.c.h.b16 %v2752
        %v3595 = vunpack.c.l.b16 %v2753
        %v3596 = vunpack.c.l.b16 %v2754
        %v3597 = vunpack.c.h.b16 %v2754
        %v3598 = vunpack.c.l.b16 %v2755
        %v3599 = vunpack.c.l.b16 %v2756
        %v3600 = vunpack.c.h.b16 %v2756
        %v3601 = vunpack.c.l.b16 %v2757
        %v3602 = vunpack.c.l.b16 %v2758
        %v3603 = vunpack.c.h.b16 %v2758
        %v3604 = vunpack.c.l.b16 %v2759
        %v3605 = vunpack.c.l.b16 %v2760
        %v3606 = vunpack.c.h.b16 %v2760
        %v3607 = vunpack.c.l.b16 %v2761
        %v3608 = vunpack.c.l.b16 %v2762
        %v3609 = vunpack.c.h.b16 %v2762
        %v3610 = vunpack.c.l.b16 %v2763
        %v3611 = vunpack.c.l.b16 %v2764
        %v3612 = vunpack.c.h.b16 %v2764
        %v3613 = vunpack.c.l.b16 %v2765
        %v3614 = vunpack.c.l.b16 %v2766
        %v3615 = vunpack.c.h.b16 %v2766
        %v3616 = vunpack.c.l.b16 %v2767
        %v3617 = vunpack.c.l.b16 %v2768
        %v3618 = vunpack.c.h.b16 %v2768
        %v3619 = vunpack.c.l.b16 %v2769
        %v3620 = vunpack.c.l.b16 %v2770
        %v3621 = vunpack.c.h.b16 %v2770
        %v3622 = vunpack.c.l.b16 %v2771
        %v3623 = vunpack.c.l.b16 %v2772
        %v3624 = vunpack.c.h.b16 %v2772
        %v3625 = vunpack.c.l.b16 %v2773
        %v3626 = vunpack.c.l.b16 %v2774
        %v3627 = vunpack.c.h.b16 %v2774
        %v3628 = vunpack.c.l.b16 %v2775
        %v3629 = vunpack.c.l.b16 %v2776
        %v3630 = vunpack.c.h.b16 %v2776
        %v3631 = vunpack.c.l.b16 %v2777
        %v3632 = vunpack.c.l.b16 %v2778
        %v3633 = vunpack.c.h.b16 %v2778
        %v3634 = vunpack.c.l.b16 %v2779
        %v3635 = vunpack.c.l.b16 %v2780
        %v3636 = vunpack.c.h.b16 %v2780
        %v3637 = vunpack.c.l.b16 %v2781
        %v3638 = vunpack.c.l.b16 %v2782
        %v3639 = vunpack.c.h.b16 %v2782
        %v3640 = vunpack.c.l.b16 %v2783
        %v3641 = vunpack.c.l.b16 %v2784
        %v3642 = vunpack.c.h.b16 %v2784
        %v3643 = vunpack.c.l.b16 %v2785
        %v3644 = vunpack.c.l.b16 %v2786
        %v3645 = vunpack.c.h.b16 %v2786
        %v3646 = vunpack.c.l.b16 %v2787
        %v3647 = vunpack.c.l.b16 %v2788
        %v3648 = vunpack.c.h.b16 %v2788
        %v3649 = vunpack.c.l.b16 %v2789
        %v3650 = vunpack.c.l.b16 %v2790
        %v3651 = vunpack.c.h.b16 %v2790
        %v3652 = vunpack.c.l.b16 %v2791
        %v3653 = vunpack.c.l.b16 %v2792
        %v3654 = vunpack.c.h.b16 %v2792
        %v3655 = vunpack.c.l.b16 %v2793
        %v3656 = vunpack.c.l.b16 %v2794
        %v3657 = vunpack.c.h.b16 %v2794
        %v3658 = vunpack.c.l.b16 %v2795
        %v3659 = vunpack.c.l.b16 %v2796
        %v3660 = vunpack.c.h.b16 %v2796
        %v3661 = vunpack.c.l.b16 %v2797
        %v3662 = vunpack.c.l.b16 %v2798
        %v3663 = vunpack.c.h.b16 %v2798
        %v3664 = vunpack.c.l.b16 %v2799
        %v3665 = vunpack.c.l.b16 %v2800
        %v3666 = vunpack.c.h.b16 %v2800
        %v3667 = vunpack.c.l.b16 %v2801
        %v3668 = vunpack.c.l.b16 %v2802
        %v3669 = vunpack.c.h.b16 %v2802
        %v3670 = vunpack.c.l.b16 %v2803
        %v3671 = vunpack.c.l.b16 %v2804
        %v3672 = vunpack.c.h.b16 %v2804
        %v3673 = vunpack.c.l.b16 %v2805
        %v3674 = vunpack.c.l.b16 %v2806
        %v3675 = vunpack.c.h.b16 %v2806
        %v3676 = vunpack.c.l.b16 %v2807
        %v3677 = vunpack.c.l.b16 %v2808
        %v3678 = vunpack.c.h.b16 %v2808
        %v3679 = vunpack.c.l.b16 %v2809
        %v3680 = vunpack.c.l.b16 %v2810
        %v3681 = vunpack.c.h.b16 %v2810
        %v3682 = vunpack.c.l.b16 %v2811
        %v3683 = vunpack.c.l.b16 %v2812
        %v3684 = vunpack.c.h.b16 %v2812
        %v3685 = vunpack.c.l.b16 %v2813
        %v3686 = vunpack.c.l.b16 %v2814
        %v3687 = vunpack.c.h.b16 %v2814
        %v3688 = vunpack.c.l.b16 %v2815
        %v3689 = vunpack.c.l.b16 %v2816
        %v3690 = vunpack.c.h.b16 %v2816
        %v3691 = vunpack.c.l.b16 %v2817
        %v3692 = vunpack.c.l.b16 %v2818
        %v3693 = vunpack.c.h.b16 %v2818
        %v3694 = vunpack.c.l.b16 %v2819
        %v3695 = vunpack.c.l.b16 %v2820
        %v3696 = vunpack.c.h.b16 %v2820
        %v3697 = vunpack.c.l.b16 %v2821
        %v3698 = vunpack.c.l.b16 %v2822
        %v3699 = vunpack.c.h.b16 %v2822
        %v3700 = vunpack.c.l.b16 %v2823
        %v3701 = vunpack.c.l.b16 %v2824
        %v3702 = vunpack.c.h.b16 %v2824
        %v3703 = vunpack.c.l.b16 %v2825
        %v3704 = vunpack.c.l.b16 %v2826
        %v3705 = vunpack.c.h.b16 %v2826
        %v3706 = vunpack.c.l.b16 %v2827
        %v3707 = vunpack.c.l.b16 %v2828
        %v3708 = vunpack.c.h.b16 %v2828
        %v3709 = vunpack.c.l.b16 %v2829
        %v3710 = vunpack.c.l.b16 %v2830
        %v3711 = vunpack.c.h.b16 %v2830
        %v3712 = vunpack.c.l.b16 %v2831
        %v3713 = vunpack.c.l.b16 %v2832
        %v3714 = vunpack.c.h.b16 %v2832
        %v3715 = vunpack.c.l.b16 %v2833
        %v3716 = vunpack.c.l.b16 %v2834
        %v3717 = vunpack.c.h.b16 %v2834
        %v3718 = vunpack.c.l.b16 %v2835
        %v3719 = vunpack.c.l.b16 %v2836
        %v3720 = vunpack.c.h.b16 %v2836
        %v3721 = vunpack.c.l.b16 %v2837
        %v3722 = vunpack.c.l.b16 %v2838
        %v3723 = vunpack.c.h.b16 %v2838
        %v3724 = vunpack.c.l.b16 %v2839
        %v3725 = vunpack.c.l.b16 %v2840
        %v3726 = vunpack.c.h.b16 %v2840
        %v3727 = vunpack.c.l.b16 %v2841
        %v3728 = vunpack.c.l.b16 %v2842
        %v3729 = vunpack.c.h.b16 %v2842
        %v3730 = vunpack.c.l.b16 %v2843
        %v3731 = vunpack.c.l.b16 %v2844
        %v3732 = vunpack.c.h.b16 %v2844
        %v3733 = vunpack.c.l.b16 %v2845
        %v3734 = vunpack.c.l.b16 %v2846
        %v3735 = vunpack.c.h.b16 %v2846
        %v3736 = vunpack.c.l.b16 %v2847
        %v3737 = vunpack.c.l.b16 %v2848
        %v3738 = vunpack.c.h.b16 %v2848
        %v3739 = vunpack.c.l.b16 %v2849
        %v3740 = vunpack.c.l.b16 %v2850
        %v3741 = vunpack.c.h.b16 %v2850
        %v3742 = vunpack.c.l.b16 %v2851
        %v3743 = vunpack.c.l.b16 %v2852
        %v3744 = vunpack.c.h.b16 %v2852
        %v3745 = vunpack.c.l.b16 %v2853
        %v3746 = vunpack.c.l.b16 %v2854
        %v3747 = vunpack.c.h.b16 %v2854
        %v3748 = vunpack.c.l.b16 %v2855
        %v3749 = vunpack.c.l.b16 %v2856
        %v3750 = vunpack.c.h.b16 %v2856
        %v3751 = vunpack.c.l.b16 %v2857
        %v3752 = vunpack.c.l.b16 %v2858
        %v3753 = vunpack.c.h.b16 %v2858
        %v3754 = vunpack.c.l.b16 %v2859
        %v3755 = vunpack.c.l.b16 %v2860
        %v3756 = vunpack.c.h.b16 %v2860
        %v3757 = vunpack.c.l.b16 %v2861
        %v3758 = vunpack.c.l.b16 %v2862
        %v3759 = vunpack.c.h.b16 %v2862
        %v3760 = vunpack.c.l.b16 %v2863
        %v3761 = vunpack.c.l.b16 %v2864
        %v3762 = vunpack.c.h.b16 %v2864
        %v3763 = vunpack.c.l.b16 %v2865
        %v3764 = vunpack.c.l.b16 %v2866
        %v3765 = vunpack.c.h.b16 %v2866
        %v3766 = vunpack.c.l.b16 %v2867
        %v3767 = vunpack.c.l.b16 %v2868
        %v3768 = vunpack.c.h.b16 %v2868
        %v3769 = vunpack.c.l.b16 %v2869
        %v3770 = vunpack.c.l.b16 %v2870
        %v3771 = vunpack.c.h.b16 %v2870
        %v3772 = vunpack.c.l.b16 %v2871
        %v3773 = vunpack.c.l.b16 %v2872
        %v3774 = vunpack.c.h.b16 %v2872
        %v3775 = vunpack.c.l.b16 %v2873
        %v3776 = vunpack.c.l.b16 %v2874
        %v3777 = vunpack.c.h.b16 %v2874
        %v3778 = vunpack.c.l.b16 %v2875
        %v3779 = vunpack.c.l.b16 %v2876
        %v3780 = vunpack.c.h.b16 %v2876
        %v3781 = vunpack.c.l.b16 %v2877
        %v3782 = vunpack.c.l.b16 %v2878
        %v3783 = vunpack.c.h.b16 %v2878
        %v3784 = vunpack.c.l.b16 %v2879
        %v3785 = vunpack.c.l.b16 %v2880
        %v3786 = vunpack.c.h.b16 %v2880
        %v3787 = vunpack.c.l.b16 %v2881
        %v3788 = vunpack.c.l.b16 %v2882
        %v3789 = vunpack.c.h.b16 %v2882
        %v3790 = vunpack.c.l.b16 %v2883
        %v3791 = vunpack.c.l.b16 %v2884
        %v3792 = vunpack.c.h.b16 %v2884
        %v3793 = vunpack.c.l.b16 %v2885
        %v3794 = vunpack.c.l.b16 %v2886
        %v3795 = vunpack.c.h.b16 %v2886
        %v3796 = vunpack.c.l.b16 %v2887
        %v3797 = vunpack.c.l.b16 %v2888
        %v3798 = vunpack.c.h.b16 %v2888
        %v3799 = vunpack.c.l.b16 %v2889
        %v3800 = vunpack.c.l.b16 %v2890
        %v3801 = vunpack.c.h.b16 %v2890
        %v3802 = vunpack.c.l.b16 %v2891
        %v3803 = vunpack.c.l.b16 %v2892
        %v3804 = vunpack.c.h.b16 %v2892
        %v3805 = vunpack.c.l.b16 %v2893
        %v3806 = vunpack.c.l.b16 %v2894
        %v3807 = vunpack.c.h.b16 %v2894
        %v3808 = vunpack.c.l.b16 %v2895
        %v3809 = vunpack.c.l.b16 %v2896
        %v3810 = vunpack.c.h.b16 %v2896
        %v3811 = vunpack.c.l.b16 %v2897
        %v3812 = vunpack.c.l.b16 %v2898
        %v3813 = vunpack.c.h.b16 %v2898
        %v3814 = vunpack.c.l.b16 %v2899
        %v3815 = vunpack.c.l.b16 %v2900
        %v3816 = vunpack.c.h.b16 %v2900
        %v3817 = vunpack.c.l.b16 %v2901
        %v3818 = vunpack.c.l.b16 %v2902
        %v3819 = vunpack.c.h.b16 %v2902
        %v3820 = vunpack.c.l.b16 %v2903
        %v3821 = vunpack.c.l.b16 %v2904
        %v3822 = vunpack.c.h.b16 %v2904
        %v3823 = vunpack.c.l.b16 %v2905
        %v3824 = vunpack.c.l.b16 %v2906
        %v3825 = vunpack.c.h.b16 %v2906
        %v3826 = vunpack.c.l.b16 %v2907
        %v3827 = vunpack.c.l.b16 %v2908
        %v3828 = vunpack.c.h.b16 %v2908
        %v3829 = vunpack.c.l.b16 %v2909
        %v3830 = vunpack.c.l.b16 %v2910
        %v3831 = vunpack.c.h.b16 %v2910
        %v3832 = vunpack.c.l.b16 %v2911
        %v3833 = vunpack.c.l.b16 %v2912
        %v3834 = vunpack.c.h.b16 %v2912
        %v3835 = vunpack.c.l.b16 %v2913
        %v3836 = vunpack.c.l.b16 %v2914
        %v3837 = vunpack.c.h.b16 %v2914
        %v3838 = vunpack.c.l.b16 %v2915
        %v3839 = vunpack.c.l.b16 %v2916
        %v3840 = vunpack.c.h.b16 %v2916
        %v3841 = vunpack.c.l.b16 %v2917
        %v3842 = vunpack.c.l.b16 %v2918
        %v3843 = vunpack.c.h.b16 %v2918
        %v3844 = vunpack.c.l.b16 %v2919
        %v3845 = vunpack.c.l.b16 %v2920
        %v3846 = vunpack.c.h.b16 %v2920
        %v3847 = vunpack.c.l.b16 %v2921
        %v3848 = vunpack.c.l.b16 %v2922
        %v3849 = vunpack.c.h.b16 %v2922
        %v3850 = vunpack.c.l.b16 %v2923
        %v3851 = vunpack.c.l.b16 %v2924
        %v3852 = vunpack.c.h.b16 %v2924
        %v3853 = vunpack.c.l.b16 %v2925
        %v3854 = vunpack.c.l.b16 %v2926
        %v3855 = vunpack.c.h.b16 %v2926
        %v3856 = vunpack.c.l.b16 %v2927
        %v3857 = vunpack.c.l.b16 %v2928
        %v3858 = vunpack.c.h.b16 %v2928
        %v3859 = vunpack.c.l.b16 %v2929
        %v3860 = vunpack.c.l.b16 %v2930
        %v3861 = vunpack.c.h.b16 %v2930
        %v3862 = vunpack.c.l.b16 %v2931
        %v3863 = vunpack.c.l.b16 %v2932
        %v3864 = vunpack.c.h.b16 %v2932
        %v3865 = vunpack.c.l.b16 %v2933
        %v3866 = vunpack.c.l.b16 %v2934
        %v3867 = vunpack.c.h.b16 %v2934
        %v3868 = vunpack.c.l.b16 %v2935
        %v3869 = vunpack.c.l.b16 %v2936
        %v3870 = vunpack.c.h.b16 %v2936
        %v3871 = vunpack.c.l.b16 %v2937
        %v3872 = vunpack.c.l.b16 %v2938
        %v3873 = vunpack.c.h.b16 %v2938
        %v3874 = vunpack.c.l.b16 %v2939
        %v3875 = vunpack.c.l.b16 %v2940
        %v3876 = vunpack.c.h.b16 %v2940
        %v3877 = vunpack.c.l.b16 %v2941
        %v3878 = vunpack.c.l.b16 %v2942
        %v3879 = vunpack.c.h.b16 %v2942
        %v3880 = vunpack.c.l.b16 %v2943
        %v3881 = vunpack.c.l.b16 %v2944
        %v3882 = vunpack.c.h.b16 %v2944
        %v3883 = vunpack.c.l.b16 %v2945
        %v3884 = vunpack.c.l.b16 %v2946
        %v3885 = vunpack.c.h.b16 %v2946
        %v3886 = vunpack.c.l.b16 %v2947
        %v3887 = vunpack.c.l.b16 %v2948
        %v3888 = vunpack.c.h.b16 %v2948
        %v3889 = vunpack.c.l.b16 %v2949
        %v3890 = vunpack.c.l.b16 %v2950
        %v3891 = vunpack.c.h.b16 %v2950
        %v3892 = vunpack.c.l.b16 %v2951
        %v3893 = vunpack.c.l.b16 %v2952
        %v3894 = vunpack.c.h.b16 %v2952
        %v3895 = vunpack.c.l.b16 %v2953
        %v3896 = vunpack.c.l.b16 %v2954
        %v3897 = vunpack.c.h.b16 %v2954
        %v3898 = vunpack.c.l.b16 %v2955
        %v3899 = vunpack.c.l.b16 %v2956
        %v3900 = vunpack.c.h.b16 %v2956
        %v3901 = vunpack.c.l.b16 %v2957
        %v3902 = vunpack.c.l.b16 %v2958
        %v3903 = vunpack.c.h.b16 %v2958
        %v3904 = vunpack.c.l.b16 %v2959
        %v3905 = vunpack.c.l.b16 %v2960
        %v3906 = vunpack.c.h.b16 %v2960
        %v3907 = vunpack.c.l.b16 %v2961
        %v3908 = vunpack.c.l.b16 %v2962
        %v3909 = vunpack.c.h.b16 %v2962
        %v3910 = vunpack.c.l.b16 %v2963
        %v3911 = vunpack.c.l.b16 %v2964
        %v3912 = vunpack.c.h.b16 %v2964
        %v3913 = vunpack.c.l.b16 %v2965
        %v3914 = vunpack.c.l.b16 %v2966
        %v3915 = vunpack.c.h.b16 %v2966
        %v3916 = vunpack.c.l.b16 %v2967
        %v3917 = vunpack.c.l.b16 %v2968
        %v3918 = vunpack.c.h.b16 %v2968
        %v3919 = vunpack.c.l.b16 %v2969
        %v3920 = vunpack.c.l.b16 %v2970
        %v3921 = vunpack.c.h.b16 %v2970
        %v3922 = vunpack.c.l.b16 %v2971
        %v3923 = vunpack.c.l.b16 %v2972
        %v3924 = vunpack.c.h.b16 %v2972
        %v3925 = vunpack.c.l.b16 %v2973
        %v3926 = vunpack.c.l.b16 %v2974
        %v3927 = vunpack.c.h.b16 %v2974
        %v3928 = vunpack.c.l.b16 %v2975
        %v3929 = vunpack.c.l.b16 %v2976
        %v3930 = vunpack.c.h.b16 %v2976
        %v3931 = vunpack.c.l.b16 %v2977
        %v3932 = vunpack.c.l.b16 %v2978
        %v3933 = vunpack.c.h.b16 %v2978
        %v3934 = vunpack.c.l.b16 %v2979
        %v3935 = vunpack.c.l.b16 %v2980
        %v3936 = vunpack.c.h.b16 %v2980
        %v3937 = vunpack.c.l.b16 %v2981
        %v3938 = vunpack.c.l.b16 %v2982
        %v3939 = vunpack.c.h.b16 %v2982
        %v3940 = vunpack.c.l.b16 %v2983
        %v3941 = vunpack.c.l.b16 %v2984
        %v3942 = vunpack.c.h.b16 %v2984
        %v3943 = vunpack.c.l.b16 %v2985
        %v3944 = vunpack.c.l.b16 %v2986
        %v3945 = vunpack.c.h.b16 %v2986
        %v3946 = vunpack.c.l.b16 %v2987
        %v3947 = vunpack.c.l.b16 %v2988
        %v3948 = vunpack.c.h.b16 %v2988
        %v3949 = vunpack.c.l.b16 %v2989
        %v3950 = vunpack.c.l.b16 %v2990
        %v3951 = vunpack.c.h.b16 %v2990
        %v3952 = vunpack.c.l.b16 %v2991
        %v3953 = vunpack.c.l.b16 %v2992
        %v3954 = vunpack.c.h.b16 %v2992
        %v3955 = vunpack.c.l.b16 %v2993
        %v3956 = vunpack.c.l.b16 %v2994
        %v3957 = vunpack.c.h.b16 %v2994
        %v3958 = vunpack.c.l.b16 %v2995
        %v3959 = vunpack.c.l.b16 %v2996
        %v3960 = vunpack.c.h.b16 %v2996
        %v3961 = vunpack.c.l.b16 %v2997
        %v3962 = vunpack.c.l.b16 %v2998
        %v3963 = vunpack.c.h.b16 %v2998
        %v3964 = vunpack.c.l.b16 %v2999
        %v3965 = vunpack.c.l.b16 %v3000
        %v3966 = vunpack.c.h.b16 %v3000
        %v3967 = vunpack.c.l.b16 %v3001
        %v3968 = vunpack.c.l.b16 %v3002
        %v3969 = vunpack.c.h.b16 %v3002
        %v3970 = vunpack.c.l.b16 %v3003
        %v3971 = vunpack.c.l.b16 %v3004
        %v3972 = vunpack.c.h.b16 %v3004
        %v3973 = vunpack.c.l.b16 %v3005
        %v3974 = vunpack.c.l.b16 %v3006
        %v3975 = vunpack.c.h.b16 %v3006
        %v3976 = vunpack.c.l.b16 %v3007
        %v3977 = vunpack.c.l.b16 %v3008
        %v3978 = vunpack.c.h.b16 %v3008
        %v3979 = vunpack.c.l.b16 %v3009
        %v3980 = vunpack.c.l.b16 %v3010
        %v3981 = vunpack.c.h.b16 %v3010
        %v3982 = vunpack.c.l.b16 %v3011
        %v3983 = vunpack.c.l.b16 %v3012
        %v3984 = vunpack.c.h.b16 %v3012
        %v3985 = vunpack.c.l.b16 %v3013
        %v3986 = vunpack.c.l.b16 %v3014
        %v3987 = vunpack.c.h.b16 %v3014
        %v3988 = vunpack.c.l.b16 %v3015
        %v3989 = vunpack.c.l.b16 %v3016
        %v3990 = vunpack.c.h.b16 %v3016
        %v3991 = vunpack.c.l.b16 %v3017
        %v3992 = vunpack.c.l.b16 %v3018
        %v3993 = vunpack.c.h.b16 %v3018
        %v3994 = vunpack.c.l.b16 %v3019
        %v3995 = vunpack.c.l.b16 %v3020
        %v3996 = vunpack.c.h.b16 %v3020
        %v3997 = vunpack.c.l.b16 %v3021
        %v3998 = vunpack.c.l.b16 %v3022
        %v3999 = vunpack.c.h.b16 %v3022
        %v4000 = vunpack.c.l.b16 %v3023
        %v4001 = vpack.c.b16 %v3428, %v3425
        %v4002 = vpack.c.b16 %v3429, %v3426
        %v4003 = vpack.c.b16 %v3430, %v3427
        %v4004 = vpack.c.b16 %v3434, %v3431
        %v4005 = vpack.c.b16 %v3435, %v3432
        %v4006 = vpack.c.b16 %v3436, %v3433
        %v4007 = vpack.c.b16 %v3440, %v3437
        %v4008 = vpack.c.b16 %v3441, %v3438
        %v4009 = vpack.c.b16 %v3442, %v3439
        %v4010 = vpack.c.b16 %v3446, %v3443
        %v4011 = vpack.c.b16 %v3447, %v3444
        %v4012 = vpack.c.b16 %v3448, %v3445
        %v4013 = vpack.c.b16 %v3452, %v3449
        %v4014 = vpack.c.b16 %v3453, %v3450
        %v4015 = vpack.c.b16 %v3454, %v3451
        %v4016 = vpack.c.b16 %v3458, %v3455
        %v4017 = vpack.c.b16 %v3459, %v3456
        %v4018 = vpack.c.b16 %v3460, %v3457
        %v4019 = vpack.c.b16 %v3464, %v3461
        %v4020 = vpack.c.b16 %v3465, %v3462
        %v4021 = vpack.c.b16 %v3466, %v3463
        %v4022 = vpack.c.b16 %v3470, %v3467
        %v4023 = vpack.c.b16 %v3471, %v3468
        %v4024 = vpack.c.b16 %v3472, %v3469
        %v4025 = vpack.c.b16 %v3476, %v3473
        %v4026 = vpack.c.b16 %v3477, %v3474
        %v4027 = vpack.c.b16 %v3478, %v3475
        %v4028 = vpack.c.b16 %v3482, %v3479
        %v4029 = vpack.c.b16 %v3483, %v3480
        %v4030 = vpack.c.b16 %v3484, %v3481
        %v4031 = vpack.c.b16 %v3488, %v3485
        %v4032 = vpack.c.b16 %v3489, %v3486
        %v4033 = vpack.c.b16 %v3490, %v3487
        %v4034 = vpack.c.b16 %v3494, %v3491
        %v4035 = vpack.c.b16 %v3495, %v3492
        %v4036 = vpack.c.b16 %v3496, %v3493
        %v4037 = vpack.c.b16 %v3500, %v3497
        %v4038 = vpack.c.b16 %v3501, %v3498
        %v4039 = vpack.c.b16 %v3502, %v3499
        %v4040 = vpack.c.b16 %v3506, %v3503
        %v4041 = vpack.c.b16 %v3507, %v3504
        %v4042 = vpack.c.b16 %v3508, %v3505
        %v4043 = vpack.c.b16 %v3512, %v3509
        %v4044 = vpack.c.b16 %v3513, %v3510
        %v4045 = vpack.c.b16 %v3514, %v3511
        %v4046 = vpack.c.b16 %v3518, %v3515
        %v4047 = vpack.c.b16 %v3519, %v3516
        %v4048 = vpack.c.b16 %v3520, %v3517
        %v4049 = vpack.c.b16 %v3524, %v3521
        %v4050 = vpack.c.b16 %v3525, %v3522
        %v4051 = vpack.c.b16 %v3526, %v3523
        %v4052 = vpack.c.b16 %v3530, %v3527
        %v4053 = vpack.c.b16 %v3531, %v3528
        %v4054 = vpack.c.b16 %v3532, %v3529
        %v4055 = vpack.c.b16 %v3536, %v3533
        %v4056 = vpack.c.b16 %v3537, %v3534
        %v4057 = vpack.c.b16 %v3538, %v3535
        %v4058 = vpack.c.b16 %v3542, %v3539
        %v4059 = vpack.c.b16 %v3543, %v3540
        %v4060 = vpack.c.b16 %v3544, %v3541
        %v4061 = vpack.c.b16 %v3548, %v3545
        %v4062 = vpack.c.b16 %v3549, %v3546
        %v4063 = vpack.c.b16 %v3550, %v3547
        %v4064 = vpack.c.b16 %v3554, %v3551
        %v4065 = vpack.c.b16 %v3555, %v3552
        %v4066 = vpack.c.b16 %v3556, %v3553
        %v4067 = vpack.c.b16 %v3560, %v3557
        %v4068 = vpack.c.b16 %v3561, %v3558
        %v4069 = vpack.c.b16 %v3562, %v3559
        %v4070 = vpack.c.b16 %v3566, %v3563
        %v4071 = vpack.c.b16 %v3567, %v3564
        %v4072 = vpack.c.b16 %v3568, %v3565
        %v4073 = vpack.c.b16 %v3572, %v3569
        %v4074 = vpack.c.b16 %v3573, %v3570
        %v4075 = vpack.c.b16 %v3574, %v3571
        %v4076 = vpack.c.b16 %v3578, %v3575
        %v4077 = vpack.c.b16 %v3579, %v3576
        %v4078 = vpack.c.b16 %v3580, %v3577
        %v4079 = vpack.c.b16 %v3584, %v3581
        %v4080 = vpack.c.b16 %v3585, %v3582
        %v4081 = vpack.c.b16 %v3586, %v3583
        %v4082 = vpack.c.b16 %v3590, %v3587
        %v4083 = vpack.c.b16 %v3591, %v3588
        %v4084 = vpack.c.b16 %v3592, %v3589
        %v4085 = vpack.c.b16 %v3596, %v3593
        %v4086 = vpack.c.b16 %v3597, %v3594
        %v4087 = vpack.c.b16 %v3598, %v3595
        %v4088 = vpack.c.b16 %v3602, %v3599
        %v4089 = vpack.c.b16 %v3603, %v3600
        %v4090 = vpack.c.b16 %v3604, %v3601
        %v4091 = vpack.c.b16 %v3608, %v3605
        %v4092 = vpack.c.b16 %v3609, %v3606
        %v4093 = vpack.c.b16 %v3610, %v3607
        %v4094 = vpack.c.b16 %v3614, %v3611
        %v4095 = vpack.c.b16 %v3615, %v3612
        %v4096 = vpack.c.b16 %v3616, %v3613
        %v4097 = vpack.c.b16 %v3620, %v3617
        %v4098 = vpack.c.b16 %v3621, %v3618
        %v4099 = vpack.c.b16 %v3622, %v3619
        %v4100 = vpack.c.b16 %v3626, %v3623
        %v4101 = vpack.c.b16 %v3627, %v3624
        %v4102 = vpack.c.b16 %v3628, %v3625
        %v4103 = vpack.c.b16 %v3632, %v3629
        %v4104 = vpack.c.b16 %v3633, %v3630
        %v4105 = vpack.c.b16 %v3634, %v3631
        %v4106 = vpack.c.b16 %v3638, %v3635
        %v4107 = vpack.c.b16 %v3639, %v3636
        %v4108 = vpack.c.b16 %v3640, %v3637
        %v4109 = vpack.c.b16 %v3644, %v3641
        %v4110 = vpack.c.b16 %v3645, %v3642
        %v4111 = vpack.c.b16 %v3646, %v3643
        %v4112 = vpack.c.b16 %v3650, %v3647
        %v4113 = vpack.c.b16 %v3651, %v3648
        %v4114 = vpack.c.b16 %v3652, %v3649
        %v4115 = vpack.c.b16 %v3656, %v3653
        %v4116 = vpack.c.b16 %v3657, %v3654
        %v4117 = vpack.c.b16 %v3658, %v3655
        %v4118 = vpack.c.b16 %v3662, %v3659
        %v4119 = vpack.c.b16 %v3663, %v3660
        %v4120 = vpack.c.b16 %v3664, %v3661
        %v4121 = vpack.c.b16 %v3668, %v3665
        %v4122 = vpack.c.b16 %v3669, %v3666
        %v4123 = vpack.c.b16 %v3670, %v3667
        %v4124 = vpack.c.b16 %v3674, %v3671
        %v4125 = vpack.c.b16 %v3675, %v3672
        %v4126 = vpack.c.b16 %v3676, %v3673
        %v4127 = vpack.c.b16 %v3680, %v3677
        %v4128 = vpack.c.b16 %v3681, %v3678
        %v4129 = vpack.c.b16 %v3682, %v3679
        %v4130 = vpack.c.b16 %v3686, %v3683
        %v4131 = vpack.c.b16 %v3687, %v3684
        %v4132 = vpack.c.b16 %v3688, %v3685
        %v4133 = vpack.c.b16 %v3692, %v3689
        %v4134 = vpack.c.b16 %v3693, %v3690
        %v4135 = vpack.c.b16 %v3694, %v3691
        %v4136 = vpack.c.b16 %v3698, %v3695
        %v4137 = vpack.c.b16 %v3699, %v3696
        %v4138 = vpack.c.b16 %v3700, %v3697
        %v4139 = vpack.c.b16 %v3704, %v3701
        %v4140 = vpack.c.b16 %v3705, %v3702
        %v4141 = vpack.c.b16 %v3706, %v3703
        %v4142 = vpack.c.b16 %v3710, %v3707
        %v4143 = vpack.c.b16 %v3711, %v3708
        %v4144 = vpack.c.b16 %v3712, %v3709
        %v4145 = vpack.c.b16 %v3716, %v3713
        %v4146 = vpack.c.b16 %v3717, %v3714
        %v4147 = vpack.c.b16 %v3718, %v3715
        %v4148 = vpack.c.b16 %v3722, %v3719
        %v4149 = vpack.c.b16 %v3723, %v3720
        %v4150 = vpack.c.b16 %v3724, %v3721
        %v4151 = vpack.c.b16 %v3728, %v3725
        %v4152 = vpack.c.b16 %v3729, %v3726
        %v4153 = vpack.c.b16 %v3730, %v3727
        %v4154 = vpack.c.b16 %v3734, %v3731
        %v4155 = vpack.c.b16 %v3735, %v3732
        %v4156 = vpack.c.b16 %v3736, %v3733
        %v4157 = vpack.c.b16 %v3740, %v3737
        %v4158 = vpack.c.b16 %v3741, %v3738
        %v4159 = vpack.c.b16 %v3742, %v3739
        %v4160 = vpack.c.b16 %v3746, %v3743
        %v4161 = vpack.c.b16 %v3747, %v3744
        %v4162 = vpack.c.b16 %v3748, %v3745
        %v4163 = vpack.c.b16 %v3752, %v3749
        %v4164 = vpack.c.b16 %v3753, %v3750
        %v4165 = vpack.c.b16 %v3754, %v3751
        %v4166 = vpack.c.b16 %v3758, %v3755
        %v4167 = vpack.c.b16 %v3759, %v3756
        %v4168 = vpack.c.b16 %v3760, %v3757
        %v4169 = vpack.c.b16 %v3764, %v3761
        %v4170 = vpack.c.b16 %v3765, %v3762
        %v4171 = vpack.c.b16 %v3766, %v3763
        %v4172 = vpack.c.b16 %v3770, %v3767
        %v4173 = vpack.c.b16 %v3771, %v3768
        %v4174 = vpack.c.b16 %v3772, %v3769
        %v4175 = vpack.c.b16 %v3776, %v3773
        %v4176 = vpack.c.b16 %v3777, %v3774
        %v4177 = vpack.c.b16 %v3778, %v3775
        %v4178 = vpack.c.b16 %v3782, %v3779
        %v4179 = vpack.c.b16 %v3783, %v3780
        %v4180 = vpack.c.b16 %v3784, %v3781
        %v4181 = vpack.c.b16 %v3788, %v3785
        %v4182 = vpack.c.b16 %v3789, %v3786
        %v4183 = vpack.c.b16 %v3790, %v3787
        %v4184 = vpack.c.b16 %v3794, %v3791
        %v4185 = vpack.c.b16 %v3795, %v3792
        %v4186 = vpack.c.b16 %v3796, %v3793
        %v4187 = vpack.c.b16 %v3800, %v3797
        %v4188 = vpack.c.b16 %v3801, %v3798
        %v4189 = vpack.c.b16 %v3802, %v3799
        %v4190 = vpack.c.b16 %v3806, %v3803
        %v4191 = vpack.c.b16 %v3807, %v3804
        %v4192 = vpack.c.b16 %v3808, %v3805
        %v4193 = vpack.c.b16 %v3812, %v3809
        %v4194 = vpack.c.b16 %v3813, %v3810
        %v4195 = vpack.c.b16 %v3814, %v3811
        %v4196 = vpack.c.b16 %v3818, %v3815
        %v4197 = vpack.c.b16 %v3819, %v3816
        %v4198 = vpack.c.b16 %v3820, %v3817
        %v4199 = vpack.c.b16 %v3824, %v3821
        %v4200 = vpack.c.b16 %v3825, %v3822
        %v4201 = vpack.c.b16 %v3826, %v3823
        %v4202 = vpack.c.b16 %v3830, %v3827
        %v4203 = vpack.c.b16 %v3831, %v3828
        %v4204 = vpack.c.b16 %v3832, %v3829
        %v4205 = vpack.c.b16 %v3836, %v3833
        %v4206 = vpack.c.b16 %v3837, %v3834
        %v4207 = vpack.c.b16 %v3838, %v3835
        %v4208 = vpack.c.b16 %v3842, %v3839
        %v4209 = vpack.c.b16 %v3843, %v3840
        %v4210 = vpack.c.b16 %v3844, %v3841
        %v4211 = vpack.c.b16 %v3848, %v3845
        %v4212 = vpack.c.b16 %v3849, %v3846
        %v4213 = vpack.c.b16 %v3850, %v3847
        %v4214 = vpack.c.b16 %v3854, %v3851
        %v4215 = vpack.c.b16 %v3855, %v3852
        %v4216 = vpack.c.b16 %v3856, %v3853
        %v4217 = vpack.c.b16 %v3860, %v3857
        %v4218 = vpack.c.b16 %v3861, %v3858
        %v4219 = vpack.c.b16 %v3862, %v3859
        %v4220 = vpack.c.b16 %v3866, %v3863
        %v4221 = vpack.c.b16 %v3867, %v3864
        %v4222 = vpack.c.b16 %v3868, %v3865
        %v4223 = vpack.c.b16 %v3872, %v3869
        %v4224 = vpack.c.b16 %v3873, %v3870
        %v4225 = vpack.c.b16 %v3874, %v3871
        %v4226 = vpack.c.b16 %v3878, %v3875
        %v4227 = vpack.c.b16 %v3879, %v3876
        %v4228 = vpack.c.b16 %v3880, %v3877
        %v4229 = vpack.c.b16 %v3884, %v3881
        %v4230 = vpack.c.b16 %v3885, %v3882
        %v4231 = vpack.c.b16 %v3886, %v3883
        %v4232 = vpack.c.b16 %v3890, %v3887
        %v4233 = vpack.c.b16 %v3891, %v3888
        %v4234 = vpack.c.b16 %v3892, %v3889
        %v4235 = vpack.c.b16 %v3896, %v3893
        %v4236 = vpack.c.b16 %v3897, %v3894
        %v4237 = vpack.c.b16 %v3898, %v3895
        %v4238 = vpack.c.b16 %v3902, %v3899
        %v4239 = vpack.c.b16 %v3903, %v3900
        %v4240 = vpack.c.b16 %v3904, %v3901
        %v4241 = vpack.c.b16 %v3908, %v3905
        %v4242 = vpack.c.b16 %v3909, %v3906
        %v4243 = vpack.c.b16 %v3910, %v3907
        %v4244 = vpack.c.b16 %v3914, %v3911
        %v4245 = vpack.c.b16 %v3915, %v3912
        %v4246 = vpack.c.b16 %v3916, %v3913
        %v4247 = vpack.c.b16 %v3920, %v3917
        %v4248 = vpack.c.b16 %v3921, %v3918
        %v4249 = vpack.c.b16 %v3922, %v3919
        %v4250 = vpack.c.b16 %v3926, %v3923
        %v4251 = vpack.c.b16 %v3927, %v3924
        %v4252 = vpack.c.b16 %v3928, %v3925
        %v4253 = vpack.c.b16 %v3932, %v3929
        %v4254 = vpack.c.b16 %v3933, %v3930
        %v4255 = vpack.c.b16 %v3934, %v3931
        %v4256 = vpack.c.b16 %v3938, %v3935
        %v4257 = vpack.c.b16 %v3939, %v3936
        %v4258 = vpack.c.b16 %v3940, %v3937
        %v4259 = vpack.c.b16 %v3944, %v3941
        %v4260 = vpack.c.b16 %v3945, %v3942
        %v4261 = vpack.c.b16 %v3946, %v3943
        %v4262 = vpack.c.b16 %v3950, %v3947
        %v4263 = vpack.c.b16 %v3951, %v3948
        %v4264 = vpack.c.b16 %v3952, %v3949
        %v4265 = vpack.c.b16 %v3956, %v3953
        %v4266 = vpack.c.b16 %v3957, %v3954
        %v4267 = vpack.c.b16 %v3958, %v3955
        %v4268 = vpack.c.b16 %v3962, %v3959
        %v4269 = vpack.c.b16 %v3963, %v3960
        %v4270 = vpack.c.b16 %v3964, %v3961
        %v4271 = vpack.c.b16 %v3968, %v3965
        %v4272 = vpack.c.b16 %v3969, %v3966
        %v4273 = vpack.c.b16 %v3970, %v3967
        %v4274 = vpack.c.b16 %v3974, %v3971
        %v4275 = vpack.c.b16 %v3975, %v3972
        %v4276 = vpack.c.b16 %v3976, %v3973
        %v4277 = vpack.c.b16 %v3980, %v3977
        %v4278 = vpack.c.b16 %v3981, %v3978
        %v4279 = vpack.c.b16 %v3982, %v3979
        %v4280 = vpack.c.b16 %v3986, %v3983
        %v4281 = vpack.c.b16 %v3987, %v3984
        %v4282 = vpack.c.b16 %v3988, %v3985
        %v4283 = vpack.c.b16 %v3992, %v3989
        %v4284 = vpack.c.b16 %v3993, %v3990
        %v4285 = vpack.c.b16 %v3994, %v3991
        %v4286 = vpack.c.b16 %v3998, %v3995
        %v4287 = vpack.c.b16 %v3999, %v3996
        %v4288 = vpack.c.b16 %v4000, %v3997
        %4577 = vmatprep.subr.bf16.mxu0 %v4023
        %4578 = vmatpush1.bf16.msra.mxu0 %v4022
        %4579 = vmatprep.subr.bf16.mxu0 %v4020
        %4580 = vmatpush1.bf16.msra.mxu0 %v4019
        %4581 = vmatprep.subr.bf16.mxu0 %v4017
        %4582 = vmatpush1.bf16.msra.mxu0 %v4016
        %4583 = vmatprep.subr.bf16.mxu0 %v4014
        %4584 = vmatpush1.bf16.msra.mxu0 %v4013
        %4585 = vmatprep.subr.bf16.mxu0 %v4011
        %4586 = vmatpush1.bf16.msra.mxu0 %v4010
        %4587 = vmatprep.subr.bf16.mxu0 %v4008
        %4588 = vmatpush1.bf16.msra.mxu0 %v4007
        %4589 = vmatprep.subr.bf16.mxu0 %v4005
        %4590 = vmatpush1.bf16.msra.mxu0 %v4004
        %4591 = vmatprep.subr.bf16.mxu0 %v4002
        %4592 = vmatpush1.bf16.msra.mxu0 %v4001
        %4593 = vmatprep.subr.bf16.mxu0 %v4047
        %4594 = vmatpush2.bf16.msra.mxu0 %v4046
        %4595 = vmatprep.subr.bf16.mxu0 %v4044
        %4596 = vmatpush2.bf16.msra.mxu0 %v4043
        %4597 = vmatprep.subr.bf16.mxu0 %v4041
        %4598 = vmatpush2.bf16.msra.mxu0 %v4040
        %4599 = vmatprep.subr.bf16.mxu0 %v4038
        %4600 = vmatpush2.bf16.msra.mxu0 %v4037
        %4601 = vmatprep.subr.bf16.mxu0 %v4035
        %4602 = vmatpush2.bf16.msra.mxu0 %v4034
        %4603 = vmatprep.subr.bf16.mxu0 %v4032
        %4604 = vmatpush2.bf16.msra.mxu0 %v4031
        %4605 = vmatprep.subr.bf16.mxu0 %v4029
        %4606 = vmatpush2.bf16.msra.mxu0 %v4028
        %4607 = vmatprep.subr.bf16.mxu0 %v4026
        %4608 = vmatpush2.bf16.msra.mxu0 %v4025
        %4609 = vmatprep.mubr.bf16.mxu0 %v2629
        %4610 = vmatmul.mubr.bf16.gmra.mxu0 %v2628
        %v4611 = vpop.f32.mrf.mxu0
        %v4612 = vadd.f32 %v3029, %v4611
        %v4613 = vpop.f32.mrf.mxu0
        %v4614 = vadd.f32 %v3033, %v4613
        %v4615 = vpop.f32.mrf.mxu0
        %v4616 = vpop.f32.mrf.mxu0
        %4617 = vdwg.mxu0
        %4618 = vmatprep.subr.bf16.mxu0 %v4071
        %4619 = vmatpush1.bf16.msra.mxu0 %v4070
        %4620 = vmatprep.subr.bf16.mxu0 %v4068
        %4621 = vmatpush1.bf16.msra.mxu0 %v4067
        %4622 = vmatprep.subr.bf16.mxu0 %v4065
        %4623 = vmatpush1.bf16.msra.mxu0 %v4064
        %4624 = vmatprep.subr.bf16.mxu0 %v4062
        %4625 = vmatpush1.bf16.msra.mxu0 %v4061
        %4626 = vmatprep.subr.bf16.mxu0 %v4059
        %4627 = vmatpush1.bf16.msra.mxu0 %v4058
        %4628 = vmatprep.subr.bf16.mxu0 %v4056
        %4629 = vmatpush1.bf16.msra.mxu0 %v4055
        %4630 = vmatprep.subr.bf16.mxu0 %v4053
        %4631 = vmatpush1.bf16.msra.mxu0 %v4052
        %4632 = vmatprep.subr.bf16.mxu0 %v4050
        %4633 = vmatpush1.bf16.msra.mxu0 %v4049
        %4634 = vmatprep.subr.bf16.mxu0 %v4095
        %4635 = vmatpush2.bf16.msra.mxu0 %v4094
        %4636 = vmatprep.subr.bf16.mxu0 %v4092
        %4637 = vmatpush2.bf16.msra.mxu0 %v4091
        %4638 = vmatprep.subr.bf16.mxu0 %v4089
        %4639 = vmatpush2.bf16.msra.mxu0 %v4088
        %4640 = vmatprep.subr.bf16.mxu0 %v4086
        %4641 = vmatpush2.bf16.msra.mxu0 %v4085
        %4642 = vmatprep.subr.bf16.mxu0 %v4083
        %4643 = vmatpush2.bf16.msra.mxu0 %v4082
        %4644 = vmatprep.subr.bf16.mxu0 %v4080
        %4645 = vmatpush2.bf16.msra.mxu0 %v4079
        %4646 = vmatprep.subr.bf16.mxu0 %v4077
        %4647 = vmatpush2.bf16.msra.mxu0 %v4076
        %4648 = vmatprep.subr.bf16.mxu0 %v4074
        %4649 = vmatpush2.bf16.msra.mxu0 %v4073
        %4650 = vmatprep.mubr.bf16.mxu0 %v2631
        %4651 = vmatmul.mubr.bf16.gmra.mxu0 %v2630
        %v4652 = vpop.f32.mrf.mxu0
        %v4653 = vadd.f32 %v4612, %v4652
        %v4654 = vpop.f32.mrf.mxu0
        %v4655 = vadd.f32 %v4614, %v4654
        %v4656 = vpop.f32.mrf.mxu0
        %v4657 = vpop.f32.mrf.mxu0
        %4658 = vdwg.mxu0
        %4659 = vmatprep.subr.bf16.mxu0 %v4119
        %4660 = vmatpush1.bf16.msra.mxu0 %v4118
        %4661 = vmatprep.subr.bf16.mxu0 %v4116
        %4662 = vmatpush1.bf16.msra.mxu0 %v4115
        %4663 = vmatprep.subr.bf16.mxu0 %v4113
        %4664 = vmatpush1.bf16.msra.mxu0 %v4112
        %4665 = vmatprep.subr.bf16.mxu0 %v4110
        %4666 = vmatpush1.bf16.msra.mxu0 %v4109
        %4667 = vmatprep.subr.bf16.mxu0 %v4107
        %4668 = vmatpush1.bf16.msra.mxu0 %v4106
        %4669 = vmatprep.subr.bf16.mxu0 %v4104
        %4670 = vmatpush1.bf16.msra.mxu0 %v4103
        %4671 = vmatprep.subr.bf16.mxu0 %v4101
        %4672 = vmatpush1.bf16.msra.mxu0 %v4100
        %4673 = vmatprep.subr.bf16.mxu0 %v4098
        %4674 = vmatpush1.bf16.msra.mxu0 %v4097
        %4675 = vmatprep.subr.bf16.mxu0 %v4143
        %4676 = vmatpush2.bf16.msra.mxu0 %v4142
        %4677 = vmatprep.subr.bf16.mxu0 %v4140
        %4678 = vmatpush2.bf16.msra.mxu0 %v4139
        %4679 = vmatprep.subr.bf16.mxu0 %v4137
        %4680 = vmatpush2.bf16.msra.mxu0 %v4136
        %4681 = vmatprep.subr.bf16.mxu0 %v4134
        %4682 = vmatpush2.bf16.msra.mxu0 %v4133
        %4683 = vmatprep.subr.bf16.mxu0 %v4131
        %4684 = vmatpush2.bf16.msra.mxu0 %v4130
        %4685 = vmatprep.subr.bf16.mxu0 %v4128
        %4686 = vmatpush2.bf16.msra.mxu0 %v4127
        %4687 = vmatprep.subr.bf16.mxu0 %v4125
        %4688 = vmatpush2.bf16.msra.mxu0 %v4124
        %4689 = vmatprep.subr.bf16.mxu0 %v4122
        %4690 = vmatpush2.bf16.msra.mxu0 %v4121
        %4691 = vmatprep.mubr.bf16.mxu0 %v2633
        %4692 = vmatmul.mubr.bf16.gmra.mxu0 %v2632
        %v4693 = vpop.f32.mrf.mxu0
        %v4694 = vadd.f32 %v4653, %v4693
        %v4695 = vpop.f32.mrf.mxu0
        %v4696 = vadd.f32 %v4655, %v4695
        %v4697 = vpop.f32.mrf.mxu0
        %v4698 = vpop.f32.mrf.mxu0
        %4699 = vdwg.mxu0
        %4700 = vmatprep.subr.bf16.mxu0 %v4167
        %4701 = vmatpush1.bf16.msra.mxu0 %v4166
        %4702 = vmatprep.subr.bf16.mxu0 %v4164
        %4703 = vmatpush1.bf16.msra.mxu0 %v4163
        %4704 = vmatprep.subr.bf16.mxu0 %v4161
        %4705 = vmatpush1.bf16.msra.mxu0 %v4160
        %4706 = vmatprep.subr.bf16.mxu0 %v4158
        %4707 = vmatpush1.bf16.msra.mxu0 %v4157
        %4708 = vmatprep.subr.bf16.mxu0 %v4155
        %4709 = vmatpush1.bf16.msra.mxu0 %v4154
        %4710 = vmatprep.subr.bf16.mxu0 %v4152
        %4711 = vmatpush1.bf16.msra.mxu0 %v4151
        %4712 = vmatprep.subr.bf16.mxu0 %v4149
        %4713 = vmatpush1.bf16.msra.mxu0 %v4148
        %4714 = vmatprep.subr.bf16.mxu0 %v4146
        %4715 = vmatpush1.bf16.msra.mxu0 %v4145
        %4716 = vmatprep.subr.bf16.mxu0 %v4191
        %4717 = vmatpush2.bf16.msra.mxu0 %v4190
        %4718 = vmatprep.subr.bf16.mxu0 %v4188
        %4719 = vmatpush2.bf16.msra.mxu0 %v4187
        %4720 = vmatprep.subr.bf16.mxu0 %v4185
        %4721 = vmatpush2.bf16.msra.mxu0 %v4184
        %4722 = vmatprep.subr.bf16.mxu0 %v4182
        %4723 = vmatpush2.bf16.msra.mxu0 %v4181
        %4724 = vmatprep.subr.bf16.mxu0 %v4179
        %4725 = vmatpush2.bf16.msra.mxu0 %v4178
        %4726 = vmatprep.subr.bf16.mxu0 %v4176
        %4727 = vmatpush2.bf16.msra.mxu0 %v4175
        %4728 = vmatprep.subr.bf16.mxu0 %v4173
        %4729 = vmatpush2.bf16.msra.mxu0 %v4172
        %4730 = vmatprep.subr.bf16.mxu0 %v4170
        %4731 = vmatpush2.bf16.msra.mxu0 %v4169
        %4732 = vmatprep.mubr.bf16.mxu0 %v2635
        %4733 = vmatmul.mubr.bf16.gmra.mxu0 %v2634
        %v4734 = vpop.f32.mrf.mxu0
        %v4735 = vadd.f32 %v4694, %v4734
        %v4736 = vpop.f32.mrf.mxu0
        %v4737 = vadd.f32 %v4696, %v4736
        %v4738 = vpop.f32.mrf.mxu0
        %v4739 = vpop.f32.mrf.mxu0
        %4740 = vdwg.mxu0
        %4741 = vmatprep.subr.bf16.mxu0 %v4215
        %4742 = vmatpush1.bf16.msra.mxu0 %v4214
        %4743 = vmatprep.subr.bf16.mxu0 %v4212
        %4744 = vmatpush1.bf16.msra.mxu0 %v4211
        %4745 = vmatprep.subr.bf16.mxu0 %v4209
        %4746 = vmatpush1.bf16.msra.mxu0 %v4208
        %4747 = vmatprep.subr.bf16.mxu0 %v4206
        %4748 = vmatpush1.bf16.msra.mxu0 %v4205
        %4749 = vmatprep.subr.bf16.mxu0 %v4203
        %4750 = vmatpush1.bf16.msra.mxu0 %v4202
        %4751 = vmatprep.subr.bf16.mxu0 %v4200
        %4752 = vmatpush1.bf16.msra.mxu0 %v4199
        %4753 = vmatprep.subr.bf16.mxu0 %v4197
        %4754 = vmatpush1.bf16.msra.mxu0 %v4196
        %4755 = vmatprep.subr.bf16.mxu0 %v4194
        %4756 = vmatpush1.bf16.msra.mxu0 %v4193
        %4757 = vmatprep.subr.bf16.mxu0 %v4239
        %4758 = vmatpush2.bf16.msra.mxu0 %v4238
        %4759 = vmatprep.subr.bf16.mxu0 %v4236
        %4760 = vmatpush2.bf16.msra.mxu0 %v4235
        %4761 = vmatprep.subr.bf16.mxu0 %v4233
        %4762 = vmatpush2.bf16.msra.mxu0 %v4232
        %4763 = vmatprep.subr.bf16.mxu0 %v4230
        %4764 = vmatpush2.bf16.msra.mxu0 %v4229
        %4765 = vmatprep.subr.bf16.mxu0 %v4227
        %4766 = vmatpush2.bf16.msra.mxu0 %v4226
        %4767 = vmatprep.subr.bf16.mxu0 %v4224
        %4768 = vmatpush2.bf16.msra.mxu0 %v4223
        %4769 = vmatprep.subr.bf16.mxu0 %v4221
        %4770 = vmatpush2.bf16.msra.mxu0 %v4220
        %4771 = vmatprep.subr.bf16.mxu0 %v4218
        %4772 = vmatpush2.bf16.msra.mxu0 %v4217
        %4773 = vmatprep.mubr.bf16.mxu0 %v2637
        %4774 = vmatmul.mubr.bf16.gmra.mxu0 %v2636
        %v4775 = vpop.f32.mrf.mxu0
        %v4776 = vadd.f32 %v4735, %v4775
        %v4777 = vpop.f32.mrf.mxu0
        %v4778 = vadd.f32 %v4737, %v4777
        %v4779 = vpop.f32.mrf.mxu0
        %v4780 = vpop.f32.mrf.mxu0
        %4781 = vdwg.mxu0
        %4782 = vmatprep.subr.bf16.mxu0 %v4263
        %4783 = vmatpush1.bf16.msra.mxu0 %v4262
        %4784 = vmatprep.subr.bf16.mxu0 %v4260
        %4785 = vmatpush1.bf16.msra.mxu0 %v4259
        %4786 = vmatprep.subr.bf16.mxu0 %v4257
        %4787 = vmatpush1.bf16.msra.mxu0 %v4256
        %4788 = vmatprep.subr.bf16.mxu0 %v4254
        %4789 = vmatpush1.bf16.msra.mxu0 %v4253
        %4790 = vmatprep.subr.bf16.mxu0 %v4251
        %4791 = vmatpush1.bf16.msra.mxu0 %v4250
        %4792 = vmatprep.subr.bf16.mxu0 %v4248
        %4793 = vmatpush1.bf16.msra.mxu0 %v4247
        %4794 = vmatprep.subr.bf16.mxu0 %v4245
        %4795 = vmatpush1.bf16.msra.mxu0 %v4244
        %4796 = vmatprep.subr.bf16.mxu0 %v4242
        %4797 = vmatpush1.bf16.msra.mxu0 %v4241
        %4798 = vmatprep.subr.bf16.mxu0 %v4287
        %4799 = vmatpush2.bf16.msra.mxu0 %v4286
        %4800 = vmatprep.subr.bf16.mxu0 %v4284
        %4801 = vmatpush2.bf16.msra.mxu0 %v4283
        %4802 = vmatprep.subr.bf16.mxu0 %v4281
        %4803 = vmatpush2.bf16.msra.mxu0 %v4280
        %4804 = vmatprep.subr.bf16.mxu0 %v4278
        %4805 = vmatpush2.bf16.msra.mxu0 %v4277
        %4806 = vmatprep.subr.bf16.mxu0 %v4275
        %4807 = vmatpush2.bf16.msra.mxu0 %v4274
        %4808 = vmatprep.subr.bf16.mxu0 %v4272
        %4809 = vmatpush2.bf16.msra.mxu0 %v4271
        %4810 = vmatprep.subr.bf16.mxu0 %v4269
        %4811 = vmatpush2.bf16.msra.mxu0 %v4268
        %4812 = vmatprep.subr.bf16.mxu0 %v4266
        %4813 = vmatpush2.bf16.msra.mxu0 %v4265
        %4814 = vmatprep.mubr.bf16.mxu0 %v2639
        %4815 = vmatmul.mubr.bf16.gmra.mxu0 %v2638
        %v4816 = vpop.f32.mrf.mxu0
        %v4817 = vadd.f32 %v4776, %v4816
        %v4818 = vpop.f32.mrf.mxu0
        %v4819 = vadd.f32 %v4778, %v4818
        %v4820 = vpop.f32.mrf.mxu0
        %v4821 = vpop.f32.mrf.mxu0
        %4822 = vdwg.mxu0
        %4823 = vmatprep.subr.bf16.mxu0 0
        %4824 = vmatpush1.bf16.msra.mxu0 %v4024
        %4825 = vmatprep.subr.bf16.mxu0 0
        %4826 = vmatpush1.bf16.msra.mxu0 %v4021
        %4827 = vmatprep.subr.bf16.mxu0 0
        %4828 = vmatpush1.bf16.msra.mxu0 %v4018
        %4829 = vmatprep.subr.bf16.mxu0 0
        %4830 = vmatpush1.bf16.msra.mxu0 %v4015
        %4831 = vmatprep.subr.bf16.mxu0 0
        %4832 = vmatpush1.bf16.msra.mxu0 %v4012
        %4833 = vmatprep.subr.bf16.mxu0 0
        %4834 = vmatpush1.bf16.msra.mxu0 %v4009
        %4835 = vmatprep.subr.bf16.mxu0 0
        %4836 = vmatpush1.bf16.msra.mxu0 %v4006
        %4837 = vmatprep.subr.bf16.mxu0 0
        %4838 = vmatpush1.bf16.msra.mxu0 %v4003
        %4839 = vmatprep.subr.bf16.mxu0 0
        %4840 = vmatpush2.bf16.msra.mxu0 %v4048
        %4841 = vmatprep.subr.bf16.mxu0 0
        %4842 = vmatpush2.bf16.msra.mxu0 %v4045
        %4843 = vmatprep.subr.bf16.mxu0 0
        %4844 = vmatpush2.bf16.msra.mxu0 %v4042
        %4845 = vmatprep.subr.bf16.mxu0 0
        %4846 = vmatpush2.bf16.msra.mxu0 %v4039
        %4847 = vmatprep.subr.bf16.mxu0 0
        %4848 = vmatpush2.bf16.msra.mxu0 %v4036
        %4849 = vmatprep.subr.bf16.mxu0 0
        %4850 = vmatpush2.bf16.msra.mxu0 %v4033
        %4851 = vmatprep.subr.bf16.mxu0 0
        %4852 = vmatpush2.bf16.msra.mxu0 %v4030
        %4853 = vmatprep.subr.bf16.mxu0 0
        %4854 = vmatpush2.bf16.msra.mxu0 %v4027
        %4855 = vmatprep.mubr.bf16.mxu0 %v2629
        %4856 = vmatmul.mubr.bf16.gmra.mxu0 %v2628
        %v4857 = vpop.f32.mrf.mxu0
        %v4858 = vadd.f32 %v3037, %v4857
        %v4859 = vpop.f32.mrf.mxu0
        %v4860 = vpop.f32.mrf.mxu0
        %v4861 = vpop.f32.mrf.mxu0
        %4862 = vdwg.mxu0
        %4863 = vmatprep.subr.bf16.mxu0 0
        %4864 = vmatpush1.bf16.msra.mxu0 %v4072
        %4865 = vmatprep.subr.bf16.mxu0 0
        %4866 = vmatpush1.bf16.msra.mxu0 %v4069
        %4867 = vmatprep.subr.bf16.mxu0 0
        %4868 = vmatpush1.bf16.msra.mxu0 %v4066
        %4869 = vmatprep.subr.bf16.mxu0 0
        %4870 = vmatpush1.bf16.msra.mxu0 %v4063
        %4871 = vmatprep.subr.bf16.mxu0 0
        %4872 = vmatpush1.bf16.msra.mxu0 %v4060
        %4873 = vmatprep.subr.bf16.mxu0 0
        %4874 = vmatpush1.bf16.msra.mxu0 %v4057
        %4875 = vmatprep.subr.bf16.mxu0 0
        %4876 = vmatpush1.bf16.msra.mxu0 %v4054
        %4877 = vmatprep.subr.bf16.mxu0 0
        %4878 = vmatpush1.bf16.msra.mxu0 %v4051
        %4879 = vmatprep.subr.bf16.mxu0 0
        %4880 = vmatpush2.bf16.msra.mxu0 %v4096
        %4881 = vmatprep.subr.bf16.mxu0 0
        %4882 = vmatpush2.bf16.msra.mxu0 %v4093
        %4883 = vmatprep.subr.bf16.mxu0 0
        %4884 = vmatpush2.bf16.msra.mxu0 %v4090
        %4885 = vmatprep.subr.bf16.mxu0 0
        %4886 = vmatpush2.bf16.msra.mxu0 %v4087
        %4887 = vmatprep.subr.bf16.mxu0 0
        %4888 = vmatpush2.bf16.msra.mxu0 %v4084
        %4889 = vmatprep.subr.bf16.mxu0 0
        %4890 = vmatpush2.bf16.msra.mxu0 %v4081
        %4891 = vmatprep.subr.bf16.mxu0 0
        %4892 = vmatpush2.bf16.msra.mxu0 %v4078
        %4893 = vmatprep.subr.bf16.mxu0 0
        %4894 = vmatpush2.bf16.msra.mxu0 %v4075
        %4895 = vmatprep.mubr.bf16.mxu0 %v2631
        %4896 = vmatmul.mubr.bf16.gmra.mxu0 %v2630
        %v4897 = vpop.f32.mrf.mxu0
        %v4898 = vadd.f32 %v4858, %v4897
        %v4899 = vpop.f32.mrf.mxu0
        %v4900 = vpop.f32.mrf.mxu0
        %v4901 = vpop.f32.mrf.mxu0
        %4902 = vdwg.mxu0
        %4903 = vmatprep.subr.bf16.mxu0 0
        %4904 = vmatpush1.bf16.msra.mxu0 %v4120
        %4905 = vmatprep.subr.bf16.mxu0 0
        %4906 = vmatpush1.bf16.msra.mxu0 %v4117
        %4907 = vmatprep.subr.bf16.mxu0 0
        %4908 = vmatpush1.bf16.msra.mxu0 %v4114
        %4909 = vmatprep.subr.bf16.mxu0 0
        %4910 = vmatpush1.bf16.msra.mxu0 %v4111
        %4911 = vmatprep.subr.bf16.mxu0 0
        %4912 = vmatpush1.bf16.msra.mxu0 %v4108
        %4913 = vmatprep.subr.bf16.mxu0 0
        %4914 = vmatpush1.bf16.msra.mxu0 %v4105
        %4915 = vmatprep.subr.bf16.mxu0 0
        %4916 = vmatpush1.bf16.msra.mxu0 %v4102
        %4917 = vmatprep.subr.bf16.mxu0 0
        %4918 = vmatpush1.bf16.msra.mxu0 %v4099
        %4919 = vmatprep.subr.bf16.mxu0 0
        %4920 = vmatpush2.bf16.msra.mxu0 %v4144
        %4921 = vmatprep.subr.bf16.mxu0 0
        %4922 = vmatpush2.bf16.msra.mxu0 %v4141
        %4923 = vmatprep.subr.bf16.mxu0 0
        %4924 = vmatpush2.bf16.msra.mxu0 %v4138
        %4925 = vmatprep.subr.bf16.mxu0 0
        %4926 = vmatpush2.bf16.msra.mxu0 %v4135
        %4927 = vmatprep.subr.bf16.mxu0 0
        %4928 = vmatpush2.bf16.msra.mxu0 %v4132
        %4929 = vmatprep.subr.bf16.mxu0 0
        %4930 = vmatpush2.bf16.msra.mxu0 %v4129
        %4931 = vmatprep.subr.bf16.mxu0 0
        %4932 = vmatpush2.bf16.msra.mxu0 %v4126
        %4933 = vmatprep.subr.bf16.mxu0 0
        %4934 = vmatpush2.bf16.msra.mxu0 %v4123
        %4935 = vmatprep.mubr.bf16.mxu0 %v2633
        %4936 = vmatmul.mubr.bf16.gmra.mxu0 %v2632
        %v4937 = vpop.f32.mrf.mxu0
        %v4938 = vadd.f32 %v4898, %v4937
        %v4939 = vpop.f32.mrf.mxu0
        %v4940 = vpop.f32.mrf.mxu0
        %v4941 = vpop.f32.mrf.mxu0
        %4942 = vdwg.mxu0
        %4943 = vmatprep.subr.bf16.mxu0 0
        %4944 = vmatpush1.bf16.msra.mxu0 %v4168
        %4945 = vmatprep.subr.bf16.mxu0 0
        %4946 = vmatpush1.bf16.msra.mxu0 %v4165
        %4947 = vmatprep.subr.bf16.mxu0 0
        %4948 = vmatpush1.bf16.msra.mxu0 %v4162
        %4949 = vmatprep.subr.bf16.mxu0 0
        %4950 = vmatpush1.bf16.msra.mxu0 %v4159
        %4951 = vmatprep.subr.bf16.mxu0 0
        %4952 = vmatpush1.bf16.msra.mxu0 %v4156
        %4953 = vmatprep.subr.bf16.mxu0 0
        %4954 = vmatpush1.bf16.msra.mxu0 %v4153
        %4955 = vmatprep.subr.bf16.mxu0 0
        %4956 = vmatpush1.bf16.msra.mxu0 %v4150
        %4957 = vmatprep.subr.bf16.mxu0 0
        %4958 = vmatpush1.bf16.msra.mxu0 %v4147
        %4959 = vmatprep.subr.bf16.mxu0 0
        %4960 = vmatpush2.bf16.msra.mxu0 %v4192
        %4961 = vmatprep.subr.bf16.mxu0 0
        %4962 = vmatpush2.bf16.msra.mxu0 %v4189
        %4963 = vmatprep.subr.bf16.mxu0 0
        %4964 = vmatpush2.bf16.msra.mxu0 %v4186
        %4965 = vmatprep.subr.bf16.mxu0 0
        %4966 = vmatpush2.bf16.msra.mxu0 %v4183
        %4967 = vmatprep.subr.bf16.mxu0 0
        %4968 = vmatpush2.bf16.msra.mxu0 %v4180
        %4969 = vmatprep.subr.bf16.mxu0 0
        %4970 = vmatpush2.bf16.msra.mxu0 %v4177
        %4971 = vmatprep.subr.bf16.mxu0 0
        %4972 = vmatpush2.bf16.msra.mxu0 %v4174
        %4973 = vmatprep.subr.bf16.mxu0 0
        %4974 = vmatpush2.bf16.msra.mxu0 %v4171
        %4975 = vmatprep.mubr.bf16.mxu0 %v2635
        %4976 = vmatmul.mubr.bf16.gmra.mxu0 %v2634
        %v4977 = vpop.f32.mrf.mxu0
        %v4978 = vadd.f32 %v4938, %v4977
        %v4979 = vpop.f32.mrf.mxu0
        %v4980 = vpop.f32.mrf.mxu0
        %v4981 = vpop.f32.mrf.mxu0
        %4982 = vdwg.mxu0
        %4983 = vmatprep.subr.bf16.mxu0 0
        %4984 = vmatpush1.bf16.msra.mxu0 %v4216
        %4985 = vmatprep.subr.bf16.mxu0 0
        %4986 = vmatpush1.bf16.msra.mxu0 %v4213
        %4987 = vmatprep.subr.bf16.mxu0 0
        %4988 = vmatpush1.bf16.msra.mxu0 %v4210
        %4989 = vmatprep.subr.bf16.mxu0 0
        %4990 = vmatpush1.bf16.msra.mxu0 %v4207
        %4991 = vmatprep.subr.bf16.mxu0 0
        %4992 = vmatpush1.bf16.msra.mxu0 %v4204
        %4993 = vmatprep.subr.bf16.mxu0 0
        %4994 = vmatpush1.bf16.msra.mxu0 %v4201
        %4995 = vmatprep.subr.bf16.mxu0 0
        %4996 = vmatpush1.bf16.msra.mxu0 %v4198
        %4997 = vmatprep.subr.bf16.mxu0 0
        %4998 = vmatpush1.bf16.msra.mxu0 %v4195
        %4999 = vmatprep.subr.bf16.mxu0 0
        %5000 = vmatpush2.bf16.msra.mxu0 %v4240
        %5001 = vmatprep.subr.bf16.mxu0 0
        %5002 = vmatpush2.bf16.msra.mxu0 %v4237
        %5003 = vmatprep.subr.bf16.mxu0 0
        %5004 = vmatpush2.bf16.msra.mxu0 %v4234
        %5005 = vmatprep.subr.bf16.mxu0 0
        %5006 = vmatpush2.bf16.msra.mxu0 %v4231
        %5007 = vmatprep.subr.bf16.mxu0 0
        %5008 = vmatpush2.bf16.msra.mxu0 %v4228
        %5009 = vmatprep.subr.bf16.mxu0 0
        %5010 = vmatpush2.bf16.msra.mxu0 %v4225
        %5011 = vmatprep.subr.bf16.mxu0 0
        %5012 = vmatpush2.bf16.msra.mxu0 %v4222
        %5013 = vmatprep.subr.bf16.mxu0 0
        %5014 = vmatpush2.bf16.msra.mxu0 %v4219
        %5015 = vmatprep.mubr.bf16.mxu0 %v2637
        %5016 = vmatmul.mubr.bf16.gmra.mxu0 %v2636
        %v5017 = vpop.f32.mrf.mxu0
        %v5018 = vadd.f32 %v4978, %v5017
        %v5019 = vpop.f32.mrf.mxu0
        %v5020 = vpop.f32.mrf.mxu0
        %v5021 = vpop.f32.mrf.mxu0
        %5022 = vdwg.mxu0
        %5023 = vmatprep.subr.bf16.mxu0 0
        %5024 = vmatpush1.bf16.msra.mxu0 %v4264
        %5025 = vmatprep.subr.bf16.mxu0 0
        %5026 = vmatpush1.bf16.msra.mxu0 %v4261
        %5027 = vmatprep.subr.bf16.mxu0 0
        %5028 = vmatpush1.bf16.msra.mxu0 %v4258
        %5029 = vmatprep.subr.bf16.mxu0 0
        %5030 = vmatpush1.bf16.msra.mxu0 %v4255
        %5031 = vmatprep.subr.bf16.mxu0 0
        %5032 = vmatpush1.bf16.msra.mxu0 %v4252
        %5033 = vmatprep.subr.bf16.mxu0 0
        %5034 = vmatpush1.bf16.msra.mxu0 %v4249
        %5035 = vmatprep.subr.bf16.mxu0 0
        %5036 = vmatpush1.bf16.msra.mxu0 %v4246
        %5037 = vmatprep.subr.bf16.mxu0 0
        %5038 = vmatpush1.bf16.msra.mxu0 %v4243
        %5039 = vmatprep.subr.bf16.mxu0 0
        %5040 = vmatpush2.bf16.msra.mxu0 %v4288
        %5041 = vmatprep.subr.bf16.mxu0 0
        %5042 = vmatpush2.bf16.msra.mxu0 %v4285
        %5043 = vmatprep.subr.bf16.mxu0 0
        %5044 = vmatpush2.bf16.msra.mxu0 %v4282
        %5045 = vmatprep.subr.bf16.mxu0 0
        %5046 = vmatpush2.bf16.msra.mxu0 %v4279
        %5047 = vmatprep.subr.bf16.mxu0 0
        %5048 = vmatpush2.bf16.msra.mxu0 %v4276
        %5049 = vmatprep.subr.bf16.mxu0 0
        %5050 = vmatpush2.bf16.msra.mxu0 %v4273
        %5051 = vmatprep.subr.bf16.mxu0 0
        %5052 = vmatpush2.bf16.msra.mxu0 %v4270
        %5053 = vmatprep.subr.bf16.mxu0 0
        %5054 = vmatpush2.bf16.msra.mxu0 %v4267
        %5055 = vmatprep.mubr.bf16.mxu0 %v2639
        %5056 = vmatmul.mubr.bf16.gmra.mxu0 %v2638
        %v5057 = vpop.f32.mrf.mxu0
        %v5058 = vadd.f32 %v5018, %v5057
        %v5059 = vpop.f32.mrf.mxu0
        %v5060 = vpop.f32.mrf.mxu0
        %v5061 = vpop.f32.mrf.mxu0
        %5062 = vdwg.mxu0
        %5063 = vst [vmem:[%s309] sm:$0xff] %v4817
        %5064 = vst [vmem:[%s309 + $0x8] sm:$0xff] %v4819
        %5065 = vst [vmem:[%s309 + $0x10] sm:$0xff] %v5058
        %s5066 = sand.u32 %s167, 1
        %s5067 = scalar_lea.sflag [#allocation4], %s5066
        %s5068 = sand.u32 %s167, 1
        %s5069 = smul.addr %s5068, 24
        %s5070 = scalar_lea.vmem [#allocation10], %s5069
        // Predicated region
        $region57: #{feed_forward.1} parent=39 // pred_check
          %p5071 = pneg %p177
        $region58: #{feed_forward.1} parent=39 // pred_check_branch
          %5073 = sbr.rel (%p5071) target = $region60
        $region59: #{feed_forward.1} parent=39 // pred_region
          %s5075 = ssub.s32 384, 384
          %5076 = vsyncadd %s5067, %s5075
          %s5077 = smul.addr %s26, 3
          %s5078 = smul.addr %s5077, 128
          %s5079 = scalar_lea.hbm %s5, %s5078
          %s5081 = sshll.u32 %s5070, 4
          %s5082 = int_to_ptr.vmem [resolvable:$true] %s5081
          %5084 = dma.vmem_to_hbm [thread:$0]  %s5082, 384, %s5079, %s5067
        $region60: #{feed_forward.1} parent=39 // pred_fallthru
          _
      $region40: #{feed_forward.1} parent=5 // pred_fallthru
        _
      %p5085 = scmp.le.s32.totalorder 2, %s17
      // Predicated region
      $region61: #{feed_forward.1} parent=5 // pred_check
        %p5086 = pneg %p5085
      $region62: #{feed_forward.1} parent=5 // pred_check_branch
        %5088 = sbr.rel (%p5086) target = $region64
      $region63: #{feed_forward.1} parent=5 // pred_region
        %s5089 = ssub.s32 %s17, 2
        // Predicated region
        $region65: #{feed_forward.1} parent=63 // pred_check
          %p5090 = pneg %p183
        $region66: #{feed_forward.1} parent=63 // pred_check_branch
          %5092 = sbr.rel (%p5090) target = $region68
        $region67: #{feed_forward.1} parent=63 // pred_region
          %s5093 = sand.u32 %s168, 1
          %s5094 = scalar_lea.sflag [#allocation4], %s5093
          %s5095 = sand.u32 %s168, 1
          %s5096 = smul.addr %s5095, 24
          %s5097 = scalar_lea.vmem [#allocation10], %s5096
          %5098 = dma.done %s5094, 384
        $region68: #{feed_forward.1} parent=63 // pred_fallthru
          _
      $region64: #{feed_forward.1} parent=5 // pred_fallthru
        _
    $region6: #{feed_forward.1} parent=1 // loop_footer
      %s21 = sadd.s32 1, %s17
    $region7: #{feed_forward.1} parent=1 // loop_footer_branch
      %16 = sbr.rel target = $region3
    $region8: #{feed_forward.1} parent=1 // loop_exit
      _
    %5099 = vsyncpa [#allocation3], 1
    %s5100 = scalar_lea.sflag [#allocation3], 1
    %5101 = vsyncpa %s5100, 1
    %5102 = vsyncpa [#allocation6], 1
    %5103 = vsyncpa [#allocation9], 1
    %5104 = vsyncpa [#allocation4], 1
    %s5105 = scalar_lea.sflag [#allocation4], 1
    %5106 = vsyncpa %s5105, 1

</llo_original>
